<compile_context>
chip_gen: v7x
topology: tpu7x:2x2x1
jax: 0.10.0
libtpu: 0.0.40
codegen_flags: <defaults>
</compile_context>

<pallas_src>
import jax
import jax.numpy as jnp
from jax.experimental import pallas as pl
from jax.experimental.pallas import tpu as pltpu


def _round_up(x, m):
    return ((x + m - 1) // m) * m


# ---------------------------------------------------------------------------
# Fused HG_Block kernel (factory: channel counts / spatial size are static)
# ---------------------------------------------------------------------------

def _make_hg_block_kernel(layer_num, in_chs, mid_chs, out_chs, W, HW, HWp, cmax, pad):
    taps = [(dy, dx) for dy in (-1, 0, 1) for dx in (-1, 0, 1)]
    f32 = jnp.float32
    bf16 = jnp.bfloat16
    hw_padded = HWp != HW

    def kernel(*refs):
        x_ref, masks_ref, wconv_ref, bconv_ref = refs[0:4]
        wagg_refs = refs[4:5 + layer_num]                      # layer_num + 1 slabs
        bagg_ref, wese_ref, bese_ref = refs[5 + layer_num:8 + layer_num]
        o_ref = refs[8 + layer_num]
        ap_ref, col_ref, acc_ref = refs[9 + layer_num:]

        # Zero ONLY the lane-aligned halo of the padded activation buffer.
        # (The data region and the whole im2col buffer are fully refreshed with
        # finite data every image, so no bulk zeroing is needed.)
        halo = jnp.zeros((cmax, pad), bf16)
        ap_ref[pl.ds(0, cmax), pl.ds(0, pad)] = halo
        ap_ref[pl.ds(0, cmax), pl.ds(pad + HWp, pad)] = halo

        mask_l = masks_ref[pl.ds(0, 1), :]   # (1, HWp) bf16: zero where w == 0
        mask_r = masks_ref[pl.ds(1, 1), :]   # (1, HWp) bf16: zero where w == W-1
        valid = masks_ref[pl.ds(2, 1), :]    # (1, HWp) bf16: zero on HW padding

        cur = x_ref[0]                        # (cmax, HWp) bf16, channel-padded
        # Split 1x1 aggregation weight -> per-branch accumulation (no concat),
        # accumulated in a VMEM scratch ref.
        acc_ref[...] = jnp.dot(wagg_refs[0][...], cur, preferred_element_type=f32)

        cin = cmax                            # layer 0 rewrites all cmax rows
        for l in range(layer_num):
            # ---- 3x3 conv + folded BN + ReLU, as one im2col matmul --------
            ap_ref[pl.ds(0, cin), pl.ds(pad, HWp)] = cur       # lane-aligned store
            for t, (dy, dx) in enumerate(taps):
                start = pad + dy * W + dx                      # static offset
                tap = ap_ref[pl.ds(0, cin), pl.ds(start, HWp)]
                if dx == -1:
                    tap = tap * mask_l
                elif dx == 1:
                    tap = tap * mask_r
                col_ref[pl.ds(t * cmax, cin), :] = tap
            conv = jnp.dot(wconv_ref[l], col_ref[...],
                           preferred_element_type=f32)         # (mid_chs, HWp)
            cur = jnp.maximum(conv + bconv_ref[l], 0.0).astype(bf16)
            if hw_padded:
                cur = cur * valid         # keep HW-pad columns zero for next taps
            # partial aggregation: this branch's slab of the 1x1 agg conv
            acc_ref[...] += jnp.dot(wagg_refs[l + 1][...], cur,
                                    preferred_element_type=f32)
            cin = mid_chs

        agg = jnp.maximum(acc_ref[...] + bagg_ref[...], 0.0)   # (out_chs, HWp) f32

        # EseModule, reference order: spatial mean first, then tiny 1x1 matvec.
        if hw_padded:
            m = jnp.sum(agg * valid.astype(f32), axis=1, keepdims=True) * (1.0 / HW)
        else:
            m = jnp.mean(agg, axis=1, keepdims=True)           # (out_chs, 1)
        gate = jax.nn.sigmoid(
            jnp.dot(wese_ref[...], m, preferred_element_type=f32) + bese_ref[...])
        o_ref[...] = (agg * gate).reshape(1, out_chs, HWp).astype(o_ref.dtype)

    return kernel


# ---------------------------------------------------------------------------
# Wrapper: packs params, builds specs, calls the fused kernel once
# ---------------------------------------------------------------------------

def hg_block_forward(x_nchw, params):
    """HG_Block forward. x_nchw: (N, Cin, H, W) f32 -> (N, Cout, H, W) f32."""
    N, in_chs, H, W = x_nchw.shape
    layer_num = len(params["layers"])
    mid_chs = params["layers"][0][0].shape[3]
    out_chs = params["agg_w"].shape[0]
    total_chs = in_chs + layer_num * mid_chs
    HW = H * W
    HWp = _round_up(HW, 128)                      # lane-dense stores / matmul N dim
    cmax = _round_up(max(in_chs, mid_chs), 16)    # bf16 sublane-tile alignment
    pad = _round_up(W + 1, 128)                   # lane-aligned halo width

    bf16 = jnp.bfloat16

    # ---- pack parameters for the kernel (tiny host-side arrays) -----------
    wconv, bconv = [], []
    for (w, b) in params["layers"]:               # w: (3, 3, cl, mid) folded, f32
        cl = w.shape[2]
        wt = jnp.transpose(w, (3, 0, 1, 2))                        # (mid, 3, 3, cl)
        wt = jnp.pad(wt, ((0, 0), (0, 0), (0, 0), (0, cmax - cl)))
        wconv.append(wt.reshape(mid_chs, 9 * cmax))
        bconv.append(b.reshape(mid_chs, 1))
    wconv = jnp.stack(wconv, axis=0).astype(bf16)                  # (L, mid, 9*cmax)
    bconv = jnp.stack(bconv, axis=0)                               # (L, mid, 1) f32

    sizes = [in_chs] + [mid_chs] * layer_num
    wagg, off = [], 0
    for i, c in enumerate(sizes):                 # split agg weight -> no concat
        slab = params["agg_w"][:, off:off + c]
        if i == 0:                                # pad branch-0 slab to cmax cols
            slab = jnp.pad(slab, ((0, 0), (0, cmax - c)))
        wagg.append(slab.astype(bf16))
        off += c
    bagg = params["agg_b"].reshape(out_chs, 1)
    wese = params["ese_w"]
    bese = params["ese_b"].reshape(out_chs, 1)

    # column masks: horizontal wrap of the flat layout + HW-padding validity
    cols = jnp.arange(HWp, dtype=jnp.int32)
    inrow = cols % W
    masks = jnp.stack([inrow != 0, inrow != (W - 1), cols < HW],
                      axis=0).astype(bf16)                         # (3, HWp)

    # activations as bf16, channel-padded to cmax, spatially padded to HWp
    xf = x_nchw.reshape(N, in_chs, HW).astype(bf16)
    xf = jnp.pad(xf, ((0, 0), (0, cmax - in_chs), (0, HWp - HW)))

    inputs = [xf, masks, wconv, bconv, *wagg, bagg, wese, bese]

    kernel = _make_hg_block_kernel(layer_num, in_chs, mid_chs, out_chs,
                                   W, HW, HWp, cmax, pad)

    scratch_shapes = [
        pltpu.VMEM((cmax, HWp + 2 * pad), bf16),        # padded flat activation
        pltpu.VMEM((9 * cmax, HWp), bf16),              # im2col buffer
        pltpu.VMEM((out_chs, HWp), jnp.float32),        # aggregation accumulator
    ]

    # explicit scoped-VMEM limit sized from the actual buffers (+headroom)
    scratch_bytes = (cmax * (HWp + 2 * pad) * 2 + 9 * cmax * HWp * 2
                     + out_chs * HWp * 4)
    const_bytes = sum(int(a.size) * a.dtype.itemsize for a in inputs[1:])
    io_bytes = 2 * (cmax * HWp * 2) + 2 * (out_chs * HWp * 4)
    vmem_limit = int(min(max(int(1.5 * (scratch_bytes + 2 * const_bytes + io_bytes))
                             + (2 << 20), 32 << 20), 64 << 20))

    flops = N * (2 * layer_num * mid_chs * 9 * cmax * HWp
                 + 2 * out_chs * (cmax + layer_num * mid_chs) * HWp
                 + 2 * out_chs * out_chs)
    bytes_accessed = (sum(int(a.size) * a.dtype.itemsize for a in inputs)
                      + N * out_chs * HWp * 4)

    def build(single_buffer_consts):
        def cspec(shape, imap):
            if single_buffer_consts:
                return pl.BlockSpec(shape, imap, pipeline_mode=pl.Buffered(1))
            return pl.BlockSpec(shape, imap)

        in_specs = (
            [pl.BlockSpec((1, cmax, HWp), lambda n: (n, 0, 0)),
             cspec(masks.shape, lambda n: (0, 0)),
             cspec(wconv.shape, lambda n: (0, 0, 0)),
             cspec(bconv.shape, lambda n: (0, 0, 0))]
            + [cspec(w.shape, lambda n: (0, 0)) for w in wagg]
            + [cspec(bagg.shape, lambda n: (0, 0)),
               cspec(wese.shape, lambda n: (0, 0)),
               cspec(bese.shape, lambda n: (0, 0))])

        return pl.pallas_call(
            kernel,
            out_shape=jax.ShapeDtypeStruct((N, out_chs, HWp), jnp.float32),
            grid=(N,),
            in_specs=in_specs,
            out_specs=pl.BlockSpec((1, out_chs, HWp), lambda n: (n, 0, 0)),
            scratch_shapes=scratch_shapes,
            compiler_params=pltpu.CompilerParams(
                dimension_semantics=("parallel",),
                vmem_limit_bytes=vmem_limit),
            cost_estimate=pl.CostEstimate(
                flops=int(flops),
                transcendentals=int(N * out_chs),
                bytes_accessed=int(bytes_accessed)),
        )

    try:
        out = build(True)(*inputs)
    except Exception:
        # pipeline_mode=pl.Buffered(1) not supported on this version -> default
        # double-buffering for the constant operands (only costs VMEM headroom).
        out = build(False)(*inputs)

    out = out[:, :, :HW]
    return out.reshape(N, out_chs, H, W)


# ---------------------------------------------------------------------------
# Parameter init (deterministic, BN folded in eval mode)
# ---------------------------------------------------------------------------

def _conv_bn_folded(key, cin, cout, k, eps=1e-5):
    k1, k2, k3, k4, k5 = jax.random.split(key, 5)
    w = jax.random.normal(k1, (k, k, cin, cout), jnp.float32) * 0.1
    gamma = jax.random.uniform(k2, (cout,), jnp.float32, 0.5, 1.5)
    beta = jax.random.normal(k3, (cout,), jnp.float32) * 0.1
    mean = jax.random.normal(k4, (cout,), jnp.float32) * 0.1
    var = jax.random.uniform(k5, (cout,), jnp.float32, 0.5, 1.5)
    scale = gamma / jnp.sqrt(var + eps)
    return w * scale, beta - mean * scale


def init_hg_block_params(key, in_chs, mid_chs, out_chs, layer_num):
    keys = jax.random.split(key, layer_num + 2)
    layers = []
    cin = in_chs
    for i in range(layer_num):
        layers.append(_conv_bn_folded(keys[i], cin, mid_chs, 3))
        cin = mid_chs
    total = in_chs + layer_num * mid_chs
    w1, b1 = _conv_bn_folded(keys[layer_num], total, out_chs, 1)
    agg_w = w1.reshape(total, out_chs).T                  # (out, total) 1x1 conv weight
    k1, k2 = jax.random.split(keys[layer_num + 1])
    ese_w = jax.random.normal(k1, (out_chs, out_chs), jnp.float32) * 0.1
    ese_b = jax.random.normal(k2, (out_chs,), jnp.float32) * 0.1
    return {"layers": layers, "agg_w": agg_w, "agg_b": b1,
            "ese_w": ese_w, "ese_b": ese_b}


# ---------------------------------------------------------------------------
# Pure-JAX reference (same folded params, same bf16 matmul-operand casts)
# ---------------------------------------------------------------------------

def hg_block_reference(x_nchw, params):
    bf16 = jnp.bfloat16
    acts = [x_nchw]
    cur = x_nchw
    for (w, b) in params["layers"]:
        y = jax.lax.conv_general_dilated(
            cur.astype(bf16), w.astype(bf16), (1, 1), "SAME",
            dimension_numbers=("NCHW", "HWIO", "NCHW"),
            preferred_element_type=jnp.float32)
        cur = jax.nn.relu(y + b.reshape(1, -1, 1, 1))
        acts.append(cur)
    acc, off = None, 0
    for a in acts:
        c = a.shape[1]
        slab = params["agg_w"][:, off:off + c]
        term = jnp.einsum("oc,nchw->nohw", slab.astype(bf16), a.astype(bf16),
                          preferred_element_type=jnp.float32)
        acc = term if acc is None else acc + term
        off += c
    agg = jax.nn.relu(acc + params["agg_b"].reshape(1, -1, 1, 1))
    m = jnp.mean(agg, axis=(2, 3), keepdims=True)
    gate = jax.nn.sigmoid(jnp.einsum("oc,ncij->noij", params["ese_w"], m)
                          + params["ese_b"].reshape(1, -1, 1, 1))
    return agg * gate


if __name__ == "__main__":
    key = jax.random.PRNGKey(0)
    kx, kp = jax.random.split(key)

    N, H, W = 2, 16, 16
    in_chs, mid_chs, out_chs, layer_num = 4, 8, 16, 3

    x = jax.random.normal(kx, (N, in_chs, H, W), jnp.float32)   # NCHW, like torch
    params = init_hg_block_params(kp, in_chs, mid_chs, out_chs, layer_num)

    y = hg_block_forward(x, params)
    jax.block_until_ready(y)

    y_ref = hg_block_reference(x, params)
    jax.block_until_ready(y_ref)

    assert y.shape == (N, out_chs, H, W), y.shape
    err = float(jnp.max(jnp.abs(y - y_ref)))
    assert err < 5e-3, err

    print("KERNEL_OK")
</pallas_src>

<mosaic_0001>
module attributes {stable_mosaic.version = 11 : i64} {
  func.func @kernel(%arg0: i32, %arg1: memref<1x16x256xbf16, #tpu.memory_space<vmem>>, %arg2: memref<3x256xbf16, #tpu.memory_space<vmem>>, %arg3: memref<3x8x144xbf16, #tpu.memory_space<vmem>>, %arg4: memref<3x8x1xf32, #tpu.memory_space<vmem>>, %arg5: memref<16x16xbf16, #tpu.memory_space<vmem>>, %arg6: memref<16x8xbf16, #tpu.memory_space<vmem>>, %arg7: memref<16x8xbf16, #tpu.memory_space<vmem>>, %arg8: memref<16x8xbf16, #tpu.memory_space<vmem>>, %arg9: memref<16x1xf32, #tpu.memory_space<vmem>>, %arg10: memref<16x16xf32, #tpu.memory_space<vmem>>, %arg11: memref<16x1xf32, #tpu.memory_space<vmem>>, %arg12: memref<1x16x256xf32, #tpu.memory_space<vmem>>, %arg13: memref<16x512xbf16, #tpu.memory_space<vmem>>, %arg14: memref<144x256xbf16, #tpu.memory_space<vmem>>, %arg15: memref<16x256xf32, #tpu.memory_space<vmem>>) attributes {dimension_semantics = [#tpu.dimension_semantics<parallel>], iteration_bounds = array<i64: 2>, scalar_prefetch = 0 : i64, scratch_operands = 3 : i64, tpu.core_type = #tpu.core_type<tc>, window_params = [{transform_indices = @transform_0, window_bounds = array<i64: 1, 16, 256>}, {pipeline_mode = #tpu.pipeline_mode<synchronous>, transform_indices = @transform_1, window_bounds = array<i64: 3, 256>}, {pipeline_mode = #tpu.pipeline_mode<synchronous>, transform_indices = @transform_2, window_bounds = array<i64: 3, 8, 144>}, {pipeline_mode = #tpu.pipeline_mode<synchronous>, transform_indices = @transform_3, window_bounds = array<i64: 3, 8, 1>}, {pipeline_mode = #tpu.pipeline_mode<synchronous>, transform_indices = @transform_4, window_bounds = array<i64: 16, 16>}, {pipeline_mode = #tpu.pipeline_mode<synchronous>, transform_indices = @transform_5, window_bounds = array<i64: 16, 8>}, {pipeline_mode = #tpu.pipeline_mode<synchronous>, transform_indices = @transform_6, window_bounds = array<i64: 16, 8>}, {pipeline_mode = #tpu.pipeline_mode<synchronous>, transform_indices = @transform_7, window_bounds = array<i64: 16, 8>}, {pipeline_mode = #tpu.pipeline_mode<synchronous>, transform_indices = @transform_8, window_bounds = array<i64: 16, 1>}, {pipeline_mode = #tpu.pipeline_mode<synchronous>, transform_indices = @transform_9, window_bounds = array<i64: 16, 16>}, {pipeline_mode = #tpu.pipeline_mode<synchronous>, transform_indices = @transform_10, window_bounds = array<i64: 16, 1>}, {transform_indices = @transform_11, window_bounds = array<i64: 1, 16, 256>}]} {
    %cst = arith.constant 0.000000e+00 : bf16
    %0 = vector.broadcast %cst : bf16 to vector<16x128xbf16>
    %c0 = arith.constant 0 : index
    %c0_0 = arith.constant 0 : index
    %1 = vector.load %arg13[%c0, %c0_0] : memref<16x512xbf16, #tpu.memory_space<vmem>>, vector<16x128xbf16>
    tpu.vector_store %arg13[%c0, %c0_0], %0 {strides = array<i32>} : memref<16x512xbf16, #tpu.memory_space<vmem>>, vector<16x128xbf16>,
    %c0_1 = arith.constant 0 : index
    %c384 = arith.constant 384 : index
    %2 = vector.load %arg13[%c0_1, %c384] : memref<16x512xbf16, #tpu.memory_space<vmem>>, vector<16x128xbf16>
    tpu.vector_store %arg13[%c0_1, %c384], %0 {strides = array<i32>} : memref<16x512xbf16, #tpu.memory_space<vmem>>, vector<16x128xbf16>,
    %c0_2 = arith.constant 0 : index
    %c0_3 = arith.constant 0 : index
    %3 = vector.load %arg2[%c0_2, %c0_3] : memref<3x256xbf16, #tpu.memory_space<vmem>>, vector<1x256xbf16>
    %c1 = arith.constant 1 : index
    %c0_4 = arith.constant 0 : index
    %4 = vector.load %arg2[%c1, %c0_4] : memref<3x256xbf16, #tpu.memory_space<vmem>>, vector<1x256xbf16>
    %c0_5 = arith.constant 0 : index
    %c0_6 = arith.constant 0 : index
    %c0_7 = arith.constant 0 : index
    %5 = vector.load %arg1[%c0_5, %c0_6, %c0_7] : memref<1x16x256xbf16, #tpu.memory_space<vmem>>, vector<1x16x256xbf16>
    %6 = vector.shape_cast %5 : vector<1x16x256xbf16> to vector<16x256xbf16>
    %c0_8 = arith.constant 0 : index
    %c0_9 = arith.constant 0 : index
    %7 = vector.load %arg5[%c0_8, %c0_9] : memref<16x16xbf16, #tpu.memory_space<vmem>>, vector<16x16xbf16>
    %cst_10 = arith.constant dense<0.000000e+00> : vector<16x256xf32>
    %8 = tpu.matmul %7, %6, %cst_10 {dimension_numbers = #tpu.dot_dimension_numbers<[1], [0], [0], [1], [0, 0, 1, 1], [], []>} : vector<16x16xbf16>, vector<16x256xbf16>, vector<16x256xf32> -> vector<16x256xf32>
    %c0_11 = arith.constant 0 : index
    %c0_12 = arith.constant 0 : index
    %9 = vector.load %arg15[%c0_11, %c0_12] : memref<16x256xf32, #tpu.memory_space<vmem>>, vector<16x256xf32>
    tpu.vector_store %arg15[%c0_11, %c0_12], %8 {strides = array<i32>} : memref<16x256xf32, #tpu.memory_space<vmem>>, vector<16x256xf32>,
    %c0_13 = arith.constant 0 : index
    %c128 = arith.constant 128 : index
    %10 = vector.load %arg13[%c0_13, %c128] : memref<16x512xbf16, #tpu.memory_space<vmem>>, vector<16x256xbf16>
    tpu.vector_store %arg13[%c0_13, %c128], %6 {strides = array<i32>} : memref<16x512xbf16, #tpu.memory_space<vmem>>, vector<16x256xbf16>,
    %c0_14 = arith.constant 0 : index
    %c111 = arith.constant 111 : index
    %11 = vector.load %arg13[%c0_14, %c111] : memref<16x512xbf16, #tpu.memory_space<vmem>>, vector<16x256xbf16>
    %12 = vector.broadcast %3 : vector<1x256xbf16> to vector<16x256xbf16>
    %13 = arith.mulf %11, %12 : vector<16x256xbf16>
    %c0_15 = arith.constant 0 : index
    %c0_16 = arith.constant 0 : index
    %14 = vector.load %arg14[%c0_15, %c0_16] : memref<144x256xbf16, #tpu.memory_space<vmem>>, vector<16x256xbf16>
    tpu.vector_store %arg14[%c0_15, %c0_16], %13 {strides = array<i32>} : memref<144x256xbf16, #tpu.memory_space<vmem>>, vector<16x256xbf16>,
    %c0_17 = arith.constant 0 : index
    %c112 = arith.constant 112 : index
    %15 = vector.load %arg13[%c0_17, %c112] : memref<16x512xbf16, #tpu.memory_space<vmem>>, vector<16x256xbf16>
    %c16 = arith.constant 16 : index
    %c0_18 = arith.constant 0 : index
    %16 = vector.load %arg14[%c16, %c0_18] : memref<144x256xbf16, #tpu.memory_space<vmem>>, vector<16x256xbf16>
    tpu.vector_store %arg14[%c16, %c0_18], %15 {strides = array<i32>} : memref<144x256xbf16, #tpu.memory_space<vmem>>, vector<16x256xbf16>,
    %c0_19 = arith.constant 0 : index
    %c113 = arith.constant 113 : index
    %17 = vector.load %arg13[%c0_19, %c113] : memref<16x512xbf16, #tpu.memory_space<vmem>>, vector<16x256xbf16>
    %18 = vector.broadcast %4 : vector<1x256xbf16> to vector<16x256xbf16>
    %19 = arith.mulf %17, %18 : vector<16x256xbf16>
    %c32 = arith.constant 32 : index
    %c0_20 = arith.constant 0 : index
    %20 = vector.load %arg14[%c32, %c0_20] : memref<144x256xbf16, #tpu.memory_space<vmem>>, vector<16x256xbf16>
    tpu.vector_store %arg14[%c32, %c0_20], %19 {strides = array<i32>} : memref<144x256xbf16, #tpu.memory_space<vmem>>, vector<16x256xbf16>,
    %c0_21 = arith.constant 0 : index
    %c127 = arith.constant 127 : index
    %21 = vector.load %arg13[%c0_21, %c127] : memref<16x512xbf16, #tpu.memory_space<vmem>>, vector<16x256xbf16>
    %22 = vector.broadcast %3 : vector<1x256xbf16> to vector<16x256xbf16>
    %23 = arith.mulf %21, %22 : vector<16x256xbf16>
    %c48 = arith.constant 48 : index
    %c0_22 = arith.constant 0 : index
    %24 = vector.load %arg14[%c48, %c0_22] : memref<144x256xbf16, #tpu.memory_space<vmem>>, vector<16x256xbf16>
    tpu.vector_store %arg14[%c48, %c0_22], %23 {strides = array<i32>} : memref<144x256xbf16, #tpu.memory_space<vmem>>, vector<16x256xbf16>,
    %c0_23 = arith.constant 0 : index
    %c128_24 = arith.constant 128 : index
    %25 = vector.load %arg13[%c0_23, %c128_24] : memref<16x512xbf16, #tpu.memory_space<vmem>>, vector<16x256xbf16>
    %c64 = arith.constant 64 : index
    %c0_25 = arith.constant 0 : index
    %26 = vector.load %arg14[%c64, %c0_25] : memref<144x256xbf16, #tpu.memory_space<vmem>>, vector<16x256xbf16>
    tpu.vector_store %arg14[%c64, %c0_25], %25 {strides = array<i32>} : memref<144x256xbf16, #tpu.memory_space<vmem>>, vector<16x256xbf16>,
    %c0_26 = arith.constant 0 : index
    %c129 = arith.constant 129 : index
    %27 = vector.load %arg13[%c0_26, %c129] : memref<16x512xbf16, #tpu.memory_space<vmem>>, vector<16x256xbf16>
    %28 = vector.broadcast %4 : vector<1x256xbf16> to vector<16x256xbf16>
    %29 = arith.mulf %27, %28 : vector<16x256xbf16>
    %c80 = arith.constant 80 : index
    %c0_27 = arith.constant 0 : index
    %30 = vector.load %arg14[%c80, %c0_27] : memref<144x256xbf16, #tpu.memory_space<vmem>>, vector<16x256xbf16>
    tpu.vector_store %arg14[%c80, %c0_27], %29 {strides = array<i32>} : memref<144x256xbf16, #tpu.memory_space<vmem>>, vector<16x256xbf16>,
    %c0_28 = arith.constant 0 : index
    %c143 = arith.constant 143 : index
    %31 = vector.load %arg13[%c0_28, %c143] : memref<16x512xbf16, #tpu.memory_space<vmem>>, vector<16x256xbf16>
    %32 = vector.broadcast %3 : vector<1x256xbf16> to vector<16x256xbf16>
    %33 = arith.mulf %31, %32 : vector<16x256xbf16>
    %c96 = arith.constant 96 : index
    %c0_29 = arith.constant 0 : index
    %34 = vector.load %arg14[%c96, %c0_29] : memref<144x256xbf16, #tpu.memory_space<vmem>>, vector<16x256xbf16>
    tpu.vector_store %arg14[%c96, %c0_29], %33 {strides = array<i32>} : memref<144x256xbf16, #tpu.memory_space<vmem>>, vector<16x256xbf16>,
    %c0_30 = arith.constant 0 : index
    %c144 = arith.constant 144 : index
    %35 = vector.load %arg13[%c0_30, %c144] : memref<16x512xbf16, #tpu.memory_space<vmem>>, vector<16x256xbf16>
    %c112_31 = arith.constant 112 : index
    %c0_32 = arith.constant 0 : index
    %36 = vector.load %arg14[%c112_31, %c0_32] : memref<144x256xbf16, #tpu.memory_space<vmem>>, vector<16x256xbf16>
    tpu.vector_store %arg14[%c112_31, %c0_32], %35 {strides = array<i32>} : memref<144x256xbf16, #tpu.memory_space<vmem>>, vector<16x256xbf16>,
    %c0_33 = arith.constant 0 : index
    %c145 = arith.constant 145 : index
    %37 = vector.load %arg13[%c0_33, %c145] : memref<16x512xbf16, #tpu.memory_space<vmem>>, vector<16x256xbf16>
    %38 = vector.broadcast %4 : vector<1x256xbf16> to vector<16x256xbf16>
    %39 = arith.mulf %37, %38 : vector<16x256xbf16>
    %c128_34 = arith.constant 128 : index
    %c0_35 = arith.constant 0 : index
    %40 = vector.load %arg14[%c128_34, %c0_35] : memref<144x256xbf16, #tpu.memory_space<vmem>>, vector<16x256xbf16>
    tpu.vector_store %arg14[%c128_34, %c0_35], %39 {strides = array<i32>} : memref<144x256xbf16, #tpu.memory_space<vmem>>, vector<16x256xbf16>,
    %c0_36 = arith.constant 0 : index
    %c0_37 = arith.constant 0 : index
    %c0_38 = arith.constant 0 : index
    %41 = vector.load %arg3[%c0_36, %c0_37, %c0_38] : memref<3x8x144xbf16, #tpu.memory_space<vmem>>, vector<1x8x144xbf16>
    %42 = vector.shape_cast %41 : vector<1x8x144xbf16> to vector<8x144xbf16>
    %c0_39 = arith.constant 0 : index
    %c0_40 = arith.constant 0 : index
    %43 = vector.load %arg14[%c0_39, %c0_40] : memref<144x256xbf16, #tpu.memory_space<vmem>>, vector<144x256xbf16>
    %cst_41 = arith.constant dense<0.000000e+00> : vector<8x256xf32>
    %44 = tpu.matmul %42, %43, %cst_41 {dimension_numbers = #tpu.dot_dimension_numbers<[1], [0], [0], [1], [0, 0, 1, 1], [], []>} : vector<8x144xbf16>, vector<144x256xbf16>, vector<8x256xf32> -> vector<8x256xf32>
    %c0_42 = arith.constant 0 : index
    %c0_43 = arith.constant 0 : index
    %c0_44 = arith.constant 0 : index
    %45 = vector.load %arg4[%c0_42, %c0_43, %c0_44] : memref<3x8x1xf32, #tpu.memory_space<vmem>>, vector<1x8x1xf32>
    %46 = vector.shape_cast %45 : vector<1x8x1xf32> to vector<8x1xf32>
    %47 = vector.broadcast %46 : vector<8x1xf32> to vector<8x256xf32>
    %48 = arith.addf %44, %47 : vector<8x256xf32>
    %cst_45 = arith.constant 0.000000e+00 : f32
    %49 = vector.broadcast %cst_45 : f32 to vector<8x256xf32>
    %50 = arith.maximumf %48, %49 : vector<8x256xf32>
    %51 = arith.truncf %50 : vector<8x256xf32> to vector<8x256xbf16>
    %c0_46 = arith.constant 0 : index
    %c0_47 = arith.constant 0 : index
    %52 = vector.load %arg15[%c0_46, %c0_47] : memref<16x256xf32, #tpu.memory_space<vmem>>, vector<16x256xf32>
    %c0_48 = arith.constant 0 : index
    %c0_49 = arith.constant 0 : index
    %53 = vector.load %arg6[%c0_48, %c0_49] : memref<16x8xbf16, #tpu.memory_space<vmem>>, vector<16x8xbf16>
    %cst_50 = arith.constant dense<0.000000e+00> : vector<16x256xf32>
    %54 = tpu.matmul %53, %51, %cst_50 {dimension_numbers = #tpu.dot_dimension_numbers<[1], [0], [0], [1], [0, 0, 1, 1], [], []>} : vector<16x8xbf16>, vector<8x256xbf16>, vector<16x256xf32> -> vector<16x256xf32>
    %55 = arith.addf %52, %54 : vector<16x256xf32>
    %c0_51 = arith.constant 0 : index
    %c0_52 = arith.constant 0 : index
    %56 = vector.load %arg15[%c0_51, %c0_52] : memref<16x256xf32, #tpu.memory_space<vmem>>, vector<16x256xf32>
    tpu.vector_store %arg15[%c0_51, %c0_52], %55 {strides = array<i32>} : memref<16x256xf32, #tpu.memory_space<vmem>>, vector<16x256xf32>,
    %c0_53 = arith.constant 0 : index
    %c128_54 = arith.constant 128 : index
    %57 = vector.load %arg13[%c0_53, %c128_54] : memref<16x512xbf16, #tpu.memory_space<vmem>>, vector<8x256xbf16>
    tpu.vector_store %arg13[%c0_53, %c128_54], %51 {strides = array<i32>} : memref<16x512xbf16, #tpu.memory_space<vmem>>, vector<8x256xbf16>,
    %c0_55 = arith.constant 0 : index
    %c111_56 = arith.constant 111 : index
    %58 = vector.load %arg13[%c0_55, %c111_56] : memref<16x512xbf16, #tpu.memory_space<vmem>>, vector<8x256xbf16>
    %59 = vector.broadcast %3 : vector<1x256xbf16> to vector<8x256xbf16>
    %60 = arith.mulf %58, %59 : vector<8x256xbf16>
    %c0_57 = arith.constant 0 : index
    %c0_58 = arith.constant 0 : index
    %61 = vector.load %arg14[%c0_57, %c0_58] : memref<144x256xbf16, #tpu.memory_space<vmem>>, vector<8x256xbf16>
    tpu.vector_store %arg14[%c0_57, %c0_58], %60 {strides = array<i32>} : memref<144x256xbf16, #tpu.memory_space<vmem>>, vector<8x256xbf16>,
    %c0_59 = arith.constant 0 : index
    %c112_60 = arith.constant 112 : index
    %62 = vector.load %arg13[%c0_59, %c112_60] : memref<16x512xbf16, #tpu.memory_space<vmem>>, vector<8x256xbf16>
    %c16_61 = arith.constant 16 : index
    %c0_62 = arith.constant 0 : index
    %63 = vector.load %arg14[%c16_61, %c0_62] : memref<144x256xbf16, #tpu.memory_space<vmem>>, vector<8x256xbf16>
    tpu.vector_store %arg14[%c16_61, %c0_62], %62 {strides = array<i32>} : memref<144x256xbf16, #tpu.memory_space<vmem>>, vector<8x256xbf16>,
    %c0_63 = arith.constant 0 : index
    %c113_64 = arith.constant 113 : index
    %64 = vector.load %arg13[%c0_63, %c113_64] : memref<16x512xbf16, #tpu.memory_space<vmem>>, vector<8x256xbf16>
    %65 = vector.broadcast %4 : vector<1x256xbf16> to vector<8x256xbf16>
    %66 = arith.mulf %64, %65 : vector<8x256xbf16>
    %c32_65 = arith.constant 32 : index
    %c0_66 = arith.constant 0 : index
    %67 = vector.load %arg14[%c32_65, %c0_66] : memref<144x256xbf16, #tpu.memory_space<vmem>>, vector<8x256xbf16>
    tpu.vector_store %arg14[%c32_65, %c0_66], %66 {strides = array<i32>} : memref<144x256xbf16, #tpu.memory_space<vmem>>, vector<8x256xbf16>,
    %c0_67 = arith.constant 0 : index
    %c127_68 = arith.constant 127 : index
    %68 = vector.load %arg13[%c0_67, %c127_68] : memref<16x512xbf16, #tpu.memory_space<vmem>>, vector<8x256xbf16>
    %69 = vector.broadcast %3 : vector<1x256xbf16> to vector<8x256xbf16>
    %70 = arith.mulf %68, %69 : vector<8x256xbf16>
    %c48_69 = arith.constant 48 : index
    %c0_70 = arith.constant 0 : index
    %71 = vector.load %arg14[%c48_69, %c0_70] : memref<144x256xbf16, #tpu.memory_space<vmem>>, vector<8x256xbf16>
    tpu.vector_store %arg14[%c48_69, %c0_70], %70 {strides = array<i32>} : memref<144x256xbf16, #tpu.memory_space<vmem>>, vector<8x256xbf16>,
    %c0_71 = arith.constant 0 : index
    %c128_72 = arith.constant 128 : index
    %72 = vector.load %arg13[%c0_71, %c128_72] : memref<16x512xbf16, #tpu.memory_space<vmem>>, vector<8x256xbf16>
    %c64_73 = arith.constant 64 : index
    %c0_74 = arith.constant 0 : index
    %73 = vector.load %arg14[%c64_73, %c0_74] : memref<144x256xbf16, #tpu.memory_space<vmem>>, vector<8x256xbf16>
    tpu.vector_store %arg14[%c64_73, %c0_74], %72 {strides = array<i32>} : memref<144x256xbf16, #tpu.memory_space<vmem>>, vector<8x256xbf16>,
    %c0_75 = arith.constant 0 : index
    %c129_76 = arith.constant 129 : index
    %74 = vector.load %arg13[%c0_75, %c129_76] : memref<16x512xbf16, #tpu.memory_space<vmem>>, vector<8x256xbf16>
    %75 = vector.broadcast %4 : vector<1x256xbf16> to vector<8x256xbf16>
    %76 = arith.mulf %74, %75 : vector<8x256xbf16>
    %c80_77 = arith.constant 80 : index
    %c0_78 = arith.constant 0 : index
    %77 = vector.load %arg14[%c80_77, %c0_78] : memref<144x256xbf16, #tpu.memory_space<vmem>>, vector<8x256xbf16>
    tpu.vector_store %arg14[%c80_77, %c0_78], %76 {strides = array<i32>} : memref<144x256xbf16, #tpu.memory_space<vmem>>, vector<8x256xbf16>,
    %c0_79 = arith.constant 0 : index
    %c143_80 = arith.constant 143 : index
    %78 = vector.load %arg13[%c0_79, %c143_80] : memref<16x512xbf16, #tpu.memory_space<vmem>>, vector<8x256xbf16>
    %79 = vector.broadcast %3 : vector<1x256xbf16> to vector<8x256xbf16>
    %80 = arith.mulf %78, %79 : vector<8x256xbf16>
    %c96_81 = arith.constant 96 : index
    %c0_82 = arith.constant 0 : index
    %81 = vector.load %arg14[%c96_81, %c0_82] : memref<144x256xbf16, #tpu.memory_space<vmem>>, vector<8x256xbf16>
    tpu.vector_store %arg14[%c96_81, %c0_82], %80 {strides = array<i32>} : memref<144x256xbf16, #tpu.memory_space<vmem>>, vector<8x256xbf16>,
    %c0_83 = arith.constant 0 : index
    %c144_84 = arith.constant 144 : index
    %82 = vector.load %arg13[%c0_83, %c144_84] : memref<16x512xbf16, #tpu.memory_space<vmem>>, vector<8x256xbf16>
    %c112_85 = arith.constant 112 : index
    %c0_86 = arith.constant 0 : index
    %83 = vector.load %arg14[%c112_85, %c0_86] : memref<144x256xbf16, #tpu.memory_space<vmem>>, vector<8x256xbf16>
    tpu.vector_store %arg14[%c112_85, %c0_86], %82 {strides = array<i32>} : memref<144x256xbf16, #tpu.memory_space<vmem>>, vector<8x256xbf16>,
    %c0_87 = arith.constant 0 : index
    %c145_88 = arith.constant 145 : index
    %84 = vector.load %arg13[%c0_87, %c145_88] : memref<16x512xbf16, #tpu.memory_space<vmem>>, vector<8x256xbf16>
    %85 = vector.broadcast %4 : vector<1x256xbf16> to vector<8x256xbf16>
    %86 = arith.mulf %84, %85 : vector<8x256xbf16>
    %c128_89 = arith.constant 128 : index
    %c0_90 = arith.constant 0 : index
    %87 = vector.load %arg14[%c128_89, %c0_90] : memref<144x256xbf16, #tpu.memory_space<vmem>>, vector<8x256xbf16>
    tpu.vector_store %arg14[%c128_89, %c0_90], %86 {strides = array<i32>} : memref<144x256xbf16, #tpu.memory_space<vmem>>, vector<8x256xbf16>,
    %c1_91 = arith.constant 1 : index
    %c0_92 = arith.constant 0 : index
    %c0_93 = arith.constant 0 : index
    %88 = vector.load %arg3[%c1_91, %c0_92, %c0_93] : memref<3x8x144xbf16, #tpu.memory_space<vmem>>, vector<1x8x144xbf16>
    %89 = vector.shape_cast %88 : vector<1x8x144xbf16> to vector<8x144xbf16>
    %c0_94 = arith.constant 0 : index
    %c0_95 = arith.constant 0 : index
    %90 = vector.load %arg14[%c0_94, %c0_95] : memref<144x256xbf16, #tpu.memory_space<vmem>>, vector<144x256xbf16>
    %cst_96 = arith.constant dense<0.000000e+00> : vector<8x256xf32>
    %91 = tpu.matmul %89, %90, %cst_96 {dimension_numbers = #tpu.dot_dimension_numbers<[1], [0], [0], [1], [0, 0, 1, 1], [], []>} : vector<8x144xbf16>, vector<144x256xbf16>, vector<8x256xf32> -> vector<8x256xf32>
    %c1_97 = arith.constant 1 : index
    %c0_98 = arith.constant 0 : index
    %c0_99 = arith.constant 0 : index
    %92 = vector.load %arg4[%c1_97, %c0_98, %c0_99] : memref<3x8x1xf32, #tpu.memory_space<vmem>>, vector<1x8x1xf32>
    %93 = vector.shape_cast %92 : vector<1x8x1xf32> to vector<8x1xf32>
    %94 = vector.broadcast %93 : vector<8x1xf32> to vector<8x256xf32>
    %95 = arith.addf %91, %94 : vector<8x256xf32>
    %cst_100 = arith.constant 0.000000e+00 : f32
    %96 = vector.broadcast %cst_100 : f32 to vector<8x256xf32>
    %97 = arith.maximumf %95, %96 : vector<8x256xf32>
    %98 = arith.truncf %97 : vector<8x256xf32> to vector<8x256xbf16>
    %c0_101 = arith.constant 0 : index
    %c0_102 = arith.constant 0 : index
    %99 = vector.load %arg15[%c0_101, %c0_102] : memref<16x256xf32, #tpu.memory_space<vmem>>, vector<16x256xf32>
    %c0_103 = arith.constant 0 : index
    %c0_104 = arith.constant 0 : index
    %100 = vector.load %arg7[%c0_103, %c0_104] : memref<16x8xbf16, #tpu.memory_space<vmem>>, vector<16x8xbf16>
    %cst_105 = arith.constant dense<0.000000e+00> : vector<16x256xf32>
    %101 = tpu.matmul %100, %98, %cst_105 {dimension_numbers = #tpu.dot_dimension_numbers<[1], [0], [0], [1], [0, 0, 1, 1], [], []>} : vector<16x8xbf16>, vector<8x256xbf16>, vector<16x256xf32> -> vector<16x256xf32>
    %102 = arith.addf %99, %101 : vector<16x256xf32>
    %c0_106 = arith.constant 0 : index
    %c0_107 = arith.constant 0 : index
    %103 = vector.load %arg15[%c0_106, %c0_107] : memref<16x256xf32, #tpu.memory_space<vmem>>, vector<16x256xf32>
    tpu.vector_store %arg15[%c0_106, %c0_107], %102 {strides = array<i32>} : memref<16x256xf32, #tpu.memory_space<vmem>>, vector<16x256xf32>,
    %c0_108 = arith.constant 0 : index
    %c128_109 = arith.constant 128 : index
    %104 = vector.load %arg13[%c0_108, %c128_109] : memref<16x512xbf16, #tpu.memory_space<vmem>>, vector<8x256xbf16>
    tpu.vector_store %arg13[%c0_108, %c128_109], %98 {strides = array<i32>} : memref<16x512xbf16, #tpu.memory_space<vmem>>, vector<8x256xbf16>,
    %c0_110 = arith.constant 0 : index
    %c111_111 = arith.constant 111 : index
    %105 = vector.load %arg13[%c0_110, %c111_111] : memref<16x512xbf16, #tpu.memory_space<vmem>>, vector<8x256xbf16>
    %106 = vector.broadcast %3 : vector<1x256xbf16> to vector<8x256xbf16>
    %107 = arith.mulf %105, %106 : vector<8x256xbf16>
    %c0_112 = arith.constant 0 : index
    %c0_113 = arith.constant 0 : index
    %108 = vector.load %arg14[%c0_112, %c0_113] : memref<144x256xbf16, #tpu.memory_space<vmem>>, vector<8x256xbf16>
    tpu.vector_store %arg14[%c0_112, %c0_113], %107 {strides = array<i32>} : memref<144x256xbf16, #tpu.memory_space<vmem>>, vector<8x256xbf16>,
    %c0_114 = arith.constant 0 : index
    %c112_115 = arith.constant 112 : index
    %109 = vector.load %arg13[%c0_114, %c112_115] : memref<16x512xbf16, #tpu.memory_space<vmem>>, vector<8x256xbf16>
    %c16_116 = arith.constant 16 : index
    %c0_117 = arith.constant 0 : index
    %110 = vector.load %arg14[%c16_116, %c0_117] : memref<144x256xbf16, #tpu.memory_space<vmem>>, vector<8x256xbf16>
    tpu.vector_store %arg14[%c16_116, %c0_117], %109 {strides = array<i32>} : memref<144x256xbf16, #tpu.memory_space<vmem>>, vector<8x256xbf16>,
    %c0_118 = arith.constant 0 : index
    %c113_119 = arith.constant 113 : index
    %111 = vector.load %arg13[%c0_118, %c113_119] : memref<16x512xbf16, #tpu.memory_space<vmem>>, vector<8x256xbf16>
    %112 = vector.broadcast %4 : vector<1x256xbf16> to vector<8x256xbf16>
    %113 = arith.mulf %111, %112 : vector<8x256xbf16>
    %c32_120 = arith.constant 32 : index
    %c0_121 = arith.constant 0 : index
    %114 = vector.load %arg14[%c32_120, %c0_121] : memref<144x256xbf16, #tpu.memory_space<vmem>>, vector<8x256xbf16>
    tpu.vector_store %arg14[%c32_120, %c0_121], %113 {strides = array<i32>} : memref<144x256xbf16, #tpu.memory_space<vmem>>, vector<8x256xbf16>,
    %c0_122 = arith.constant 0 : index
    %c127_123 = arith.constant 127 : index
    %115 = vector.load %arg13[%c0_122, %c127_123] : memref<16x512xbf16, #tpu.memory_space<vmem>>, vector<8x256xbf16>
    %116 = vector.broadcast %3 : vector<1x256xbf16> to vector<8x256xbf16>
    %117 = arith.mulf %115, %116 : vector<8x256xbf16>
    %c48_124 = arith.constant 48 : index
    %c0_125 = arith.constant 0 : index
    %118 = vector.load %arg14[%c48_124, %c0_125] : memref<144x256xbf16, #tpu.memory_space<vmem>>, vector<8x256xbf16>
    tpu.vector_store %arg14[%c48_124, %c0_125], %117 {strides = array<i32>} : memref<144x256xbf16, #tpu.memory_space<vmem>>, vector<8x256xbf16>,
    %c0_126 = arith.constant 0 : index
    %c128_127 = arith.constant 128 : index
    %119 = vector.load %arg13[%c0_126, %c128_127] : memref<16x512xbf16, #tpu.memory_space<vmem>>, vector<8x256xbf16>
    %c64_128 = arith.constant 64 : index
    %c0_129 = arith.constant 0 : index
    %120 = vector.load %arg14[%c64_128, %c0_129] : memref<144x256xbf16, #tpu.memory_space<vmem>>, vector<8x256xbf16>
    tpu.vector_store %arg14[%c64_128, %c0_129], %119 {strides = array<i32>} : memref<144x256xbf16, #tpu.memory_space<vmem>>, vector<8x256xbf16>,
    %c0_130 = arith.constant 0 : index
    %c129_131 = arith.constant 129 : index
    %121 = vector.load %arg13[%c0_130, %c129_131] : memref<16x512xbf16, #tpu.memory_space<vmem>>, vector<8x256xbf16>
    %122 = vector.broadcast %4 : vector<1x256xbf16> to vector<8x256xbf16>
    %123 = arith.mulf %121, %122 : vector<8x256xbf16>
    %c80_132 = arith.constant 80 : index
    %c0_133 = arith.constant 0 : index
    %124 = vector.load %arg14[%c80_132, %c0_133] : memref<144x256xbf16, #tpu.memory_space<vmem>>, vector<8x256xbf16>
    tpu.vector_store %arg14[%c80_132, %c0_133], %123 {strides = array<i32>} : memref<144x256xbf16, #tpu.memory_space<vmem>>, vector<8x256xbf16>,
    %c0_134 = arith.constant 0 : index
    %c143_135 = arith.constant 143 : index
    %125 = vector.load %arg13[%c0_134, %c143_135] : memref<16x512xbf16, #tpu.memory_space<vmem>>, vector<8x256xbf16>
    %126 = vector.broadcast %3 : vector<1x256xbf16> to vector<8x256xbf16>
    %127 = arith.mulf %125, %126 : vector<8x256xbf16>
    %c96_136 = arith.constant 96 : index
    %c0_137 = arith.constant 0 : index
    %128 = vector.load %arg14[%c96_136, %c0_137] : memref<144x256xbf16, #tpu.memory_space<vmem>>, vector<8x256xbf16>
    tpu.vector_store %arg14[%c96_136, %c0_137], %127 {strides = array<i32>} : memref<144x256xbf16, #tpu.memory_space<vmem>>, vector<8x256xbf16>,
    %c0_138 = arith.constant 0 : index
    %c144_139 = arith.constant 144 : index
    %129 = vector.load %arg13[%c0_138, %c144_139] : memref<16x512xbf16, #tpu.memory_space<vmem>>, vector<8x256xbf16>
    %c112_140 = arith.constant 112 : index
    %c0_141 = arith.constant 0 : index
    %130 = vector.load %arg14[%c112_140, %c0_141] : memref<144x256xbf16, #tpu.memory_space<vmem>>, vector<8x256xbf16>
    tpu.vector_store %arg14[%c112_140, %c0_141], %129 {strides = array<i32>} : memref<144x256xbf16, #tpu.memory_space<vmem>>, vector<8x256xbf16>,
    %c0_142 = arith.constant 0 : index
    %c145_143 = arith.constant 145 : index
    %131 = vector.load %arg13[%c0_142, %c145_143] : memref<16x512xbf16, #tpu.memory_space<vmem>>, vector<8x256xbf16>
    %132 = vector.broadcast %4 : vector<1x256xbf16> to vector<8x256xbf16>
    %133 = arith.mulf %131, %132 : vector<8x256xbf16>
    %c128_144 = arith.constant 128 : index
    %c0_145 = arith.constant 0 : index
    %134 = vector.load %arg14[%c128_144, %c0_145] : memref<144x256xbf16, #tpu.memory_space<vmem>>, vector<8x256xbf16>
    tpu.vector_store %arg14[%c128_144, %c0_145], %133 {strides = array<i32>} : memref<144x256xbf16, #tpu.memory_space<vmem>>, vector<8x256xbf16>,
    %c2 = arith.constant 2 : index
    %c0_146 = arith.constant 0 : index
    %c0_147 = arith.constant 0 : index
    %135 = vector.load %arg3[%c2, %c0_146, %c0_147] : memref<3x8x144xbf16, #tpu.memory_space<vmem>>, vector<1x8x144xbf16>
    %136 = vector.shape_cast %135 : vector<1x8x144xbf16> to vector<8x144xbf16>
    %c0_148 = arith.constant 0 : index
    %c0_149 = arith.constant 0 : index
    %137 = vector.load %arg14[%c0_148, %c0_149] : memref<144x256xbf16, #tpu.memory_space<vmem>>, vector<144x256xbf16>
    %cst_150 = arith.constant dense<0.000000e+00> : vector<8x256xf32>
    %138 = tpu.matmul %136, %137, %cst_150 {dimension_numbers = #tpu.dot_dimension_numbers<[1], [0], [0], [1], [0, 0, 1, 1], [], []>} : vector<8x144xbf16>, vector<144x256xbf16>, vector<8x256xf32> -> vector<8x256xf32>
    %c2_151 = arith.constant 2 : index
    %c0_152 = arith.constant 0 : index
    %c0_153 = arith.constant 0 : index
    %139 = vector.load %arg4[%c2_151, %c0_152, %c0_153] : memref<3x8x1xf32, #tpu.memory_space<vmem>>, vector<1x8x1xf32>
    %140 = vector.shape_cast %139 : vector<1x8x1xf32> to vector<8x1xf32>
    %141 = vector.broadcast %140 : vector<8x1xf32> to vector<8x256xf32>
    %142 = arith.addf %138, %141 : vector<8x256xf32>
    %cst_154 = arith.constant 0.000000e+00 : f32
    %143 = vector.broadcast %cst_154 : f32 to vector<8x256xf32>
    %144 = arith.maximumf %142, %143 : vector<8x256xf32>
    %145 = arith.truncf %144 : vector<8x256xf32> to vector<8x256xbf16>
    %c0_155 = arith.constant 0 : index
    %c0_156 = arith.constant 0 : index
    %146 = vector.load %arg15[%c0_155, %c0_156] : memref<16x256xf32, #tpu.memory_space<vmem>>, vector<16x256xf32>
    %c0_157 = arith.constant 0 : index
    %c0_158 = arith.constant 0 : index
    %147 = vector.load %arg8[%c0_157, %c0_158] : memref<16x8xbf16, #tpu.memory_space<vmem>>, vector<16x8xbf16>
    %cst_159 = arith.constant dense<0.000000e+00> : vector<16x256xf32>
    %148 = tpu.matmul %147, %145, %cst_159 {dimension_numbers = #tpu.dot_dimension_numbers<[1], [0], [0], [1], [0, 0, 1, 1], [], []>} : vector<16x8xbf16>, vector<8x256xbf16>, vector<16x256xf32> -> vector<16x256xf32>
    %149 = arith.addf %146, %148 : vector<16x256xf32>
    %c0_160 = arith.constant 0 : index
    %c0_161 = arith.constant 0 : index
    %150 = vector.load %arg15[%c0_160, %c0_161] : memref<16x256xf32, #tpu.memory_space<vmem>>, vector<16x256xf32>
    tpu.vector_store %arg15[%c0_160, %c0_161], %149 {strides = array<i32>} : memref<16x256xf32, #tpu.memory_space<vmem>>, vector<16x256xf32>,
    %c0_162 = arith.constant 0 : index
    %c0_163 = arith.constant 0 : index
    %151 = vector.load %arg15[%c0_162, %c0_163] : memref<16x256xf32, #tpu.memory_space<vmem>>, vector<16x256xf32>
    %c0_164 = arith.constant 0 : index
    %c0_165 = arith.constant 0 : index
    %152 = vector.load %arg9[%c0_164, %c0_165] : memref<16x1xf32, #tpu.memory_space<vmem>>, vector<16x1xf32>
    %153 = vector.broadcast %152 : vector<16x1xf32> to vector<16x256xf32>
    %154 = arith.addf %151, %153 : vector<16x256xf32>
    %cst_166 = arith.constant 0.000000e+00 : f32
    %155 = vector.broadcast %cst_166 : f32 to vector<16x256xf32>
    %156 = arith.maximumf %154, %155 : vector<16x256xf32>
    %cst_167 = arith.constant dense<0.000000e+00> : vector<16xf32>
    %157 = vector.multi_reduction <add>, %156, %cst_167 [1] : vector<16x256xf32> to vector<16xf32>
    %158 = vector.shape_cast %157 : vector<16xf32> to vector<16x1xf32>
    %cst_168 = arith.constant 2.560000e+02 : f32
    %159 = vector.broadcast %cst_168 : f32 to vector<16x1xf32>
    %160 = arith.divf %158, %159 : vector<16x1xf32>
    %c0_169 = arith.constant 0 : index
    %c0_170 = arith.constant 0 : index
    %161 = vector.load %arg10[%c0_169, %c0_170] : memref<16x16xf32, #tpu.memory_space<vmem>>, vector<16x16xf32>
    %cst_171 = arith.constant dense<0.000000e+00> : vector<16x1xf32>
    %162 = tpu.matmul %161, %160, %cst_171 {dimension_numbers = #tpu.dot_dimension_numbers<[1], [0], [0], [1], [0, 0, 1, 1], [], []>} : vector<16x16xf32>, vector<16x1xf32>, vector<16x1xf32> -> vector<16x1xf32>
    %c0_172 = arith.constant 0 : index
    %c0_173 = arith.constant 0 : index
    %163 = vector.load %arg11[%c0_172, %c0_173] : memref<16x1xf32, #tpu.memory_space<vmem>>, vector<16x1xf32>
    %164 = arith.addf %162, %163 : vector<16x1xf32>
    %165 = arith.negf %164 : vector<16x1xf32>
    %166 = math.exp %165 : vector<16x1xf32>
    %cst_174 = arith.constant 1.000000e+00 : f32
    %167 = vector.broadcast %cst_174 : f32 to vector<16x1xf32>
    %168 = arith.addf %167, %166 : vector<16x1xf32>
    %169 = arith.divf %167, %168 : vector<16x1xf32>
    %170 = vector.broadcast %169 : vector<16x1xf32> to vector<16x256xf32>
    %171 = arith.mulf %156, %170 : vector<16x256xf32>
    %172 = vector.shape_cast %171 : vector<16x256xf32> to vector<1x16x256xf32>
    %c0_175 = arith.constant 0 : index
    %c0_176 = arith.constant 0 : index
    %c0_177 = arith.constant 0 : index
    %173 = vector.load %arg12[%c0_175, %c0_176, %c0_177] : memref<1x16x256xf32, #tpu.memory_space<vmem>>, vector<1x16x256xf32>
    tpu.vector_store %arg12[%c0_175, %c0_176, %c0_177], %172 {strides = array<i32>} : memref<1x16x256xf32, #tpu.memory_space<vmem>>, vector<1x16x256xf32>,
    return
  }
  func.func @transform_0(%arg0: i32) -> (i32, i32, i32) {
    %c0_i32 = arith.constant 0 : i32
    %c0_i32_0 = arith.constant 0 : i32
    %c0_i32_1 = arith.constant 0 : i32
    return %arg0, %c0_i32, %c0_i32_0 : i32, i32, i32
  }
  func.func @transform_1(%arg0: i32) -> (i32, i32) {
    %c0_i32 = arith.constant 0 : i32
    %c0_i32_0 = arith.constant 0 : i32
    %c0_i32_1 = arith.constant 0 : i32
    return %c0_i32, %c0_i32_0 : i32, i32
  }
  func.func @transform_2(%arg0: i32) -> (i32, i32, i32) {
    %c0_i32 = arith.constant 0 : i32
    %c0_i32_0 = arith.constant 0 : i32
    %c0_i32_1 = arith.constant 0 : i32
    %c0_i32_2 = arith.constant 0 : i32
    return %c0_i32, %c0_i32_0, %c0_i32_1 : i32, i32, i32
  }
  func.func @transform_3(%arg0: i32) -> (i32, i32, i32) {
    %c0_i32 = arith.constant 0 : i32
    %c0_i32_0 = arith.constant 0 : i32
    %c0_i32_1 = arith.constant 0 : i32
    %c0_i32_2 = arith.constant 0 : i32
    return %c0_i32, %c0_i32_0, %c0_i32_1 : i32, i32, i32
  }
  func.func @transform_4(%arg0: i32) -> (i32, i32) {
    %c0_i32 = arith.constant 0 : i32
    %c0_i32_0 = arith.constant 0 : i32
    %c0_i32_1 = arith.constant 0 : i32
    return %c0_i32, %c0_i32_0 : i32, i32
  }
  func.func @transform_5(%arg0: i32) -> (i32, i32) {
    %c0_i32 = arith.constant 0 : i32
    %c0_i32_0 = arith.constant 0 : i32
    %c0_i32_1 = arith.constant 0 : i32
    return %c0_i32, %c0_i32_0 : i32, i32
  }
  func.func @transform_6(%arg0: i32) -> (i32, i32) {
    %c0_i32 = arith.constant 0 : i32
    %c0_i32_0 = arith.constant 0 : i32
    %c0_i32_1 = arith.constant 0 : i32
    return %c0_i32, %c0_i32_0 : i32, i32
  }
  func.func @transform_7(%arg0: i32) -> (i32, i32) {
    %c0_i32 = arith.constant 0 : i32
    %c0_i32_0 = arith.constant 0 : i32
    %c0_i32_1 = arith.constant 0 : i32
    return %c0_i32, %c0_i32_0 : i32, i32
  }
  func.func @transform_8(%arg0: i32) -> (i32, i32) {
    %c0_i32 = arith.constant 0 : i32
    %c0_i32_0 = arith.constant 0 : i32
    %c0_i32_1 = arith.constant 0 : i32
    return %c0_i32, %c0_i32_0 : i32, i32
  }
  func.func @transform_9(%arg0: i32) -> (i32, i32) {
    %c0_i32 = arith.constant 0 : i32
    %c0_i32_0 = arith.constant 0 : i32
    %c0_i32_1 = arith.constant 0 : i32
    return %c0_i32, %c0_i32_0 : i32, i32
  }
  func.func @transform_10(%arg0: i32) -> (i32, i32) {
    %c0_i32 = arith.constant 0 : i32
    %c0_i32_0 = arith.constant 0 : i32
    %c0_i32_1 = arith.constant 0 : i32
    return %c0_i32, %c0_i32_0 : i32, i32
  }
  func.func @transform_11(%arg0: i32) -> (i32, i32, i32) {
    %c0_i32 = arith.constant 0 : i32
    %c0_i32_0 = arith.constant 0 : i32
    %c0_i32_1 = arith.constant 0 : i32
    return %arg0, %c0_i32, %c0_i32_0 : i32, i32, i32
  }
}

module attributes {stable_mosaic.version = 11 : i64} {
  func.func @kernel(%arg0: i32, %arg1: memref<1x16x256xbf16, #tpu.memory_space<vmem>>, %arg2: memref<3x256xbf16, #tpu.memory_space<vmem>>, %arg3: memref<3x8x144xbf16, #tpu.memory_space<vmem>>, %arg4: memref<3x8x1xf32, #tpu.memory_space<vmem>>, %arg5: memref<16x16xbf16, #tpu.memory_space<vmem>>, %arg6: memref<16x8xbf16, #tpu.memory_space<vmem>>, %arg7: memref<16x8xbf16, #tpu.memory_space<vmem>>, %arg8: memref<16x8xbf16, #tpu.memory_space<vmem>>, %arg9: memref<16x1xf32, #tpu.memory_space<vmem>>, %arg10: memref<16x16xf32, #tpu.memory_space<vmem>>, %arg11: memref<16x1xf32, #tpu.memory_space<vmem>>, %arg12: memref<1x16x256xf32, #tpu.memory_space<vmem>>, %arg13: memref<16x512xbf16, #tpu.memory_space<vmem>>, %arg14: memref<144x256xbf16, #tpu.memory_space<vmem>>, %arg15: memref<16x256xf32, #tpu.memory_space<vmem>>) attributes {dimension_semantics = [#tpu.dimension_semantics<parallel>], iteration_bounds = array<i64: 2>, scalar_prefetch = 0 : i64, scratch_operands = 3 : i64, tpu.core_type = #tpu.core_type<tc>, window_params = [{transform_indices = @transform_0, window_bounds = array<i64: 1, 16, 256>}, {pipeline_mode = #tpu.pipeline_mode<synchronous>, transform_indices = @transform_1, window_bounds = array<i64: 3, 256>}, {pipeline_mode = #tpu.pipeline_mode<synchronous>, transform_indices = @transform_2, window_bounds = array<i64: 3, 8, 144>}, {pipeline_mode = #tpu.pipeline_mode<synchronous>, transform_indices = @transform_3, window_bounds = array<i64: 3, 8, 1>}, {pipeline_mode = #tpu.pipeline_mode<synchronous>, transform_indices = @transform_4, window_bounds = array<i64: 16, 16>}, {pipeline_mode = #tpu.pipeline_mode<synchronous>, transform_indices = @transform_5, window_bounds = array<i64: 16, 8>}, {pipeline_mode = #tpu.pipeline_mode<synchronous>, transform_indices = @transform_6, window_bounds = array<i64: 16, 8>}, {pipeline_mode = #tpu.pipeline_mode<synchronous>, transform_indices = @transform_7, window_bounds = array<i64: 16, 8>}, {pipeline_mode = #tpu.pipeline_mode<synchronous>, transform_indices = @transform_8, window_bounds = array<i64: 16, 1>}, {pipeline_mode = #tpu.pipeline_mode<synchronous>, transform_indices = @transform_9, window_bounds = array<i64: 16, 16>}, {pipeline_mode = #tpu.pipeline_mode<synchronous>, transform_indices = @transform_10, window_bounds = array<i64: 16, 1>}, {transform_indices = @transform_11, window_bounds = array<i64: 1, 16, 256>}]} {
    %cst = arith.constant 0.000000e+00 : bf16
    %0 = vector.broadcast %cst : bf16 to vector<16x128xbf16>
    %c0 = arith.constant 0 : index
    %c0_0 = arith.constant 0 : index
    %1 = vector.load %arg13[%c0, %c0_0] : memref<16x512xbf16, #tpu.memory_space<vmem>>, vector<16x128xbf16>
    tpu.vector_store %arg13[%c0, %c0_0], %0 {strides = array<i32>} : memref<16x512xbf16, #tpu.memory_space<vmem>>, vector<16x128xbf16>,
    %c0_1 = arith.constant 0 : index
    %c384 = arith.constant 384 : index
    %2 = vector.load %arg13[%c0_1, %c384] : memref<16x512xbf16, #tpu.memory_space<vmem>>, vector<16x128xbf16>
    tpu.vector_store %arg13[%c0_1, %c384], %0 {strides = array<i32>} : memref<16x512xbf16, #tpu.memory_space<vmem>>, vector<16x128xbf16>,
    %c0_2 = arith.constant 0 : index
    %c0_3 = arith.constant 0 : index
    %3 = vector.load %arg2[%c0_2, %c0_3] : memref<3x256xbf16, #tpu.memory_space<vmem>>, vector<1x256xbf16>
    %c1 = arith.constant 1 : index
    %c0_4 = arith.constant 0 : index
    %4 = vector.load %arg2[%c1, %c0_4] : memref<3x256xbf16, #tpu.memory_space<vmem>>, vector<1x256xbf16>
    %c0_5 = arith.constant 0 : index
    %c0_6 = arith.constant 0 : index
    %c0_7 = arith.constant 0 : index
    %5 = vector.load %arg1[%c0_5, %c0_6, %c0_7] : memref<1x16x256xbf16, #tpu.memory_space<vmem>>, vector<1x16x256xbf16>
    %6 = vector.shape_cast %5 : vector<1x16x256xbf16> to vector<16x256xbf16>
    %c0_8 = arith.constant 0 : index
    %c0_9 = arith.constant 0 : index
    %7 = vector.load %arg5[%c0_8, %c0_9] : memref<16x16xbf16, #tpu.memory_space<vmem>>, vector<16x16xbf16>
    %cst_10 = arith.constant dense<0.000000e+00> : vector<16x256xf32>
    %8 = tpu.matmul %7, %6, %cst_10 {dimension_numbers = #tpu.dot_dimension_numbers<[1], [0], [0], [1], [0, 0, 1, 1], [], []>} : vector<16x16xbf16>, vector<16x256xbf16>, vector<16x256xf32> -> vector<16x256xf32>
    %c0_11 = arith.constant 0 : index
    %c0_12 = arith.constant 0 : index
    %9 = vector.load %arg15[%c0_11, %c0_12] : memref<16x256xf32, #tpu.memory_space<vmem>>, vector<16x256xf32>
    tpu.vector_store %arg15[%c0_11, %c0_12], %8 {strides = array<i32>} : memref<16x256xf32, #tpu.memory_space<vmem>>, vector<16x256xf32>,
    %c0_13 = arith.constant 0 : index
    %c128 = arith.constant 128 : index
    %10 = vector.load %arg13[%c0_13, %c128] : memref<16x512xbf16, #tpu.memory_space<vmem>>, vector<16x256xbf16>
    tpu.vector_store %arg13[%c0_13, %c128], %6 {strides = array<i32>} : memref<16x512xbf16, #tpu.memory_space<vmem>>, vector<16x256xbf16>,
    %c0_14 = arith.constant 0 : index
    %c111 = arith.constant 111 : index
    %11 = vector.load %arg13[%c0_14, %c111] : memref<16x512xbf16, #tpu.memory_space<vmem>>, vector<16x256xbf16>
    %12 = vector.broadcast %3 : vector<1x256xbf16> to vector<16x256xbf16>
    %13 = arith.mulf %11, %12 : vector<16x256xbf16>
    %c0_15 = arith.constant 0 : index
    %c0_16 = arith.constant 0 : index
    %14 = vector.load %arg14[%c0_15, %c0_16] : memref<144x256xbf16, #tpu.memory_space<vmem>>, vector<16x256xbf16>
    tpu.vector_store %arg14[%c0_15, %c0_16], %13 {strides = array<i32>} : memref<144x256xbf16, #tpu.memory_space<vmem>>, vector<16x256xbf16>,
    %c0_17 = arith.constant 0 : index
    %c112 = arith.constant 112 : index
    %15 = vector.load %arg13[%c0_17, %c112] : memref<16x512xbf16, #tpu.memory_space<vmem>>, vector<16x256xbf16>
    %c16 = arith.constant 16 : index
    %c0_18 = arith.constant 0 : index
    %16 = vector.load %arg14[%c16, %c0_18] : memref<144x256xbf16, #tpu.memory_space<vmem>>, vector<16x256xbf16>
    tpu.vector_store %arg14[%c16, %c0_18], %15 {strides = array<i32>} : memref<144x256xbf16, #tpu.memory_space<vmem>>, vector<16x256xbf16>,
    %c0_19 = arith.constant 0 : index
    %c113 = arith.constant 113 : index
    %17 = vector.load %arg13[%c0_19, %c113] : memref<16x512xbf16, #tpu.memory_space<vmem>>, vector<16x256xbf16>
    %18 = vector.broadcast %4 : vector<1x256xbf16> to vector<16x256xbf16>
    %19 = arith.mulf %17, %18 : vector<16x256xbf16>
    %c32 = arith.constant 32 : index
    %c0_20 = arith.constant 0 : index
    %20 = vector.load %arg14[%c32, %c0_20] : memref<144x256xbf16, #tpu.memory_space<vmem>>, vector<16x256xbf16>
    tpu.vector_store %arg14[%c32, %c0_20], %19 {strides = array<i32>} : memref<144x256xbf16, #tpu.memory_space<vmem>>, vector<16x256xbf16>,
    %c0_21 = arith.constant 0 : index
    %c127 = arith.constant 127 : index
    %21 = vector.load %arg13[%c0_21, %c127] : memref<16x512xbf16, #tpu.memory_space<vmem>>, vector<16x256xbf16>
    %22 = vector.broadcast %3 : vector<1x256xbf16> to vector<16x256xbf16>
    %23 = arith.mulf %21, %22 : vector<16x256xbf16>
    %c48 = arith.constant 48 : index
    %c0_22 = arith.constant 0 : index
    %24 = vector.load %arg14[%c48, %c0_22] : memref<144x256xbf16, #tpu.memory_space<vmem>>, vector<16x256xbf16>
    tpu.vector_store %arg14[%c48, %c0_22], %23 {strides = array<i32>} : memref<144x256xbf16, #tpu.memory_space<vmem>>, vector<16x256xbf16>,
    %c0_23 = arith.constant 0 : index
    %c128_24 = arith.constant 128 : index
    %25 = vector.load %arg13[%c0_23, %c128_24] : memref<16x512xbf16, #tpu.memory_space<vmem>>, vector<16x256xbf16>
    %c64 = arith.constant 64 : index
    %c0_25 = arith.constant 0 : index
    %26 = vector.load %arg14[%c64, %c0_25] : memref<144x256xbf16, #tpu.memory_space<vmem>>, vector<16x256xbf16>
    tpu.vector_store %arg14[%c64, %c0_25], %25 {strides = array<i32>} : memref<144x256xbf16, #tpu.memory_space<vmem>>, vector<16x256xbf16>,
    %c0_26 = arith.constant 0 : index
    %c129 = arith.constant 129 : index
    %27 = vector.load %arg13[%c0_26, %c129] : memref<16x512xbf16, #tpu.memory_space<vmem>>, vector<16x256xbf16>
    %28 = vector.broadcast %4 : vector<1x256xbf16> to vector<16x256xbf16>
    %29 = arith.mulf %27, %28 : vector<16x256xbf16>
    %c80 = arith.constant 80 : index
    %c0_27 = arith.constant 0 : index
    %30 = vector.load %arg14[%c80, %c0_27] : memref<144x256xbf16, #tpu.memory_space<vmem>>, vector<16x256xbf16>
    tpu.vector_store %arg14[%c80, %c0_27], %29 {strides = array<i32>} : memref<144x256xbf16, #tpu.memory_space<vmem>>, vector<16x256xbf16>,
    %c0_28 = arith.constant 0 : index
    %c143 = arith.constant 143 : index
    %31 = vector.load %arg13[%c0_28, %c143] : memref<16x512xbf16, #tpu.memory_space<vmem>>, vector<16x256xbf16>
    %32 = vector.broadcast %3 : vector<1x256xbf16> to vector<16x256xbf16>
    %33 = arith.mulf %31, %32 : vector<16x256xbf16>
    %c96 = arith.constant 96 : index
    %c0_29 = arith.constant 0 : index
    %34 = vector.load %arg14[%c96, %c0_29] : memref<144x256xbf16, #tpu.memory_space<vmem>>, vector<16x256xbf16>
    tpu.vector_store %arg14[%c96, %c0_29], %33 {strides = array<i32>} : memref<144x256xbf16, #tpu.memory_space<vmem>>, vector<16x256xbf16>,
    %c0_30 = arith.constant 0 : index
    %c144 = arith.constant 144 : index
    %35 = vector.load %arg13[%c0_30, %c144] : memref<16x512xbf16, #tpu.memory_space<vmem>>, vector<16x256xbf16>
    %c112_31 = arith.constant 112 : index
    %c0_32 = arith.constant 0 : index
    %36 = vector.load %arg14[%c112_31, %c0_32] : memref<144x256xbf16, #tpu.memory_space<vmem>>, vector<16x256xbf16>
    tpu.vector_store %arg14[%c112_31, %c0_32], %35 {strides = array<i32>} : memref<144x256xbf16, #tpu.memory_space<vmem>>, vector<16x256xbf16>,
    %c0_33 = arith.constant 0 : index
    %c145 = arith.constant 145 : index
    %37 = vector.load %arg13[%c0_33, %c145] : memref<16x512xbf16, #tpu.memory_space<vmem>>, vector<16x256xbf16>
    %38 = vector.broadcast %4 : vector<1x256xbf16> to vector<16x256xbf16>
    %39 = arith.mulf %37, %38 : vector<16x256xbf16>
    %c128_34 = arith.constant 128 : index
    %c0_35 = arith.constant 0 : index
    %40 = vector.load %arg14[%c128_34, %c0_35] : memref<144x256xbf16, #tpu.memory_space<vmem>>, vector<16x256xbf16>
    tpu.vector_store %arg14[%c128_34, %c0_35], %39 {strides = array<i32>} : memref<144x256xbf16, #tpu.memory_space<vmem>>, vector<16x256xbf16>,
    %c0_36 = arith.constant 0 : index
    %c0_37 = arith.constant 0 : index
    %c0_38 = arith.constant 0 : index
    %41 = vector.load %arg3[%c0_36, %c0_37, %c0_38] : memref<3x8x144xbf16, #tpu.memory_space<vmem>>, vector<1x8x144xbf16>
    %42 = vector.shape_cast %41 : vector<1x8x144xbf16> to vector<8x144xbf16>
    %c0_39 = arith.constant 0 : index
    %c0_40 = arith.constant 0 : index
    %43 = vector.load %arg14[%c0_39, %c0_40] : memref<144x256xbf16, #tpu.memory_space<vmem>>, vector<144x256xbf16>
    %cst_41 = arith.constant dense<0.000000e+00> : vector<8x256xf32>
    %44 = tpu.matmul %42, %43, %cst_41 {dimension_numbers = #tpu.dot_dimension_numbers<[1], [0], [0], [1], [0, 0, 1, 1], [], []>} : vector<8x144xbf16>, vector<144x256xbf16>, vector<8x256xf32> -> vector<8x256xf32>
    %c0_42 = arith.constant 0 : index
    %c0_43 = arith.constant 0 : index
    %c0_44 = arith.constant 0 : index
    %45 = vector.load %arg4[%c0_42, %c0_43, %c0_44] : memref<3x8x1xf32, #tpu.memory_space<vmem>>, vector<1x8x1xf32>
    %46 = vector.shape_cast %45 : vector<1x8x1xf32> to vector<8x1xf32>
    %47 = vector.broadcast %46 : vector<8x1xf32> to vector<8x256xf32>
    %48 = arith.addf %44, %47 : vector<8x256xf32>
    %cst_45 = arith.constant 0.000000e+00 : f32
    %49 = vector.broadcast %cst_45 : f32 to vector<8x256xf32>
    %50 = arith.maximumf %48, %49 : vector<8x256xf32>
    %51 = arith.truncf %50 : vector<8x256xf32> to vector<8x256xbf16>
    %c0_46 = arith.constant 0 : index
    %c0_47 = arith.constant 0 : index
    %52 = vector.load %arg15[%c0_46, %c0_47] : memref<16x256xf32, #tpu.memory_space<vmem>>, vector<16x256xf32>
    %c0_48 = arith.constant 0 : index
    %c0_49 = arith.constant 0 : index
    %53 = vector.load %arg6[%c0_48, %c0_49] : memref<16x8xbf16, #tpu.memory_space<vmem>>, vector<16x8xbf16>
    %cst_50 = arith.constant dense<0.000000e+00> : vector<16x256xf32>
    %54 = tpu.matmul %53, %51, %cst_50 {dimension_numbers = #tpu.dot_dimension_numbers<[1], [0], [0], [1], [0, 0, 1, 1], [], []>} : vector<16x8xbf16>, vector<8x256xbf16>, vector<16x256xf32> -> vector<16x256xf32>
    %55 = arith.addf %52, %54 : vector<16x256xf32>
    %c0_51 = arith.constant 0 : index
    %c0_52 = arith.constant 0 : index
    %56 = vector.load %arg15[%c0_51, %c0_52] : memref<16x256xf32, #tpu.memory_space<vmem>>, vector<16x256xf32>
    tpu.vector_store %arg15[%c0_51, %c0_52], %55 {strides = array<i32>} : memref<16x256xf32, #tpu.memory_space<vmem>>, vector<16x256xf32>,
    %c0_53 = arith.constant 0 : index
    %c128_54 = arith.constant 128 : index
    %57 = vector.load %arg13[%c0_53, %c128_54] : memref<16x512xbf16, #tpu.memory_space<vmem>>, vector<8x256xbf16>
    tpu.vector_store %arg13[%c0_53, %c128_54], %51 {strides = array<i32>} : memref<16x512xbf16, #tpu.memory_space<vmem>>, vector<8x256xbf16>,
    %c0_55 = arith.constant 0 : index
    %c111_56 = arith.constant 111 : index
    %58 = vector.load %arg13[%c0_55, %c111_56] : memref<16x512xbf16, #tpu.memory_space<vmem>>, vector<8x256xbf16>
    %59 = vector.broadcast %3 : vector<1x256xbf16> to vector<8x256xbf16>
    %60 = arith.mulf %58, %59 : vector<8x256xbf16>
    %c0_57 = arith.constant 0 : index
    %c0_58 = arith.constant 0 : index
    %61 = vector.load %arg14[%c0_57, %c0_58] : memref<144x256xbf16, #tpu.memory_space<vmem>>, vector<8x256xbf16>
    tpu.vector_store %arg14[%c0_57, %c0_58], %60 {strides = array<i32>} : memref<144x256xbf16, #tpu.memory_space<vmem>>, vector<8x256xbf16>,
    %c0_59 = arith.constant 0 : index
    %c112_60 = arith.constant 112 : index
    %62 = vector.load %arg13[%c0_59, %c112_60] : memref<16x512xbf16, #tpu.memory_space<vmem>>, vector<8x256xbf16>
    %c16_61 = arith.constant 16 : index
    %c0_62 = arith.constant 0 : index
    %63 = vector.load %arg14[%c16_61, %c0_62] : memref<144x256xbf16, #tpu.memory_space<vmem>>, vector<8x256xbf16>
    tpu.vector_store %arg14[%c16_61, %c0_62], %62 {strides = array<i32>} : memref<144x256xbf16, #tpu.memory_space<vmem>>, vector<8x256xbf16>,
    %c0_63 = arith.constant 0 : index
    %c113_64 = arith.constant 113 : index
    %64 = vector.load %arg13[%c0_63, %c113_64] : memref<16x512xbf16, #tpu.memory_space<vmem>>, vector<8x256xbf16>
    %65 = vector.broadcast %4 : vector<1x256xbf16> to vector<8x256xbf16>
    %66 = arith.mulf %64, %65 : vector<8x256xbf16>
    %c32_65 = arith.constant 32 : index
    %c0_66 = arith.constant 0 : index
    %67 = vector.load %arg14[%c32_65, %c0_66] : memref<144x256xbf16, #tpu.memory_space<vmem>>, vector<8x256xbf16>
    tpu.vector_store %arg14[%c32_65, %c0_66], %66 {strides = array<i32>} : memref<144x256xbf16, #tpu.memory_space<vmem>>, vector<8x256xbf16>,
    %c0_67 = arith.constant 0 : index
    %c127_68 = arith.constant 127 : index
    %68 = vector.load %arg13[%c0_67, %c127_68] : memref<16x512xbf16, #tpu.memory_space<vmem>>, vector<8x256xbf16>
    %69 = vector.broadcast %3 : vector<1x256xbf16> to vector<8x256xbf16>
    %70 = arith.mulf %68, %69 : vector<8x256xbf16>
    %c48_69 = arith.constant 48 : index
    %c0_70 = arith.constant 0 : index
    %71 = vector.load %arg14[%c48_69, %c0_70] : memref<144x256xbf16, #tpu.memory_space<vmem>>, vector<8x256xbf16>
    tpu.vector_store %arg14[%c48_69, %c0_70], %70 {strides = array<i32>} : memref<144x256xbf16, #tpu.memory_space<vmem>>, vector<8x256xbf16>,
    %c0_71 = arith.constant 0 : index
    %c128_72 = arith.constant 128 : index
    %72 = vector.load %arg13[%c0_71, %c128_72] : memref<16x512xbf16, #tpu.memory_space<vmem>>, vector<8x256xbf16>
    %c64_73 = arith.constant 64 : index
    %c0_74 = arith.constant 0 : index
    %73 = vector.load %arg14[%c64_73, %c0_74] : memref<144x256xbf16, #tpu.memory_space<vmem>>, vector<8x256xbf16>
    tpu.vector_store %arg14[%c64_73, %c0_74], %72 {strides = array<i32>} : memref<144x256xbf16, #tpu.memory_space<vmem>>, vector<8x256xbf16>,
    %c0_75 = arith.constant 0 : index
    %c129_76 = arith.constant 129 : index
    %74 = vector.load %arg13[%c0_75, %c129_76] : memref<16x512xbf16, #tpu.memory_space<vmem>>, vector<8x256xbf16>
    %75 = vector.broadcast %4 : vector<1x256xbf16> to vector<8x256xbf16>
    %76 = arith.mulf %74, %75 : vector<8x256xbf16>
    %c80_77 = arith.constant 80 : index
    %c0_78 = arith.constant 0 : index
    %77 = vector.load %arg14[%c80_77, %c0_78] : memref<144x256xbf16, #tpu.memory_space<vmem>>, vector<8x256xbf16>
    tpu.vector_store %arg14[%c80_77, %c0_78], %76 {strides = array<i32>} : memref<144x256xbf16, #tpu.memory_space<vmem>>, vector<8x256xbf16>,
    %c0_79 = arith.constant 0 : index
    %c143_80 = arith.constant 143 : index
    %78 = vector.load %arg13[%c0_79, %c143_80] : memref<16x512xbf16, #tpu.memory_space<vmem>>, vector<8x256xbf16>
    %79 = vector.broadcast %3 : vector<1x256xbf16> to vector<8x256xbf16>
    %80 = arith.mulf %78, %79 : vector<8x256xbf16>
    %c96_81 = arith.constant 96 : index
    %c0_82 = arith.constant 0 : index
    %81 = vector.load %arg14[%c96_81, %c0_82] : memref<144x256xbf16, #tpu.memory_space<vmem>>, vector<8x256xbf16>
    tpu.vector_store %arg14[%c96_81, %c0_82], %80 {strides = array<i32>} : memref<144x256xbf16, #tpu.memory_space<vmem>>, vector<8x256xbf16>,
    %c0_83 = arith.constant 0 : index
    %c144_84 = arith.constant 144 : index
    %82 = vector.load %arg13[%c0_83, %c144_84] : memref<16x512xbf16, #tpu.memory_space<vmem>>, vector<8x256xbf16>
    %c112_85 = arith.constant 112 : index
    %c0_86 = arith.constant 0 : index
    %83 = vector.load %arg14[%c112_85, %c0_86] : memref<144x256xbf16, #tpu.memory_space<vmem>>, vector<8x256xbf16>
    tpu.vector_store %arg14[%c112_85, %c0_86], %82 {strides = array<i32>} : memref<144x256xbf16, #tpu.memory_space<vmem>>, vector<8x256xbf16>,
    %c0_87 = arith.constant 0 : index
    %c145_88 = arith.constant 145 : index
    %84 = vector.load %arg13[%c0_87, %c145_88] : memref<16x512xbf16, #tpu.memory_space<vmem>>, vector<8x256xbf16>
    %85 = vector.broadcast %4 : vector<1x256xbf16> to vector<8x256xbf16>
    %86 = arith.mulf %84, %85 : vector<8x256xbf16>
    %c128_89 = arith.constant 128 : index
    %c0_90 = arith.constant 0 : index
    %87 = vector.load %arg14[%c128_89, %c0_90] : memref<144x256xbf16, #tpu.memory_space<vmem>>, vector<8x256xbf16>
    tpu.vector_store %arg14[%c128_89, %c0_90], %86 {strides = array<i32>} : memref<144x256xbf16, #tpu.memory_space<vmem>>, vector<8x256xbf16>,
    %c1_91 = arith.constant 1 : index
    %c0_92 = arith.constant 0 : index
    %c0_93 = arith.constant 0 : index
    %88 = vector.load %arg3[%c1_91, %c0_92, %c0_93] : memref<3x8x144xbf16, #tpu.memory_space<vmem>>, vector<1x8x144xbf16>
    %89 = vector.shape_cast %88 : vector<1x8x144xbf16> to vector<8x144xbf16>
    %c0_94 = arith.constant 0 : index
    %c0_95 = arith.constant 0 : index
    %90 = vector.load %arg14[%c0_94, %c0_95] : memref<144x256xbf16, #tpu.memory_space<vmem>>, vector<144x256xbf16>
    %cst_96 = arith.constant dense<0.000000e+00> : vector<8x256xf32>
    %91 = tpu.matmul %89, %90, %cst_96 {dimension_numbers = #tpu.dot_dimension_numbers<[1], [0], [0], [1], [0, 0, 1, 1], [], []>} : vector<8x144xbf16>, vector<144x256xbf16>, vector<8x256xf32> -> vector<8x256xf32>
    %c1_97 = arith.constant 1 : index
    %c0_98 = arith.constant 0 : index
    %c0_99 = arith.constant 0 : index
    %92 = vector.load %arg4[%c1_97, %c0_98, %c0_99] : memref<3x8x1xf32, #tpu.memory_space<vmem>>, vector<1x8x1xf32>
    %93 = vector.shape_cast %92 : vector<1x8x1xf32> to vector<8x1xf32>
    %94 = vector.broadcast %93 : vector<8x1xf32> to vector<8x256xf32>
    %95 = arith.addf %91, %94 : vector<8x256xf32>
    %cst_100 = arith.constant 0.000000e+00 : f32
    %96 = vector.broadcast %cst_100 : f32 to vector<8x256xf32>
    %97 = arith.maximumf %95, %96 : vector<8x256xf32>
    %98 = arith.truncf %97 : vector<8x256xf32> to vector<8x256xbf16>
    %c0_101 = arith.constant 0 : index
    %c0_102 = arith.constant 0 : index
    %99 = vector.load %arg15[%c0_101, %c0_102] : memref<16x256xf32, #tpu.memory_space<vmem>>, vector<16x256xf32>
    %c0_103 = arith.constant 0 : index
    %c0_104 = arith.constant 0 : index
    %100 = vector.load %arg7[%c0_103, %c0_104] : memref<16x8xbf16, #tpu.memory_space<vmem>>, vector<16x8xbf16>
    %cst_105 = arith.constant dense<0.000000e+00> : vector<16x256xf32>
    %101 = tpu.matmul %100, %98, %cst_105 {dimension_numbers = #tpu.dot_dimension_numbers<[1], [0], [0], [1], [0, 0, 1, 1], [], []>} : vector<16x8xbf16>, vector<8x256xbf16>, vector<16x256xf32> -> vector<16x256xf32>
    %102 = arith.addf %99, %101 : vector<16x256xf32>
    %c0_106 = arith.constant 0 : index
    %c0_107 = arith.constant 0 : index
    %103 = vector.load %arg15[%c0_106, %c0_107] : memref<16x256xf32, #tpu.memory_space<vmem>>, vector<16x256xf32>
    tpu.vector_store %arg15[%c0_106, %c0_107], %102 {strides = array<i32>} : memref<16x256xf32, #tpu.memory_space<vmem>>, vector<16x256xf32>,
    %c0_108 = arith.constant 0 : index
    %c128_109 = arith.constant 128 : index
    %104 = vector.load %arg13[%c0_108, %c128_109] : memref<16x512xbf16, #tpu.memory_space<vmem>>, vector<8x256xbf16>
    tpu.vector_store %arg13[%c0_108, %c128_109], %98 {strides = array<i32>} : memref<16x512xbf16, #tpu.memory_space<vmem>>, vector<8x256xbf16>,
    %c0_110 = arith.constant 0 : index
    %c111_111 = arith.constant 111 : index
    %105 = vector.load %arg13[%c0_110, %c111_111] : memref<16x512xbf16, #tpu.memory_space<vmem>>, vector<8x256xbf16>
    %106 = vector.broadcast %3 : vector<1x256xbf16> to vector<8x256xbf16>
    %107 = arith.mulf %105, %106 : vector<8x256xbf16>
    %c0_112 = arith.constant 0 : index
    %c0_113 = arith.constant 0 : index
    %108 = vector.load %arg14[%c0_112, %c0_113] : memref<144x256xbf16, #tpu.memory_space<vmem>>, vector<8x256xbf16>
    tpu.vector_store %arg14[%c0_112, %c0_113], %107 {strides = array<i32>} : memref<144x256xbf16, #tpu.memory_space<vmem>>, vector<8x256xbf16>,
    %c0_114 = arith.constant 0 : index
    %c112_115 = arith.constant 112 : index
    %109 = vector.load %arg13[%c0_114, %c112_115] : memref<16x512xbf16, #tpu.memory_space<vmem>>, vector<8x256xbf16>
    %c16_116 = arith.constant 16 : index
    %c0_117 = arith.constant 0 : index
    %110 = vector.load %arg14[%c16_116, %c0_117] : memref<144x256xbf16, #tpu.memory_space<vmem>>, vector<8x256xbf16>
    tpu.vector_store %arg14[%c16_116, %c0_117], %109 {strides = array<i32>} : memref<144x256xbf16, #tpu.memory_space<vmem>>, vector<8x256xbf16>,
    %c0_118 = arith.constant 0 : index
    %c113_119 = arith.constant 113 : index
    %111 = vector.load %arg13[%c0_118, %c113_119] : memref<16x512xbf16, #tpu.memory_space<vmem>>, vector<8x256xbf16>
    %112 = vector.broadcast %4 : vector<1x256xbf16> to vector<8x256xbf16>
    %113 = arith.mulf %111, %112 : vector<8x256xbf16>
    %c32_120 = arith.constant 32 : index
    %c0_121 = arith.constant 0 : index
    %114 = vector.load %arg14[%c32_120, %c0_121] : memref<144x256xbf16, #tpu.memory_space<vmem>>, vector<8x256xbf16>
    tpu.vector_store %arg14[%c32_120, %c0_121], %113 {strides = array<i32>} : memref<144x256xbf16, #tpu.memory_space<vmem>>, vector<8x256xbf16>,
    %c0_122 = arith.constant 0 : index
    %c127_123 = arith.constant 127 : index
    %115 = vector.load %arg13[%c0_122, %c127_123] : memref<16x512xbf16, #tpu.memory_space<vmem>>, vector<8x256xbf16>
    %116 = vector.broadcast %3 : vector<1x256xbf16> to vector<8x256xbf16>
    %117 = arith.mulf %115, %116 : vector<8x256xbf16>
    %c48_124 = arith.constant 48 : index
    %c0_125 = arith.constant 0 : index
    %118 = vector.load %arg14[%c48_124, %c0_125] : memref<144x256xbf16, #tpu.memory_space<vmem>>, vector<8x256xbf16>
    tpu.vector_store %arg14[%c48_124, %c0_125], %117 {strides = array<i32>} : memref<144x256xbf16, #tpu.memory_space<vmem>>, vector<8x256xbf16>,
    %c0_126 = arith.constant 0 : index
    %c128_127 = arith.constant 128 : index
    %119 = vector.load %arg13[%c0_126, %c128_127] : memref<16x512xbf16, #tpu.memory_space<vmem>>, vector<8x256xbf16>
    %c64_128 = arith.constant 64 : index
    %c0_129 = arith.constant 0 : index
    %120 = vector.load %arg14[%c64_128, %c0_129] : memref<144x256xbf16, #tpu.memory_space<vmem>>, vector<8x256xbf16>
    tpu.vector_store %arg14[%c64_128, %c0_129], %119 {strides = array<i32>} : memref<144x256xbf16, #tpu.memory_space<vmem>>, vector<8x256xbf16>,
    %c0_130 = arith.constant 0 : index
    %c129_131 = arith.constant 129 : index
    %121 = vector.load %arg13[%c0_130, %c129_131] : memref<16x512xbf16, #tpu.memory_space<vmem>>, vector<8x256xbf16>
    %122 = vector.broadcast %4 : vector<1x256xbf16> to vector<8x256xbf16>
    %123 = arith.mulf %121, %122 : vector<8x256xbf16>
    %c80_132 = arith.constant 80 : index
    %c0_133 = arith.constant 0 : index
    %124 = vector.load %arg14[%c80_132, %c0_133] : memref<144x256xbf16, #tpu.memory_space<vmem>>, vector<8x256xbf16>
    tpu.vector_store %arg14[%c80_132, %c0_133], %123 {strides = array<i32>} : memref<144x256xbf16, #tpu.memory_space<vmem>>, vector<8x256xbf16>,
    %c0_134 = arith.constant 0 : index
    %c143_135 = arith.constant 143 : index
    %125 = vector.load %arg13[%c0_134, %c143_135] : memref<16x512xbf16, #tpu.memory_space<vmem>>, vector<8x256xbf16>
    %126 = vector.broadcast %3 : vector<1x256xbf16> to vector<8x256xbf16>
    %127 = arith.mulf %125, %126 : vector<8x256xbf16>
    %c96_136 = arith.constant 96 : index
    %c0_137 = arith.constant 0 : index
    %128 = vector.load %arg14[%c96_136, %c0_137] : memref<144x256xbf16, #tpu.memory_space<vmem>>, vector<8x256xbf16>
    tpu.vector_store %arg14[%c96_136, %c0_137], %127 {strides = array<i32>} : memref<144x256xbf16, #tpu.memory_space<vmem>>, vector<8x256xbf16>,
    %c0_138 = arith.constant 0 : index
    %c144_139 = arith.constant 144 : index
    %129 = vector.load %arg13[%c0_138, %c144_139] : memref<16x512xbf16, #tpu.memory_space<vmem>>, vector<8x256xbf16>
    %c112_140 = arith.constant 112 : index
    %c0_141 = arith.constant 0 : index
    %130 = vector.load %arg14[%c112_140, %c0_141] : memref<144x256xbf16, #tpu.memory_space<vmem>>, vector<8x256xbf16>
    tpu.vector_store %arg14[%c112_140, %c0_141], %129 {strides = array<i32>} : memref<144x256xbf16, #tpu.memory_space<vmem>>, vector<8x256xbf16>,
    %c0_142 = arith.constant 0 : index
    %c145_143 = arith.constant 145 : index
    %131 = vector.load %arg13[%c0_142, %c145_143] : memref<16x512xbf16, #tpu.memory_space<vmem>>, vector<8x256xbf16>
    %132 = vector.broadcast %4 : vector<1x256xbf16> to vector<8x256xbf16>
    %133 = arith.mulf %131, %132 : vector<8x256xbf16>
    %c128_144 = arith.constant 128 : index
    %c0_145 = arith.constant 0 : index
    %134 = vector.load %arg14[%c128_144, %c0_145] : memref<144x256xbf16, #tpu.memory_space<vmem>>, vector<8x256xbf16>
    tpu.vector_store %arg14[%c128_144, %c0_145], %133 {strides = array<i32>} : memref<144x256xbf16, #tpu.memory_space<vmem>>, vector<8x256xbf16>,
    %c2 = arith.constant 2 : index
    %c0_146 = arith.constant 0 : index
    %c0_147 = arith.constant 0 : index
    %135 = vector.load %arg3[%c2, %c0_146, %c0_147] : memref<3x8x144xbf16, #tpu.memory_space<vmem>>, vector<1x8x144xbf16>
    %136 = vector.shape_cast %135 : vector<1x8x144xbf16> to vector<8x144xbf16>
    %c0_148 = arith.constant 0 : index
    %c0_149 = arith.constant 0 : index
    %137 = vector.load %arg14[%c0_148, %c0_149] : memref<144x256xbf16, #tpu.memory_space<vmem>>, vector<144x256xbf16>
    %cst_150 = arith.constant dense<0.000000e+00> : vector<8x256xf32>
    %138 = tpu.matmul %136, %137, %cst_150 {dimension_numbers = #tpu.dot_dimension_numbers<[1], [0], [0], [1], [0, 0, 1, 1], [], []>} : vector<8x144xbf16>, vector<144x256xbf16>, vector<8x256xf32> -> vector<8x256xf32>
    %c2_151 = arith.constant 2 : index
    %c0_152 = arith.constant 0 : index
    %c0_153 = arith.constant 0 : index
    %139 = vector.load %arg4[%c2_151, %c0_152, %c0_153] : memref<3x8x1xf32, #tpu.memory_space<vmem>>, vector<1x8x1xf32>
    %140 = vector.shape_cast %139 : vector<1x8x1xf32> to vector<8x1xf32>
    %141 = vector.broadcast %140 : vector<8x1xf32> to vector<8x256xf32>
    %142 = arith.addf %138, %141 : vector<8x256xf32>
    %cst_154 = arith.constant 0.000000e+00 : f32
    %143 = vector.broadcast %cst_154 : f32 to vector<8x256xf32>
    %144 = arith.maximumf %142, %143 : vector<8x256xf32>
    %145 = arith.truncf %144 : vector<8x256xf32> to vector<8x256xbf16>
    %c0_155 = arith.constant 0 : index
    %c0_156 = arith.constant 0 : index
    %146 = vector.load %arg15[%c0_155, %c0_156] : memref<16x256xf32, #tpu.memory_space<vmem>>, vector<16x256xf32>
    %c0_157 = arith.constant 0 : index
    %c0_158 = arith.constant 0 : index
    %147 = vector.load %arg8[%c0_157, %c0_158] : memref<16x8xbf16, #tpu.memory_space<vmem>>, vector<16x8xbf16>
    %cst_159 = arith.constant dense<0.000000e+00> : vector<16x256xf32>
    %148 = tpu.matmul %147, %145, %cst_159 {dimension_numbers = #tpu.dot_dimension_numbers<[1], [0], [0], [1], [0, 0, 1, 1], [], []>} : vector<16x8xbf16>, vector<8x256xbf16>, vector<16x256xf32> -> vector<16x256xf32>
    %149 = arith.addf %146, %148 : vector<16x256xf32>
    %c0_160 = arith.constant 0 : index
    %c0_161 = arith.constant 0 : index
    %150 = vector.load %arg15[%c0_160, %c0_161] : memref<16x256xf32, #tpu.memory_space<vmem>>, vector<16x256xf32>
    tpu.vector_store %arg15[%c0_160, %c0_161], %149 {strides = array<i32>} : memref<16x256xf32, #tpu.memory_space<vmem>>, vector<16x256xf32>,
    %c0_162 = arith.constant 0 : index
    %c0_163 = arith.constant 0 : index
    %151 = vector.load %arg15[%c0_162, %c0_163] : memref<16x256xf32, #tpu.memory_space<vmem>>, vector<16x256xf32>
    %c0_164 = arith.constant 0 : index
    %c0_165 = arith.constant 0 : index
    %152 = vector.load %arg9[%c0_164, %c0_165] : memref<16x1xf32, #tpu.memory_space<vmem>>, vector<16x1xf32>
    %153 = vector.broadcast %152 : vector<16x1xf32> to vector<16x256xf32>
    %154 = arith.addf %151, %153 : vector<16x256xf32>
    %cst_166 = arith.constant 0.000000e+00 : f32
    %155 = vector.broadcast %cst_166 : f32 to vector<16x256xf32>
    %156 = arith.maximumf %154, %155 : vector<16x256xf32>
    %cst_167 = arith.constant dense<0.000000e+00> : vector<16xf32>
    %157 = vector.multi_reduction <add>, %156, %cst_167 [1] : vector<16x256xf32> to vector<16xf32>
    %158 = vector.shape_cast %157 : vector<16xf32> to vector<16x1xf32>
    %cst_168 = arith.constant 2.560000e+02 : f32
    %159 = vector.broadcast %cst_168 : f32 to vector<16x1xf32>
    %160 = arith.divf %158, %159 : vector<16x1xf32>
    %c0_169 = arith.constant 0 : index
    %c0_170 = arith.constant 0 : index
    %161 = vector.load %arg10[%c0_169, %c0_170] : memref<16x16xf32, #tpu.memory_space<vmem>>, vector<16x16xf32>
    %cst_171 = arith.constant dense<0.000000e+00> : vector<16x1xf32>
    %162 = tpu.matmul %161, %160, %cst_171 {dimension_numbers = #tpu.dot_dimension_numbers<[1], [0], [0], [1], [0, 0, 1, 1], [], []>} : vector<16x16xf32>, vector<16x1xf32>, vector<16x1xf32> -> vector<16x1xf32>
    %c0_172 = arith.constant 0 : index
    %c0_173 = arith.constant 0 : index
    %163 = vector.load %arg11[%c0_172, %c0_173] : memref<16x1xf32, #tpu.memory_space<vmem>>, vector<16x1xf32>
    %164 = arith.addf %162, %163 : vector<16x1xf32>
    %165 = arith.negf %164 : vector<16x1xf32>
    %166 = math.exp %165 : vector<16x1xf32>
    %cst_174 = arith.constant 1.000000e+00 : f32
    %167 = vector.broadcast %cst_174 : f32 to vector<16x1xf32>
    %168 = arith.addf %167, %166 : vector<16x1xf32>
    %169 = arith.divf %167, %168 : vector<16x1xf32>
    %170 = vector.broadcast %169 : vector<16x1xf32> to vector<16x256xf32>
    %171 = arith.mulf %156, %170 : vector<16x256xf32>
    %172 = vector.shape_cast %171 : vector<16x256xf32> to vector<1x16x256xf32>
    %c0_175 = arith.constant 0 : index
    %c0_176 = arith.constant 0 : index
    %c0_177 = arith.constant 0 : index
    %173 = vector.load %arg12[%c0_175, %c0_176, %c0_177] : memref<1x16x256xf32, #tpu.memory_space<vmem>>, vector<1x16x256xf32>
    tpu.vector_store %arg12[%c0_175, %c0_176, %c0_177], %172 {strides = array<i32>} : memref<1x16x256xf32, #tpu.memory_space<vmem>>, vector<1x16x256xf32>,
    return
  }
  func.func @transform_0(%arg0: i32) -> (i32, i32, i32) {
    %c0_i32 = arith.constant 0 : i32
    %c0_i32_0 = arith.constant 0 : i32
    %c0_i32_1 = arith.constant 0 : i32
    return %arg0, %c0_i32, %c0_i32_0 : i32, i32, i32
  }
  func.func @transform_1(%arg0: i32) -> (i32, i32) {
    %c0_i32 = arith.constant 0 : i32
    %c0_i32_0 = arith.constant 0 : i32
    %c0_i32_1 = arith.constant 0 : i32
    return %c0_i32, %c0_i32_0 : i32, i32
  }
  func.func @transform_2(%arg0: i32) -> (i32, i32, i32) {
    %c0_i32 = arith.constant 0 : i32
    %c0_i32_0 = arith.constant 0 : i32
    %c0_i32_1 = arith.constant 0 : i32
    %c0_i32_2 = arith.constant 0 : i32
    return %c0_i32, %c0_i32_0, %c0_i32_1 : i32, i32, i32
  }
  func.func @transform_3(%arg0: i32) -> (i32, i32, i32) {
    %c0_i32 = arith.constant 0 : i32
    %c0_i32_0 = arith.constant 0 : i32
    %c0_i32_1 = arith.constant 0 : i32
    %c0_i32_2 = arith.constant 0 : i32
    return %c0_i32, %c0_i32_0, %c0_i32_1 : i32, i32, i32
  }
  func.func @transform_4(%arg0: i32) -> (i32, i32) {
    %c0_i32 = arith.constant 0 : i32
    %c0_i32_0 = arith.constant 0 : i32
    %c0_i32_1 = arith.constant 0 : i32
    return %c0_i32, %c0_i32_0 : i32, i32
  }
  func.func @transform_5(%arg0: i32) -> (i32, i32) {
    %c0_i32 = arith.constant 0 : i32
    %c0_i32_0 = arith.constant 0 : i32
    %c0_i32_1 = arith.constant 0 : i32
    return %c0_i32, %c0_i32_0 : i32, i32
  }
  func.func @transform_6(%arg0: i32) -> (i32, i32) {
    %c0_i32 = arith.constant 0 : i32
    %c0_i32_0 = arith.constant 0 : i32
    %c0_i32_1 = arith.constant 0 : i32
    return %c0_i32, %c0_i32_0 : i32, i32
  }
  func.func @transform_7(%arg0: i32) -> (i32, i32) {
    %c0_i32 = arith.constant 0 : i32
    %c0_i32_0 = arith.constant 0 : i32
    %c0_i32_1 = arith.constant 0 : i32
    return %c0_i32, %c0_i32_0 : i32, i32
  }
  func.func @transform_8(%arg0: i32) -> (i32, i32) {
    %c0_i32 = arith.constant 0 : i32
    %c0_i32_0 = arith.constant 0 : i32
    %c0_i32_1 = arith.constant 0 : i32
    return %c0_i32, %c0_i32_0 : i32, i32
  }
  func.func @transform_9(%arg0: i32) -> (i32, i32) {
    %c0_i32 = arith.constant 0 : i32
    %c0_i32_0 = arith.constant 0 : i32
    %c0_i32_1 = arith.constant 0 : i32
    return %c0_i32, %c0_i32_0 : i32, i32
  }
  func.func @transform_10(%arg0: i32) -> (i32, i32) {
    %c0_i32 = arith.constant 0 : i32
    %c0_i32_0 = arith.constant 0 : i32
    %c0_i32_1 = arith.constant 0 : i32
    return %c0_i32, %c0_i32_0 : i32, i32
  }
  func.func @transform_11(%arg0: i32) -> (i32, i32, i32) {
    %c0_i32 = arith.constant 0 : i32
    %c0_i32_0 = arith.constant 0 : i32
    %c0_i32_1 = arith.constant 0 : i32
    return %arg0, %c0_i32, %c0_i32_0 : i32, i32, i32
  }
}

</mosaic_0001>

<llo_original>
// kernel: tpu_custom_call.1
$region0: #{tpu_custom_call.1}
  #allocation0 [shape = 'u32[]', space=smem, size = 0x4, offset = 0x4, fixed_abs, tag = 'smem constant byte address 0x4 - core index']
  #allocation1 [shape = 'u32[144,128]{1,0:T(1,128)}', space=vmem, size = 0x12000, scoped, tag = 'internal scratch']
  #allocation2 [shape = 'bf16[16,512]{1,0:T(16,128)(2,1)}', space=vmem, size = 0x4000, scoped, tag = 'scratch operand']
  #allocation3 [shape = 'bf16[144,256]{1,0:T(16,128)(2,1)}', space=vmem, size = 0x12000, scoped, tag = 'scratch operand']
  #allocation4 [shape = 'f32[16,256]{1,0:T(8,128)}', space=vmem, size = 0x4000, scoped, tag = 'scratch operand']
  %s0 = inlined_call_operand.vmem [shape: bf16[2,16,256], index: 0, kind: input, shape index: {}]
  %s1 = inlined_call_operand.vmem [shape: bf16[3,256], index: 1, kind: input, shape index: {}]
  %s2 = inlined_call_operand.vmem [shape: bf16[3,8,144], index: 2, kind: input, shape index: {}]
  %s3 = inlined_call_operand.vmem [shape: f32[3,8,1], index: 3, kind: input, shape index: {}]
  %s4 = inlined_call_operand.vmem [shape: bf16[16,16], index: 4, kind: input, shape index: {}]
  %s5 = inlined_call_operand.vmem [shape: bf16[16,8], index: 5, kind: input, shape index: {}]
  %s6 = inlined_call_operand.vmem [shape: bf16[16,8], index: 6, kind: input, shape index: {}]
  %s7 = inlined_call_operand.vmem [shape: bf16[16,8], index: 7, kind: input, shape index: {}]
  %s8 = inlined_call_operand.vmem [shape: f32[16,1], index: 8, kind: input, shape index: {}]
  %s9 = inlined_call_operand.vmem [shape: f32[16,16], index: 9, kind: input, shape index: {}]
  %s10 = inlined_call_operand.vmem [shape: f32[16,1], index: 10, kind: input, shape index: {}]
  %s11 = inlined_call_operand.hbm [shape: f32[2,16,256], index: 11, kind: output, shape index: {}]
  %s12 = sld [smem:[#allocation0]]
  $region77: #{tpu_custom_call.1} parent=0
    _
  %s14 = ssub.s32 1, %s12
  %s15 = scalar_select 0, %s14, %s12
  $region1: #{tpu_custom_call.1} parent=0
    #allocation5 [shape = 'u8[32768]{0}', space=vmem, size = 0x8000, scoped, tag = 'output window, operand 0']
    #allocation6 [shape = 's32[2]{0}', space=sflag, size = 0x8, scoped, tag = 'scoped memory for tpu_custom_call.1']
    %16 = vsyncpa [#allocation6], 0
    %s17 = scalar_lea.sflag [#allocation6], 1
    %18 = vsyncpa %s17, 0
    loop: start=0, step=1, limit=4
    $region2: #{tpu_custom_call.1} parent=1 // loop_pre_header
      _
    $region3: #{tpu_custom_call.1} parent=1 // loop_header
      %s20 = sphi 0, %s24
      %p21 = scmp.ge.s32.totalorder %s20, 4
      %s30 = sphi 0, %s32
      %s33 = sphi 0, %s30
      %s34 = sphi 0, %s33
      %s50 = sphi 0, %s34
      %s54 = sphi 0, %s54
      %s56 = sphi 0, %s54
      %s57 = sphi 0, %s56
      %s71 = sphi 0, %s57
      %s75 = sphi 0, %s75
      %s77 = sphi 0, %s75
      %s78 = sphi 0, %s77
      %s92 = sphi 0, %s78
      %s96 = sphi 0, %s96
      %s98 = sphi 0, %s96
      %s99 = sphi 0, %s98
      %s113 = sphi 0, %s99
      %s117 = sphi 0, %s117
      %s119 = sphi 0, %s117
      %s120 = sphi 0, %s119
      %s134 = sphi 0, %s120
      %s138 = sphi 0, %s138
      %s140 = sphi 0, %s138
      %s141 = sphi 0, %s140
      %s155 = sphi 0, %s141
      %s159 = sphi 0, %s159
      %s161 = sphi 0, %s159
      %s162 = sphi 0, %s161
      %s176 = sphi 0, %s162
      %s180 = sphi 0, %s180
      %s182 = sphi 0, %s180
      %s183 = sphi 0, %s182
      %s197 = sphi 0, %s183
      %s201 = sphi 0, %s201
      %s203 = sphi 0, %s201
      %s204 = sphi 0, %s203
      %s218 = sphi 0, %s204
      %s222 = sphi 0, %s222
      %s224 = sphi 0, %s222
      %s225 = sphi 0, %s224
      %s239 = sphi 0, %s225
      %s243 = sphi 0, %s243
      %s245 = sphi 0, %s243
      %s246 = sphi 0, %s245
      %s260 = sphi 0, %s246
      %s266 = sphi 0, %s268
      %s269 = sphi 0, %s266
      %s270 = sphi 0, %s269
      %s286 = sphi 0, %s270
    $region4: #{tpu_custom_call.1} parent=1 // loop_header_branch
      %23 = sbr.rel (%p21) target = $region8
    $region5: #{tpu_custom_call.1} parent=1 // loop_body
      %s25 = ssub.s32 %s20, 1
      %s26 = ssub.s32 %s20, 2
      %s27 = sadd.s32 %s20, 1
      %s28 = ssub.s32 %s20, %s27
      %p29 = scmp.eq.s32.totalorder %s28, 0
      %s31 = sadd.s32 %s30, 1
      %s32 = scalar_select %p29, %s30, %s31
      %p35 = pneg %p29
      %p36 = scmp.eq.s32.totalorder %s20, 1
      %p37 = por %p35, %p36
      %p38 = scmp.ne.s32.totalorder %s30, %s33
      %p39 = scmp.eq.s32.totalorder %s20, 0
      %p40 = por %p38, %p39
      %p41 = scmp.ne.s32.totalorder %s30, %s33
      %p42 = scmp.eq.s32.totalorder %s25, 1
      %p43 = por %p41, %p42
      %p44 = scmp.ne.s32.totalorder %s33, %s34
      %p45 = scmp.eq.s32.totalorder %s25, 0
      %p46 = por %p44, %p45
      %p47 = scmp.ne.s32.totalorder %s33, %s34
      %p48 = scmp.eq.s32.totalorder %s26, 1
      %p49 = por %p47, %p48
      %p51 = scmp.ne.s32.totalorder %s34, %s50
      %p52 = scmp.eq.s32.totalorder %s26, 0
      %p53 = por %p51, %p52
      %s55 = sadd.s32 %s54, 1
      %p58 = scmp.eq.s32.totalorder %s20, 1
      %p59 = scmp.ne.s32.totalorder %s54, %s56
      %p60 = scmp.eq.s32.totalorder %s20, 0
      %p61 = por %p59, %p60
      %p62 = scmp.ne.s32.totalorder %s54, %s56
      %p63 = scmp.eq.s32.totalorder %s25, 1
      %p64 = por %p62, %p63
      %p65 = scmp.ne.s32.totalorder %s56, %s57
      %p66 = scmp.eq.s32.totalorder %s25, 0
      %p67 = por %p65, %p66
      %p68 = scmp.ne.s32.totalorder %s56, %s57
      %p69 = scmp.eq.s32.totalorder %s26, 1
      %p70 = por %p68, %p69
      %p72 = scmp.ne.s32.totalorder %s57, %s71
      %p73 = scmp.eq.s32.totalorder %s26, 0
      %p74 = por %p72, %p73
      %s76 = sadd.s32 %s75, 1
      %p79 = scmp.eq.s32.totalorder %s20, 1
      %p80 = scmp.ne.s32.totalorder %s75, %s77
      %p81 = scmp.eq.s32.totalorder %s20, 0
      %p82 = por %p80, %p81
      %p83 = scmp.ne.s32.totalorder %s75, %s77
      %p84 = scmp.eq.s32.totalorder %s25, 1
      %p85 = por %p83, %p84
      %p86 = scmp.ne.s32.totalorder %s77, %s78
      %p87 = scmp.eq.s32.totalorder %s25, 0
      %p88 = por %p86, %p87
      %p89 = scmp.ne.s32.totalorder %s77, %s78
      %p90 = scmp.eq.s32.totalorder %s26, 1
      %p91 = por %p89, %p90
      %p93 = scmp.ne.s32.totalorder %s78, %s92
      %p94 = scmp.eq.s32.totalorder %s26, 0
      %p95 = por %p93, %p94
      %s97 = sadd.s32 %s96, 1
      %p100 = scmp.eq.s32.totalorder %s20, 1
      %p101 = scmp.ne.s32.totalorder %s96, %s98
      %p102 = scmp.eq.s32.totalorder %s20, 0
      %p103 = por %p101, %p102
      %p104 = scmp.ne.s32.totalorder %s96, %s98
      %p105 = scmp.eq.s32.totalorder %s25, 1
      %p106 = por %p104, %p105
      %p107 = scmp.ne.s32.totalorder %s98, %s99
      %p108 = scmp.eq.s32.totalorder %s25, 0
      %p109 = por %p107, %p108
      %p110 = scmp.ne.s32.totalorder %s98, %s99
      %p111 = scmp.eq.s32.totalorder %s26, 1
      %p112 = por %p110, %p111
      %p114 = scmp.ne.s32.totalorder %s99, %s113
      %p115 = scmp.eq.s32.totalorder %s26, 0
      %p116 = por %p114, %p115
      %s118 = sadd.s32 %s117, 1
      %p121 = scmp.eq.s32.totalorder %s20, 1
      %p122 = scmp.ne.s32.totalorder %s117, %s119
      %p123 = scmp.eq.s32.totalorder %s20, 0
      %p124 = por %p122, %p123
      %p125 = scmp.ne.s32.totalorder %s117, %s119
      %p126 = scmp.eq.s32.totalorder %s25, 1
      %p127 = por %p125, %p126
      %p128 = scmp.ne.s32.totalorder %s119, %s120
      %p129 = scmp.eq.s32.totalorder %s25, 0
      %p130 = por %p128, %p129
      %p131 = scmp.ne.s32.totalorder %s119, %s120
      %p132 = scmp.eq.s32.totalorder %s26, 1
      %p133 = por %p131, %p132
      %p135 = scmp.ne.s32.totalorder %s120, %s134
      %p136 = scmp.eq.s32.totalorder %s26, 0
      %p137 = por %p135, %p136
      %s139 = sadd.s32 %s138, 1
      %p142 = scmp.eq.s32.totalorder %s20, 1
      %p143 = scmp.ne.s32.totalorder %s138, %s140
      %p144 = scmp.eq.s32.totalorder %s20, 0
      %p145 = por %p143, %p144
      %p146 = scmp.ne.s32.totalorder %s138, %s140
      %p147 = scmp.eq.s32.totalorder %s25, 1
      %p148 = por %p146, %p147
      %p149 = scmp.ne.s32.totalorder %s140, %s141
      %p150 = scmp.eq.s32.totalorder %s25, 0
      %p151 = por %p149, %p150
      %p152 = scmp.ne.s32.totalorder %s140, %s141
      %p153 = scmp.eq.s32.totalorder %s26, 1
      %p154 = por %p152, %p153
      %p156 = scmp.ne.s32.totalorder %s141, %s155
      %p157 = scmp.eq.s32.totalorder %s26, 0
      %p158 = por %p156, %p157
      %s160 = sadd.s32 %s159, 1
      %p163 = scmp.eq.s32.totalorder %s20, 1
      %p164 = scmp.ne.s32.totalorder %s159, %s161
      %p165 = scmp.eq.s32.totalorder %s20, 0
      %p166 = por %p164, %p165
      %p167 = scmp.ne.s32.totalorder %s159, %s161
      %p168 = scmp.eq.s32.totalorder %s25, 1
      %p169 = por %p167, %p168
      %p170 = scmp.ne.s32.totalorder %s161, %s162
      %p171 = scmp.eq.s32.totalorder %s25, 0
      %p172 = por %p170, %p171
      %p173 = scmp.ne.s32.totalorder %s161, %s162
      %p174 = scmp.eq.s32.totalorder %s26, 1
      %p175 = por %p173, %p174
      %p177 = scmp.ne.s32.totalorder %s162, %s176
      %p178 = scmp.eq.s32.totalorder %s26, 0
      %p179 = por %p177, %p178
      %s181 = sadd.s32 %s180, 1
      %p184 = scmp.eq.s32.totalorder %s20, 1
      %p185 = scmp.ne.s32.totalorder %s180, %s182
      %p186 = scmp.eq.s32.totalorder %s20, 0
      %p187 = por %p185, %p186
      %p188 = scmp.ne.s32.totalorder %s180, %s182
      %p189 = scmp.eq.s32.totalorder %s25, 1
      %p190 = por %p188, %p189
      %p191 = scmp.ne.s32.totalorder %s182, %s183
      %p192 = scmp.eq.s32.totalorder %s25, 0
      %p193 = por %p191, %p192
      %p194 = scmp.ne.s32.totalorder %s182, %s183
      %p195 = scmp.eq.s32.totalorder %s26, 1
      %p196 = por %p194, %p195
      %p198 = scmp.ne.s32.totalorder %s183, %s197
      %p199 = scmp.eq.s32.totalorder %s26, 0
      %p200 = por %p198, %p199
      %s202 = sadd.s32 %s201, 1
      %p205 = scmp.eq.s32.totalorder %s20, 1
      %p206 = scmp.ne.s32.totalorder %s201, %s203
      %p207 = scmp.eq.s32.totalorder %s20, 0
      %p208 = por %p206, %p207
      %p209 = scmp.ne.s32.totalorder %s201, %s203
      %p210 = scmp.eq.s32.totalorder %s25, 1
      %p211 = por %p209, %p210
      %p212 = scmp.ne.s32.totalorder %s203, %s204
      %p213 = scmp.eq.s32.totalorder %s25, 0
      %p214 = por %p212, %p213
      %p215 = scmp.ne.s32.totalorder %s203, %s204
      %p216 = scmp.eq.s32.totalorder %s26, 1
      %p217 = por %p215, %p216
      %p219 = scmp.ne.s32.totalorder %s204, %s218
      %p220 = scmp.eq.s32.totalorder %s26, 0
      %p221 = por %p219, %p220
      %s223 = sadd.s32 %s222, 1
      %p226 = scmp.eq.s32.totalorder %s20, 1
      %p227 = scmp.ne.s32.totalorder %s222, %s224
      %p228 = scmp.eq.s32.totalorder %s20, 0
      %p229 = por %p227, %p228
      %p230 = scmp.ne.s32.totalorder %s222, %s224
      %p231 = scmp.eq.s32.totalorder %s25, 1
      %p232 = por %p230, %p231
      %p233 = scmp.ne.s32.totalorder %s224, %s225
      %p234 = scmp.eq.s32.totalorder %s25, 0
      %p235 = por %p233, %p234
      %p236 = scmp.ne.s32.totalorder %s224, %s225
      %p237 = scmp.eq.s32.totalorder %s26, 1
      %p238 = por %p236, %p237
      %p240 = scmp.ne.s32.totalorder %s225, %s239
      %p241 = scmp.eq.s32.totalorder %s26, 0
      %p242 = por %p240, %p241
      %s244 = sadd.s32 %s243, 1
      %p247 = scmp.eq.s32.totalorder %s20, 1
      %p248 = scmp.ne.s32.totalorder %s243, %s245
      %p249 = scmp.eq.s32.totalorder %s20, 0
      %p250 = por %p248, %p249
      %p251 = scmp.ne.s32.totalorder %s243, %s245
      %p252 = scmp.eq.s32.totalorder %s25, 1
      %p253 = por %p251, %p252
      %p254 = scmp.ne.s32.totalorder %s245, %s246
      %p255 = scmp.eq.s32.totalorder %s25, 0
      %p256 = por %p254, %p255
      %p257 = scmp.ne.s32.totalorder %s245, %s246
      %p258 = scmp.eq.s32.totalorder %s26, 1
      %p259 = por %p257, %p258
      %p261 = scmp.ne.s32.totalorder %s246, %s260
      %p262 = scmp.eq.s32.totalorder %s26, 0
      %p263 = por %p261, %p262
      %s264 = ssub.s32 %s20, %s27
      %p265 = scmp.eq.s32.totalorder %s264, 0
      %s267 = sadd.s32 %s266, 1
      %s268 = scalar_select %p265, %s266, %s267
      %p271 = pneg %p265
      %p272 = scmp.eq.s32.totalorder %s20, 1
      %p273 = por %p271, %p272
      %p274 = scmp.ne.s32.totalorder %s266, %s269
      %p275 = scmp.eq.s32.totalorder %s20, 0
      %p276 = por %p274, %p275
      %p277 = scmp.ne.s32.totalorder %s266, %s269
      %p278 = scmp.eq.s32.totalorder %s25, 1
      %p279 = por %p277, %p278
      %p280 = scmp.ne.s32.totalorder %s269, %s270
      %p281 = scmp.eq.s32.totalorder %s25, 0
      %p282 = por %p280, %p281
      %p283 = scmp.ne.s32.totalorder %s269, %s270
      %p284 = scmp.eq.s32.totalorder %s26, 1
      %p285 = por %p283, %p284
      %p287 = scmp.ne.s32.totalorder %s270, %s286
      %p288 = scmp.eq.s32.totalorder %s26, 0
      %p289 = por %p287, %p288
      %p290 = scmp.le.s32.totalorder 1, %s20
      %p291 = scmp.lt.s32.totalorder %s20, 3
      %p292 = pnand %p290, %p291
      %p293 = pneg %p292
      // Predicated region
      $region9: #{tpu_custom_call.1} parent=5 // pred_check
        _
      $region10: #{tpu_custom_call.1} parent=5 // pred_check_branch
        %295 = sbr.rel (%p292) target = $region12
      $region11: #{tpu_custom_call.1} parent=5 // pred_region
        %s296 = ssub.s32 %s20, 1
        // Predicated region
        $region13: #{tpu_custom_call.1} parent=11 // pred_check
          %p297 = pneg %p67
        $region14: #{tpu_custom_call.1} parent=11 // pred_check_branch
          %299 = sbr.rel (%p297) target = $region16
        $region15: #{tpu_custom_call.1} parent=11 // pred_region
          _
        $region16: #{tpu_custom_call.1} parent=11 // pred_fallthru
          _
        // Predicated region
        $region17: #{tpu_custom_call.1} parent=11 // pred_check
          %p300 = pneg %p88
        $region18: #{tpu_custom_call.1} parent=11 // pred_check_branch
          %302 = sbr.rel (%p300) target = $region20
        $region19: #{tpu_custom_call.1} parent=11 // pred_region
          _
        $region20: #{tpu_custom_call.1} parent=11 // pred_fallthru
          _
        // Predicated region
        $region21: #{tpu_custom_call.1} parent=11 // pred_check
          %p303 = pneg %p109
        $region22: #{tpu_custom_call.1} parent=11 // pred_check_branch
          %305 = sbr.rel (%p303) target = $region24
        $region23: #{tpu_custom_call.1} parent=11 // pred_region
          _
        $region24: #{tpu_custom_call.1} parent=11 // pred_fallthru
          _
        // Predicated region
        $region25: #{tpu_custom_call.1} parent=11 // pred_check
          %p306 = pneg %p130
        $region26: #{tpu_custom_call.1} parent=11 // pred_check_branch
          %308 = sbr.rel (%p306) target = $region28
        $region27: #{tpu_custom_call.1} parent=11 // pred_region
          _
        $region28: #{tpu_custom_call.1} parent=11 // pred_fallthru
          _
        // Predicated region
        $region29: #{tpu_custom_call.1} parent=11 // pred_check
          %p309 = pneg %p151
        $region30: #{tpu_custom_call.1} parent=11 // pred_check_branch
          %311 = sbr.rel (%p309) target = $region32
        $region31: #{tpu_custom_call.1} parent=11 // pred_region
          _
        $region32: #{tpu_custom_call.1} parent=11 // pred_fallthru
          _
        // Predicated region
        $region33: #{tpu_custom_call.1} parent=11 // pred_check
          %p312 = pneg %p172
        $region34: #{tpu_custom_call.1} parent=11 // pred_check_branch
          %314 = sbr.rel (%p312) target = $region36
        $region35: #{tpu_custom_call.1} parent=11 // pred_region
          _
        $region36: #{tpu_custom_call.1} parent=11 // pred_fallthru
          _
        // Predicated region
        $region37: #{tpu_custom_call.1} parent=11 // pred_check
          %p315 = pneg %p193
        $region38: #{tpu_custom_call.1} parent=11 // pred_check_branch
          %317 = sbr.rel (%p315) target = $region40
        $region39: #{tpu_custom_call.1} parent=11 // pred_region
          _
        $region40: #{tpu_custom_call.1} parent=11 // pred_fallthru
          _
        // Predicated region
        $region41: #{tpu_custom_call.1} parent=11 // pred_check
          %p318 = pneg %p214
        $region42: #{tpu_custom_call.1} parent=11 // pred_check_branch
          %320 = sbr.rel (%p318) target = $region44
        $region43: #{tpu_custom_call.1} parent=11 // pred_region
          _
        $region44: #{tpu_custom_call.1} parent=11 // pred_fallthru
          _
        // Predicated region
        $region45: #{tpu_custom_call.1} parent=11 // pred_check
          %p321 = pneg %p235
        $region46: #{tpu_custom_call.1} parent=11 // pred_check_branch
          %323 = sbr.rel (%p321) target = $region48
        $region47: #{tpu_custom_call.1} parent=11 // pred_region
          _
        $region48: #{tpu_custom_call.1} parent=11 // pred_fallthru
          _
        // Predicated region
        $region49: #{tpu_custom_call.1} parent=11 // pred_check
          %p324 = pneg %p256
        $region50: #{tpu_custom_call.1} parent=11 // pred_check_branch
          %326 = sbr.rel (%p324) target = $region52
        $region51: #{tpu_custom_call.1} parent=11 // pred_region
          _
        $region52: #{tpu_custom_call.1} parent=11 // pred_fallthru
          _
      $region12: #{tpu_custom_call.1} parent=5 // pred_fallthru
        _
      %p327 = scmp.lt.s32.totalorder %s20, 2
      // Predicated region
      $region53: #{tpu_custom_call.1} parent=5 // pred_check
        %p328 = pneg %p327
      $region54: #{tpu_custom_call.1} parent=5 // pred_check_branch
        %330 = sbr.rel (%p328) target = $region56
      $region55: #{tpu_custom_call.1} parent=5 // pred_region
        // Predicated region
        $region57: #{tpu_custom_call.1} parent=55 // pred_check
          %p331 = pneg %p40
        $region58: #{tpu_custom_call.1} parent=55 // pred_check_branch
          %333 = sbr.rel (%p331) target = $region60
        $region59: #{tpu_custom_call.1} parent=55 // pred_region
          %p334 = scmp.lt.s32.totalorder %s20, 1
          %s335 = scalar_select %p334, %s20, 1
          %s336 = smul.addr %s335, 4
          %s337 = smul.addr %s336, 4
          %s338 = scalar_lea.vmem %s0, %s337
        $region60: #{tpu_custom_call.1} parent=55 // pred_fallthru
          _
      $region56: #{tpu_custom_call.1} parent=5 // pred_fallthru
        _
      %p339 = scmp.le.s32.totalorder 1, %s20
      %p340 = scmp.lt.s32.totalorder %s20, 3
      %p341 = pnand %p339, %p340
      %p342 = pneg %p341
      // Predicated region
      $region61: #{tpu_custom_call.1} parent=5 // pred_check
        _
      $region62: #{tpu_custom_call.1} parent=5 // pred_check_branch
        %344 = sbr.rel (%p341) target = $region64
      $region63: #{tpu_custom_call.1} parent=5 // pred_region
        %s345 = ssub.s32 %s20, 1
        %p346 = scmp.lt.s32.totalorder %s25, 1
        %s347 = scalar_select %p346, %s25, 1
        %s348 = smul.addr %s347, 4
        %s349 = smul.addr %s348, 4
        %s350 = scalar_lea.vmem %s0, %s349
        %p351 = pneg %p46
        %p352 = pneg %p43
        %p353 = pneg %p67
        %p354 = pneg %p64
        %p355 = pneg %p88
        %p356 = pneg %p85
        %p357 = pneg %p109
        %p358 = pneg %p106
        %p359 = pneg %p130
        %p360 = pneg %p127
        %p361 = pneg %p151
        %p362 = pneg %p148
        %p363 = pneg %p172
        %p364 = pneg %p169
        %p365 = pneg %p193
        %p366 = pneg %p190
        %p367 = pneg %p214
        %p368 = pneg %p211
        %p369 = pneg %p235
        %p370 = pneg %p232
        %p371 = pneg %p256
        %p372 = pneg %p253
        %p373 = pneg %p282
        %p374 = pneg %p279
        %s375 = sand.u32 %s269, 1
        %s376 = scalar_lea.sflag [#allocation6], %s375
        %s377 = sand.u32 %s269, 1
        %s378 = smul.addr %s377, 32
        %s379 = scalar_lea.vmem [#allocation5], %s378
        %p380 = scmp.lt.s32.totalorder %s25, 1
        %s381 = scalar_select %p380, %s25, 1
        %s382 = smul.addr %s381, 4
        %s383 = smul.addr %s382, 4
        %s384 = scalar_lea.vmem %s0, %s383
        %386 = vst [vmem:[#allocation2] sm:$0xff] 0
        %387 = vst [vmem:[#allocation2 + $0x18] sm:$0xff] 0
        %v388 = vld [vmem:[%s1] sm:$0x5]
        %v389 = vld [vmem:[%s384] sm:$0xff]
        %v390 = vld [vmem:[%s384 + $0x8] sm:$0xff]
        %v391 = vld [vmem:[%s4] sm:$0xf]
        %v392 = vld [vmem:[%s4 + $0x4] sm:$0xf]
        %v395 = vunpack.c.l.b16 %v391
        %v396 = vunpack.c.l.b16 %v392
        %v397 = vpack.c.b16 %v396, %v395
        %v400 = vunpack.c.l.b16 %v389
        %v401 = vunpack.c.h.b16 %v389
        %v402 = vunpack.c.l.b16 %v390
        %v403 = vunpack.c.h.b16 %v390
        %v404 = vpack.c.b16 %v402, %v400
        %v405 = vpack.c.b16 %v403, %v401
        %vm408 = vcmask 130048
        %v410 = vsel %vm408, %v397, 0
        %412 = vmatprep.subr.bf16.mxu0 %v405
        %413 = vmatpush1.bf16.msra.mxu0 %v404
        %414 = vmatprep.subr.bf16.mxu0 0
        %415 = vmatpush1.bf16.msra.mxu0 0
        %416 = vmatprep.subr.bf16.mxu0 0
        %417 = vmatpush1.bf16.msra.mxu0 0
        %418 = vmatprep.subr.bf16.mxu0 0
        %419 = vmatpush1.bf16.msra.mxu0 0
        %420 = vmatprep.subr.bf16.mxu0 0
        %421 = vmatpush1.bf16.msra.mxu0 0
        %422 = vmatprep.subr.bf16.mxu0 0
        %423 = vmatpush1.bf16.msra.mxu0 0
        %424 = vmatprep.subr.bf16.mxu0 0
        %425 = vmatpush1.bf16.msra.mxu0 0
        %426 = vmatprep.subr.bf16.mxu0 0
        %427 = vmatpush1.bf16.msra.mxu0 0
        %428 = vmatprep.subr.bf16.mxu0 0
        %429 = vmatpush1.bf16.msra.mxu0 0
        %430 = vmatprep.subr.bf16.mxu0 0
        %431 = vmatpush1.bf16.msra.mxu0 0
        %432 = vmatprep.subr.bf16.mxu0 0
        %433 = vmatpush1.bf16.msra.mxu0 0
        %434 = vmatprep.subr.bf16.mxu0 0
        %435 = vmatpush1.bf16.msra.mxu0 0
        %436 = vmatprep.subr.bf16.mxu0 0
        %437 = vmatpush1.bf16.msra.mxu0 0
        %438 = vmatprep.subr.bf16.mxu0 0
        %439 = vmatpush1.bf16.msra.mxu0 0
        %440 = vmatprep.subr.bf16.mxu0 0
        %441 = vmatpush1.bf16.msra.mxu0 0
        %442 = vmatprep.subr.bf16.mxu0 0
        %443 = vmatpush1.bf16.msra.mxu0 0
        %444 = vmatprep.mubr.bf16.mxu0 0
        %445 = vmatmul.mubr.bf16.gmra.mrb[0].mxu0 %v410
        %v446 = vpop.f32.mrb[0].mxu0
        %v447 = vadd.f32 0.0, %v446
        %v448 = vpop.f32.mrb[0].mxu0
        %v449 = vadd.f32 0.0, %v448
        %v450 = vpop.f32.mrb[0].mxu0
        %v451 = vadd.f32 0.0, %v450
        %v452 = vpop.f32.mrb[0].mxu0
        %v453 = vadd.f32 0.0, %v452
        %454 = vdwg.mxu0
        %455 = vst [vmem:[#allocation4] sm:$0xff] %v447
        %456 = vst [vmem:[#allocation4 + $0x8] sm:$0xff] %v449
        %457 = vst [vmem:[#allocation4 + $0x10] sm:$0xff] %v451
        %458 = vst [vmem:[#allocation4 + $0x18] sm:$0xff] %v453
        %459 = vst [vmem:[#allocation2 + $0x8] sm:$0xff] %v404
        %460 = vst [vmem:[#allocation2 + $0x10] sm:$0xff] %v405
        %v461 = vld [vmem:[#allocation2] sm:$0xff]
        %v462 = vld [vmem:[#allocation2 + $0x8] sm:$0xff]
        %v463 = vld [vmem:[#allocation2 + $0x10] sm:$0xff]
        %v466 = vunpack.c.l.s4 1983009808
        %v467 = vunpack.c.0.s8 %v466
        %v468 = vlaneseq
        %v469 = vshrl.u32 %v468, 7
        %v470 = vsub.s32 %v467, %v469
        %v471 = vrot.slane %v388, %v470
        %v472 = vcombine.high %v471, %v471
        %v474 = vpack.i.b16 %v471, %v471
        %v476 = vlaneseq
        %v477 = vshrl.u32 %v476, 7
        %v478 = vsub.s32 0, %v477
        %v479 = vrot.slane %v474, %v478
        %v481 = vpack.i.b16 %v472, %v472
        %v483 = vlaneseq
        %v484 = vshrl.u32 %v483, 7
        %v485 = vsub.s32 0, %v484
        %v486 = vrot.slane %v481, %v485
        %489 = vrot.lane.b32.xlu0 %v479, 111
        %v490 = vpop.permute.xlu0 %489
        %491 = vrot.lane.b32.xlu0 %v486, 111
        %v492 = vpop.permute.xlu0 %491
        %vm493 = vcmask 908288
        %v494 = vsel %vm493, %v490, %v492
        %v498 = vmul.bf16 %v461, %v490
        %v499 = vmul.bf16 %v462, %v494
        %v500 = vmul.bf16 %v463, %v492
        %504 = vrot.lane.b32.xlu0 %v498, 17
        %v505 = vpop.permute.xlu0 %504
        %506 = vrot.lane.b32.xlu0 %v499, 17
        %v507 = vpop.permute.xlu0 %506
        %508 = vrot.lane.b32.xlu0 %v500, 17
        %v509 = vpop.permute.xlu0 %508
        %vm510 = vcmask 138240
        %v511 = vsel %vm510, %v505, %v507
        %v512 = vsel %vm510, %v507, %v509
        %515 = vst [vmem:[#allocation3] sm:$0xff] %v511
        %516 = vst [vmem:[#allocation3 + $0x8] sm:$0xff] %v512
        %v517 = vld [vmem:[#allocation2] sm:$0xff]
        %v518 = vld [vmem:[#allocation2 + $0x8] sm:$0xff]
        %v519 = vld [vmem:[#allocation2 + $0x10] sm:$0xff]
        %523 = vrot.lane.b32.xlu0 %v517, 16
        %v524 = vpop.permute.xlu0 %523
        %525 = vrot.lane.b32.xlu0 %v518, 16
        %v526 = vpop.permute.xlu0 %525
        %527 = vrot.lane.b32.xlu0 %v519, 16
        %v528 = vpop.permute.xlu0 %527
        %vm529 = vcmask 130048
        %v530 = vsel %vm529, %v524, %v526
        %v531 = vsel %vm529, %v526, %v528
        %534 = vst [vmem:[#allocation3 + $0x10] sm:$0xff] %v530
        %535 = vst [vmem:[#allocation3 + $0x18] sm:$0xff] %v531
        %v536 = vld [vmem:[#allocation2] sm:$0xff]
        %v537 = vld [vmem:[#allocation2 + $0x8] sm:$0xff]
        %v538 = vld [vmem:[#allocation2 + $0x10] sm:$0xff]
        %v539 = vshrl.u32 %v471, 16
        %v540 = vpack.i.b16 %v539, %v539
        %v542 = vlaneseq
        %v543 = vshrl.u32 %v542, 7
        %v544 = vsub.s32 0, %v543
        %v545 = vrot.slane %v540, %v544
        %v546 = vshrl.u32 %v472, 16
        %v547 = vpack.i.b16 %v546, %v546
        %v549 = vlaneseq
        %v550 = vshrl.u32 %v549, 7
        %v551 = vsub.s32 0, %v550
        %v552 = vrot.slane %v547, %v551
        %555 = vrot.lane.b32.xlu0 %v545, 113
        %v556 = vpop.permute.xlu0 %555
        %557 = vrot.lane.b32.xlu0 %v552, 113
        %v558 = vpop.permute.xlu0 %557
        %vm559 = vcmask 924672
        %v560 = vsel %vm559, %v556, %v558
        %v564 = vmul.bf16 %v536, %v556
        %v565 = vmul.bf16 %v537, %v560
        %v566 = vmul.bf16 %v538, %v558
        %570 = vrot.lane.b32.xlu0 %v564, 15
        %v571 = vpop.permute.xlu0 %570
        %572 = vrot.lane.b32.xlu0 %v565, 15
        %v573 = vpop.permute.xlu0 %572
        %574 = vrot.lane.b32.xlu0 %v566, 15
        %v575 = vpop.permute.xlu0 %574
        %vm576 = vcmask 121856
        %v577 = vsel %vm576, %v571, %v573
        %v578 = vsel %vm576, %v573, %v575
        %581 = vst [vmem:[#allocation3 + $0x20] sm:$0xff] %v577
        %582 = vst [vmem:[#allocation3 + $0x28] sm:$0xff] %v578
        %v583 = vld [vmem:[#allocation2] sm:$0xff]
        %v584 = vld [vmem:[#allocation2 + $0x8] sm:$0xff]
        %v585 = vld [vmem:[#allocation2 + $0x10] sm:$0xff]
        %586 = vrot.lane.b32.xlu0 %v479, 127
        %v587 = vpop.permute.xlu0 %586
        %588 = vrot.lane.b32.xlu0 %v486, 127
        %v589 = vpop.permute.xlu0 %588
        %vm590 = vcmask 1039360
        %v591 = vsel %vm590, %v587, %v589
        %v595 = vmul.bf16 %v583, %v587
        %v596 = vmul.bf16 %v584, %v591
        %v597 = vmul.bf16 %v585, %v589
        %601 = vrot.lane.b32.xlu0 %v595, 1
        %v602 = vpop.permute.xlu0 %601
        %603 = vrot.lane.b32.xlu0 %v596, 1
        %v604 = vpop.permute.xlu0 %603
        %605 = vrot.lane.b32.xlu0 %v597, 1
        %v606 = vpop.permute.xlu0 %605
        %vm607 = vcmask 7168
        %v608 = vsel %vm607, %v602, %v604
        %v609 = vsel %vm607, %v604, %v606
        %612 = vst [vmem:[#allocation3 + $0x30] sm:$0xff] %v608
        %613 = vst [vmem:[#allocation3 + $0x38] sm:$0xff] %v609
        %v614 = vld [vmem:[#allocation2 + $0x8] sm:$0xff]
        %v615 = vld [vmem:[#allocation2 + $0x10] sm:$0xff]
        %616 = vst [vmem:[#allocation3 + $0x40] sm:$0xff] %v614
        %617 = vst [vmem:[#allocation3 + $0x48] sm:$0xff] %v615
        %v618 = vld [vmem:[#allocation2 + $0x8] sm:$0xff]
        %v619 = vld [vmem:[#allocation2 + $0x10] sm:$0xff]
        %v620 = vld [vmem:[#allocation2 + $0x18] sm:$0xff]
        %621 = vrot.lane.b32.xlu0 %v545, 1
        %v622 = vpop.permute.xlu0 %621
        %623 = vrot.lane.b32.xlu0 %v552, 1
        %v624 = vpop.permute.xlu0 %623
        %v625 = vsel %vm607, %v622, %v624
        %v629 = vmul.bf16 %v618, %v622
        %v630 = vmul.bf16 %v619, %v625
        %v631 = vmul.bf16 %v620, %v624
        %635 = vrot.lane.b32.xlu0 %v629, 127
        %v636 = vpop.permute.xlu0 %635
        %637 = vrot.lane.b32.xlu0 %v630, 127
        %v638 = vpop.permute.xlu0 %637
        %639 = vrot.lane.b32.xlu0 %v631, 127
        %v640 = vpop.permute.xlu0 %639
        %v641 = vsel %vm590, %v636, %v638
        %v642 = vsel %vm590, %v638, %v640
        %645 = vst [vmem:[#allocation3 + $0x50] sm:$0xff] %v641
        %646 = vst [vmem:[#allocation3 + $0x58] sm:$0xff] %v642
        %v647 = vld [vmem:[#allocation2 + $0x8] sm:$0xff]
        %v648 = vld [vmem:[#allocation2 + $0x10] sm:$0xff]
        %v649 = vld [vmem:[#allocation2 + $0x18] sm:$0xff]
        %650 = vrot.lane.b32.xlu0 %v479, 15
        %v651 = vpop.permute.xlu0 %650
        %652 = vrot.lane.b32.xlu0 %v486, 15
        %v653 = vpop.permute.xlu0 %652
        %v654 = vsel %vm576, %v651, %v653
        %v658 = vmul.bf16 %v647, %v651
        %v659 = vmul.bf16 %v648, %v654
        %v660 = vmul.bf16 %v649, %v653
        %664 = vrot.lane.b32.xlu0 %v658, 113
        %v665 = vpop.permute.xlu0 %664
        %666 = vrot.lane.b32.xlu0 %v659, 113
        %v667 = vpop.permute.xlu0 %666
        %668 = vrot.lane.b32.xlu0 %v660, 113
        %v669 = vpop.permute.xlu0 %668
        %v670 = vsel %vm559, %v665, %v667
        %v671 = vsel %vm559, %v667, %v669
        %674 = vst [vmem:[#allocation3 + $0x60] sm:$0xff] %v670
        %675 = vst [vmem:[#allocation3 + $0x68] sm:$0xff] %v671
        %v676 = vld [vmem:[#allocation2 + $0x8] sm:$0xff]
        %v677 = vld [vmem:[#allocation2 + $0x10] sm:$0xff]
        %v678 = vld [vmem:[#allocation2 + $0x18] sm:$0xff]
        %682 = vrot.lane.b32.xlu0 %v676, 112
        %v683 = vpop.permute.xlu0 %682
        %684 = vrot.lane.b32.xlu0 %v677, 112
        %v685 = vpop.permute.xlu0 %684
        %686 = vrot.lane.b32.xlu0 %v678, 112
        %v687 = vpop.permute.xlu0 %686
        %vm688 = vcmask 916480
        %v689 = vsel %vm688, %v683, %v685
        %v690 = vsel %vm688, %v685, %v687
        %693 = vst [vmem:[#allocation3 + $0x70] sm:$0xff] %v689
        %694 = vst [vmem:[#allocation3 + $0x78] sm:$0xff] %v690
        %v695 = vld [vmem:[#allocation2 + $0x8] sm:$0xff]
        %v696 = vld [vmem:[#allocation2 + $0x10] sm:$0xff]
        %v697 = vld [vmem:[#allocation2 + $0x18] sm:$0xff]
        %698 = vrot.lane.b32.xlu0 %v545, 17
        %v699 = vpop.permute.xlu0 %698
        %700 = vrot.lane.b32.xlu0 %v552, 17
        %v701 = vpop.permute.xlu0 %700
        %v702 = vsel %vm510, %v699, %v701
        %v706 = vmul.bf16 %v695, %v699
        %v707 = vmul.bf16 %v696, %v702
        %v708 = vmul.bf16 %v697, %v701
        %712 = vrot.lane.b32.xlu0 %v706, 111
        %v713 = vpop.permute.xlu0 %712
        %714 = vrot.lane.b32.xlu0 %v707, 111
        %v715 = vpop.permute.xlu0 %714
        %716 = vrot.lane.b32.xlu0 %v708, 111
        %v717 = vpop.permute.xlu0 %716
        %v718 = vsel %vm493, %v713, %v715
        %v719 = vsel %vm493, %v715, %v717
        %722 = vst [vmem:[#allocation3 + $0x80] sm:$0xff] %v718
        %723 = vst [vmem:[#allocation3 + $0x88] sm:$0xff] %v719
        %v724 = vld [vmem:[%s2] sm:$0xff]
        %v725 = vld [vmem:[#allocation3] sm:$0xff]
        %v726 = vld [vmem:[#allocation3 + $0x8] sm:$0xff]
        %v727 = vld [vmem:[#allocation3 + $0x10] sm:$0xff]
        %v728 = vld [vmem:[#allocation3 + $0x18] sm:$0xff]
        %v729 = vld [vmem:[#allocation3 + $0x20] sm:$0xff]
        %v730 = vld [vmem:[#allocation3 + $0x28] sm:$0xff]
        %v731 = vld [vmem:[#allocation3 + $0x30] sm:$0xff]
        %v732 = vld [vmem:[#allocation3 + $0x38] sm:$0xff]
        %v733 = vld [vmem:[#allocation3 + $0x40] sm:$0xff]
        %v734 = vld [vmem:[#allocation3 + $0x48] sm:$0xff]
        %v735 = vld [vmem:[#allocation3 + $0x50] sm:$0xff]
        %v736 = vld [vmem:[#allocation3 + $0x58] sm:$0xff]
        %v737 = vld [vmem:[#allocation3 + $0x60] sm:$0xff]
        %v738 = vld [vmem:[#allocation3 + $0x68] sm:$0xff]
        %v739 = vld [vmem:[#allocation3 + $0x70] sm:$0xff]
        %v740 = vld [vmem:[#allocation3 + $0x78] sm:$0xff]
        %v741 = vld [vmem:[#allocation3 + $0x80] sm:$0xff]
        %v742 = vld [vmem:[#allocation3 + $0x88] sm:$0xff]
        %v743 = vld [vmem:[%s3] sm:$0xff]
        %745 = vset.pattern.permute.xlu0 0
        %746 = vperm.xlu0 %745, %v743
        %v747 = vpop.permute.xlu0 %746
        %v750 = vunpack.c.l.b16 %v724
        %v751 = vunpack.c.h.b16 %v724
        %v752 = vpack.c.b16 %v750, %v750
        %v753 = vpack.c.b16 %v751, %v751
        %v756 = vsel %vm408, %v753, 0
        %758 = vmatprep.subr.bf16.mxu0 %v726
        %759 = vmatpush1.bf16.msra.mxu0 %v725
        %760 = vmatprep.subr.bf16.mxu0 %v728
        %761 = vmatpush1.bf16.msra.mxu0 %v727
        %762 = vmatprep.subr.bf16.mxu0 %v730
        %763 = vmatpush1.bf16.msra.mxu0 %v729
        %764 = vmatprep.subr.bf16.mxu0 %v732
        %765 = vmatpush1.bf16.msra.mxu0 %v731
        %766 = vmatprep.subr.bf16.mxu0 %v734
        %767 = vmatpush1.bf16.msra.mxu0 %v733
        %768 = vmatprep.subr.bf16.mxu0 %v736
        %769 = vmatpush1.bf16.msra.mxu0 %v735
        %770 = vmatprep.subr.bf16.mxu0 %v738
        %771 = vmatpush1.bf16.msra.mxu0 %v737
        %772 = vmatprep.subr.bf16.mxu0 %v740
        %773 = vmatpush1.bf16.msra.mxu0 %v739
        %774 = vmatprep.subr.bf16.mxu0 %v742
        %775 = vmatpush1.bf16.msra.mxu0 %v741
        %776 = vmatprep.subr.bf16.mxu0 0
        %777 = vmatpush1.bf16.msra.mxu0 0
        %778 = vmatprep.subr.bf16.mxu0 0
        %779 = vmatpush1.bf16.msra.mxu0 0
        %780 = vmatprep.subr.bf16.mxu0 0
        %781 = vmatpush1.bf16.msra.mxu0 0
        %782 = vmatprep.subr.bf16.mxu0 0
        %783 = vmatpush1.bf16.msra.mxu0 0
        %784 = vmatprep.subr.bf16.mxu0 0
        %785 = vmatpush1.bf16.msra.mxu0 0
        %786 = vmatprep.subr.bf16.mxu0 0
        %787 = vmatpush1.bf16.msra.mxu0 0
        %788 = vmatprep.subr.bf16.mxu0 0
        %789 = vmatpush1.bf16.msra.mxu0 0
        %790 = vmatprep.mubr.bf16.mxu0 %v756
        %791 = vmatmul.mubr.bf16.gmra.mrb[0].mxu0 %v752
        %v792 = vpop.f32.mrb[0].mxu0
        %v793 = vadd.f32 %v747, %v792
        %v794 = vpop.f32.mrb[0].mxu0
        %v795 = vadd.f32 %v747, %v794
        %v796 = vpop.f32.mrb[0].mxu0
        %v797 = vpop.f32.mrb[0].mxu0
        %798 = vdwg.mxu0
        %v799 = vmax.f32 %v793, 0.0
        %v800 = vmax.f32 %v795, 0.0
        %v801 = vpack.c.bf16 %v799, %v799
        %v802 = vpack.c.bf16 %v800, %v800
        %v803 = vld [vmem:[#allocation4] sm:$0xff]
        %v804 = vld [vmem:[#allocation4 + $0x8] sm:$0xff]
        %v805 = vld [vmem:[#allocation4 + $0x10] sm:$0xff]
        %v806 = vld [vmem:[#allocation4 + $0x18] sm:$0xff]
        %v807 = vld [vmem:[%s5] sm:$0xf]
        %v808 = vld [vmem:[%s5 + $0x4] sm:$0xf]
        %v811 = vunpack.c.l.b16 %v807
        %v812 = vunpack.c.l.b16 %v808
        %v813 = vpack.c.b16 %v812, %v811
        %vm814 = vcmask 64512
        %v816 = vsel %vm814, %v813, 0
        %vm818 = vcmask 1043456
        %v820 = vsel %vm818, %v801, 0
        %v823 = vsel %vm818, %v802, 0
        %825 = vmatprep.subr.bf16.mxu0 %v823
        %826 = vmatpush1.bf16.msra.mxu0 %v820
        %827 = vmatprep.subr.bf16.mxu0 0
        %828 = vmatpush1.bf16.msra.mxu0 0
        %829 = vmatprep.subr.bf16.mxu0 0
        %830 = vmatpush1.bf16.msra.mxu0 0
        %831 = vmatprep.subr.bf16.mxu0 0
        %832 = vmatpush1.bf16.msra.mxu0 0
        %833 = vmatprep.subr.bf16.mxu0 0
        %834 = vmatpush1.bf16.msra.mxu0 0
        %835 = vmatprep.subr.bf16.mxu0 0
        %836 = vmatpush1.bf16.msra.mxu0 0
        %837 = vmatprep.subr.bf16.mxu0 0
        %838 = vmatpush1.bf16.msra.mxu0 0
        %839 = vmatprep.subr.bf16.mxu0 0
        %840 = vmatpush1.bf16.msra.mxu0 0
        %841 = vmatprep.subr.bf16.mxu0 0
        %842 = vmatpush1.bf16.msra.mxu0 0
        %843 = vmatprep.subr.bf16.mxu0 0
        %844 = vmatpush1.bf16.msra.mxu0 0
        %845 = vmatprep.subr.bf16.mxu0 0
        %846 = vmatpush1.bf16.msra.mxu0 0
        %847 = vmatprep.subr.bf16.mxu0 0
        %848 = vmatpush1.bf16.msra.mxu0 0
        %849 = vmatprep.subr.bf16.mxu0 0
        %850 = vmatpush1.bf16.msra.mxu0 0
        %851 = vmatprep.subr.bf16.mxu0 0
        %852 = vmatpush1.bf16.msra.mxu0 0
        %853 = vmatprep.subr.bf16.mxu0 0
        %854 = vmatpush1.bf16.msra.mxu0 0
        %855 = vmatprep.subr.bf16.mxu0 0
        %856 = vmatpush1.bf16.msra.mxu0 0
        %857 = vmatprep.mubr.bf16.mxu0 0
        %858 = vmatmul.mubr.bf16.gmra.mrb[0].mxu0 %v816
        %v859 = vpop.f32.mrb[0].mxu0
        %v860 = vadd.f32 0.0, %v859
        %v861 = vpop.f32.mrb[0].mxu0
        %v862 = vadd.f32 0.0, %v861
        %v863 = vpop.f32.mrb[0].mxu0
        %v864 = vadd.f32 0.0, %v863
        %v865 = vpop.f32.mrb[0].mxu0
        %v866 = vadd.f32 0.0, %v865
        %867 = vdwg.mxu0
        %v868 = vadd.f32 %v803, %v860
        %v869 = vadd.f32 %v804, %v862
        %v870 = vadd.f32 %v805, %v864
        %v871 = vadd.f32 %v806, %v866
        %872 = vst [vmem:[#allocation4] sm:$0xff] %v868
        %873 = vst [vmem:[#allocation4 + $0x8] sm:$0xff] %v869
        %874 = vst [vmem:[#allocation4 + $0x10] sm:$0xff] %v870
        %875 = vst [vmem:[#allocation4 + $0x18] sm:$0xff] %v871
        %876 = vst [vmem:[#allocation2 + $0x8] sm:$0xf] %v801
        %877 = vst [vmem:[#allocation2 + $0x10] sm:$0xf] %v802
        %v878 = vld [vmem:[#allocation2] sm:$0xf]
        %v879 = vld [vmem:[#allocation2 + $0x8] sm:$0xf]
        %v880 = vld [vmem:[#allocation2 + $0x10] sm:$0xf]
        %v881 = vmul.bf16 %v878, %v490
        %v882 = vmul.bf16 %v879, %v494
        %v883 = vmul.bf16 %v880, %v492
        %887 = vrot.lane.b32.xlu0 %v881, 17
        %v888 = vpop.permute.xlu0 %887
        %889 = vrot.lane.b32.xlu0 %v882, 17
        %v890 = vpop.permute.xlu0 %889
        %891 = vrot.lane.b32.xlu0 %v883, 17
        %v892 = vpop.permute.xlu0 %891
        %v893 = vsel %vm510, %v888, %v890
        %v894 = vsel %vm510, %v890, %v892
        %897 = vst [vmem:[#allocation3] sm:$0xf] %v893
        %898 = vst [vmem:[#allocation3 + $0x8] sm:$0xf] %v894
        %v899 = vld [vmem:[#allocation2] sm:$0xf]
        %v900 = vld [vmem:[#allocation2 + $0x8] sm:$0xf]
        %v901 = vld [vmem:[#allocation2 + $0x10] sm:$0xf]
        %905 = vrot.lane.b32.xlu0 %v899, 16
        %v906 = vpop.permute.xlu0 %905
        %907 = vrot.lane.b32.xlu0 %v900, 16
        %v908 = vpop.permute.xlu0 %907
        %909 = vrot.lane.b32.xlu0 %v901, 16
        %v910 = vpop.permute.xlu0 %909
        %v911 = vsel %vm529, %v906, %v908
        %v912 = vsel %vm529, %v908, %v910
        %915 = vst [vmem:[#allocation3 + $0x10] sm:$0xf] %v911
        %916 = vst [vmem:[#allocation3 + $0x18] sm:$0xf] %v912
        %v917 = vld [vmem:[#allocation2] sm:$0xf]
        %v918 = vld [vmem:[#allocation2 + $0x8] sm:$0xf]
        %v919 = vld [vmem:[#allocation2 + $0x10] sm:$0xf]
        %v920 = vmul.bf16 %v917, %v556
        %v921 = vmul.bf16 %v918, %v560
        %v922 = vmul.bf16 %v919, %v558
        %926 = vrot.lane.b32.xlu0 %v920, 15
        %v927 = vpop.permute.xlu0 %926
        %928 = vrot.lane.b32.xlu0 %v921, 15
        %v929 = vpop.permute.xlu0 %928
        %930 = vrot.lane.b32.xlu0 %v922, 15
        %v931 = vpop.permute.xlu0 %930
        %v932 = vsel %vm576, %v927, %v929
        %v933 = vsel %vm576, %v929, %v931
        %936 = vst [vmem:[#allocation3 + $0x20] sm:$0xf] %v932
        %937 = vst [vmem:[#allocation3 + $0x28] sm:$0xf] %v933
        %v938 = vld [vmem:[#allocation2] sm:$0xf]
        %v939 = vld [vmem:[#allocation2 + $0x8] sm:$0xf]
        %v940 = vld [vmem:[#allocation2 + $0x10] sm:$0xf]
        %v941 = vmul.bf16 %v938, %v587
        %v942 = vmul.bf16 %v939, %v591
        %v943 = vmul.bf16 %v940, %v589
        %947 = vrot.lane.b32.xlu0 %v941, 1
        %v948 = vpop.permute.xlu0 %947
        %949 = vrot.lane.b32.xlu0 %v942, 1
        %v950 = vpop.permute.xlu0 %949
        %951 = vrot.lane.b32.xlu0 %v943, 1
        %v952 = vpop.permute.xlu0 %951
        %v953 = vsel %vm607, %v948, %v950
        %v954 = vsel %vm607, %v950, %v952
        %957 = vst [vmem:[#allocation3 + $0x30] sm:$0xf] %v953
        %958 = vst [vmem:[#allocation3 + $0x38] sm:$0xf] %v954
        %v959 = vld [vmem:[#allocation2 + $0x8] sm:$0xf]
        %v960 = vld [vmem:[#allocation2 + $0x10] sm:$0xf]
        %961 = vst [vmem:[#allocation3 + $0x40] sm:$0xf] %v959
        %962 = vst [vmem:[#allocation3 + $0x48] sm:$0xf] %v960
        %v963 = vld [vmem:[#allocation2 + $0x8] sm:$0xf]
        %v964 = vld [vmem:[#allocation2 + $0x10] sm:$0xf]
        %v965 = vld [vmem:[#allocation2 + $0x18] sm:$0xf]
        %v966 = vmul.bf16 %v963, %v622
        %v967 = vmul.bf16 %v964, %v625
        %v968 = vmul.bf16 %v965, %v624
        %972 = vrot.lane.b32.xlu0 %v966, 127
        %v973 = vpop.permute.xlu0 %972
        %974 = vrot.lane.b32.xlu0 %v967, 127
        %v975 = vpop.permute.xlu0 %974
        %976 = vrot.lane.b32.xlu0 %v968, 127
        %v977 = vpop.permute.xlu0 %976
        %v978 = vsel %vm590, %v973, %v975
        %v979 = vsel %vm590, %v975, %v977
        %982 = vst [vmem:[#allocation3 + $0x50] sm:$0xf] %v978
        %983 = vst [vmem:[#allocation3 + $0x58] sm:$0xf] %v979
        %v984 = vld [vmem:[#allocation2 + $0x8] sm:$0xf]
        %v985 = vld [vmem:[#allocation2 + $0x10] sm:$0xf]
        %v986 = vld [vmem:[#allocation2 + $0x18] sm:$0xf]
        %v987 = vmul.bf16 %v984, %v651
        %v988 = vmul.bf16 %v985, %v654
        %v989 = vmul.bf16 %v986, %v653
        %993 = vrot.lane.b32.xlu0 %v987, 113
        %v994 = vpop.permute.xlu0 %993
        %995 = vrot.lane.b32.xlu0 %v988, 113
        %v996 = vpop.permute.xlu0 %995
        %997 = vrot.lane.b32.xlu0 %v989, 113
        %v998 = vpop.permute.xlu0 %997
        %v999 = vsel %vm559, %v994, %v996
        %v1000 = vsel %vm559, %v996, %v998
        %1003 = vst [vmem:[#allocation3 + $0x60] sm:$0xf] %v999
        %1004 = vst [vmem:[#allocation3 + $0x68] sm:$0xf] %v1000
        %v1005 = vld [vmem:[#allocation2 + $0x8] sm:$0xf]
        %v1006 = vld [vmem:[#allocation2 + $0x10] sm:$0xf]
        %v1007 = vld [vmem:[#allocation2 + $0x18] sm:$0xf]
        %1011 = vrot.lane.b32.xlu0 %v1005, 112
        %v1012 = vpop.permute.xlu0 %1011
        %1013 = vrot.lane.b32.xlu0 %v1006, 112
        %v1014 = vpop.permute.xlu0 %1013
        %1015 = vrot.lane.b32.xlu0 %v1007, 112
        %v1016 = vpop.permute.xlu0 %1015
        %v1017 = vsel %vm688, %v1012, %v1014
        %v1018 = vsel %vm688, %v1014, %v1016
        %1021 = vst [vmem:[#allocation3 + $0x70] sm:$0xf] %v1017
        %1022 = vst [vmem:[#allocation3 + $0x78] sm:$0xf] %v1018
        %v1023 = vld [vmem:[#allocation2 + $0x8] sm:$0xf]
        %v1024 = vld [vmem:[#allocation2 + $0x10] sm:$0xf]
        %v1025 = vld [vmem:[#allocation2 + $0x18] sm:$0xf]
        %v1026 = vmul.bf16 %v1023, %v699
        %v1027 = vmul.bf16 %v1024, %v702
        %v1028 = vmul.bf16 %v1025, %v701
        %1032 = vrot.lane.b32.xlu0 %v1026, 111
        %v1033 = vpop.permute.xlu0 %1032
        %1034 = vrot.lane.b32.xlu0 %v1027, 111
        %v1035 = vpop.permute.xlu0 %1034
        %1036 = vrot.lane.b32.xlu0 %v1028, 111
        %v1037 = vpop.permute.xlu0 %1036
        %v1038 = vsel %vm493, %v1033, %v1035
        %v1039 = vsel %vm493, %v1035, %v1037
        %1042 = vst [vmem:[#allocation3 + $0x80] sm:$0xf] %v1038
        %1043 = vst [vmem:[#allocation3 + $0x88] sm:$0xf] %v1039
        %s1044 = scalar_lea.vmem %s2, 8
        %v1045 = vld [vmem:[%s1044] sm:$0xff]
        %v1046 = vld [vmem:[#allocation3] sm:$0xff]
        %v1047 = vld [vmem:[#allocation3 + $0x8] sm:$0xff]
        %v1048 = vld [vmem:[#allocation3 + $0x10] sm:$0xff]
        %v1049 = vld [vmem:[#allocation3 + $0x18] sm:$0xff]
        %v1050 = vld [vmem:[#allocation3 + $0x20] sm:$0xff]
        %v1051 = vld [vmem:[#allocation3 + $0x28] sm:$0xff]
        %v1052 = vld [vmem:[#allocation3 + $0x30] sm:$0xff]
        %v1053 = vld [vmem:[#allocation3 + $0x38] sm:$0xff]
        %v1054 = vld [vmem:[#allocation3 + $0x40] sm:$0xff]
        %v1055 = vld [vmem:[#allocation3 + $0x48] sm:$0xff]
        %v1056 = vld [vmem:[#allocation3 + $0x50] sm:$0xff]
        %v1057 = vld [vmem:[#allocation3 + $0x58] sm:$0xff]
        %v1058 = vld [vmem:[#allocation3 + $0x60] sm:$0xff]
        %v1059 = vld [vmem:[#allocation3 + $0x68] sm:$0xff]
        %v1060 = vld [vmem:[#allocation3 + $0x70] sm:$0xff]
        %v1061 = vld [vmem:[#allocation3 + $0x78] sm:$0xff]
        %v1062 = vld [vmem:[#allocation3 + $0x80] sm:$0xff]
        %v1063 = vld [vmem:[#allocation3 + $0x88] sm:$0xff]
        %s1064 = scalar_lea.vmem %s3, 8
        %v1065 = vld [vmem:[%s1064] sm:$0xff]
        %1067 = vset.pattern.permute.xlu0 0
        %1068 = vperm.xlu0 %1067, %v1065
        %v1069 = vpop.permute.xlu0 %1068
        %v1072 = vunpack.c.l.b16 %v1045
        %v1073 = vunpack.c.h.b16 %v1045
        %v1074 = vpack.c.b16 %v1072, %v1072
        %v1075 = vpack.c.b16 %v1073, %v1073
        %v1078 = vsel %vm408, %v1075, 0
        %1080 = vmatprep.subr.bf16.mxu0 %v1047
        %1081 = vmatpush1.bf16.msra.mxu0 %v1046
        %1082 = vmatprep.subr.bf16.mxu0 %v1049
        %1083 = vmatpush1.bf16.msra.mxu0 %v1048
        %1084 = vmatprep.subr.bf16.mxu0 %v1051
        %1085 = vmatpush1.bf16.msra.mxu0 %v1050
        %1086 = vmatprep.subr.bf16.mxu0 %v1053
        %1087 = vmatpush1.bf16.msra.mxu0 %v1052
        %1088 = vmatprep.subr.bf16.mxu0 %v1055
        %1089 = vmatpush1.bf16.msra.mxu0 %v1054
        %1090 = vmatprep.subr.bf16.mxu0 %v1057
        %1091 = vmatpush1.bf16.msra.mxu0 %v1056
        %1092 = vmatprep.subr.bf16.mxu0 %v1059
        %1093 = vmatpush1.bf16.msra.mxu0 %v1058
        %1094 = vmatprep.subr.bf16.mxu0 %v1061
        %1095 = vmatpush1.bf16.msra.mxu0 %v1060
        %1096 = vmatprep.subr.bf16.mxu0 %v1063
        %1097 = vmatpush1.bf16.msra.mxu0 %v1062
        %1098 = vmatprep.subr.bf16.mxu0 0
        %1099 = vmatpush1.bf16.msra.mxu0 0
        %1100 = vmatprep.subr.bf16.mxu0 0
        %1101 = vmatpush1.bf16.msra.mxu0 0
        %1102 = vmatprep.subr.bf16.mxu0 0
        %1103 = vmatpush1.bf16.msra.mxu0 0
        %1104 = vmatprep.subr.bf16.mxu0 0
        %1105 = vmatpush1.bf16.msra.mxu0 0
        %1106 = vmatprep.subr.bf16.mxu0 0
        %1107 = vmatpush1.bf16.msra.mxu0 0
        %1108 = vmatprep.subr.bf16.mxu0 0
        %1109 = vmatpush1.bf16.msra.mxu0 0
        %1110 = vmatprep.subr.bf16.mxu0 0
        %1111 = vmatpush1.bf16.msra.mxu0 0
        %1112 = vmatprep.mubr.bf16.mxu0 %v1078
        %1113 = vmatmul.mubr.bf16.gmra.mrb[0].mxu0 %v1074
        %v1114 = vpop.f32.mrb[0].mxu0
        %v1115 = vadd.f32 %v1069, %v1114
        %v1116 = vpop.f32.mrb[0].mxu0
        %v1117 = vadd.f32 %v1069, %v1116
        %v1118 = vpop.f32.mrb[0].mxu0
        %v1119 = vpop.f32.mrb[0].mxu0
        %1120 = vdwg.mxu0
        %v1121 = vmax.f32 %v1115, 0.0
        %v1122 = vmax.f32 %v1117, 0.0
        %v1123 = vpack.c.bf16 %v1121, %v1121
        %v1124 = vpack.c.bf16 %v1122, %v1122
        %v1125 = vld [vmem:[#allocation4] sm:$0xff]
        %v1126 = vld [vmem:[#allocation4 + $0x8] sm:$0xff]
        %v1127 = vld [vmem:[#allocation4 + $0x10] sm:$0xff]
        %v1128 = vld [vmem:[#allocation4 + $0x18] sm:$0xff]
        %v1129 = vld [vmem:[%s6] sm:$0xf]
        %v1130 = vld [vmem:[%s6 + $0x4] sm:$0xf]
        %v1133 = vunpack.c.l.b16 %v1129
        %v1134 = vunpack.c.l.b16 %v1130
        %v1135 = vpack.c.b16 %v1134, %v1133
        %v1137 = vsel %vm814, %v1135, 0
        %v1140 = vsel %vm818, %v1123, 0
        %v1143 = vsel %vm818, %v1124, 0
        %1145 = vmatprep.subr.bf16.mxu0 %v1143
        %1146 = vmatpush1.bf16.msra.mxu0 %v1140
        %1147 = vmatprep.subr.bf16.mxu0 0
        %1148 = vmatpush1.bf16.msra.mxu0 0
        %1149 = vmatprep.subr.bf16.mxu0 0
        %1150 = vmatpush1.bf16.msra.mxu0 0
        %1151 = vmatprep.subr.bf16.mxu0 0
        %1152 = vmatpush1.bf16.msra.mxu0 0
        %1153 = vmatprep.subr.bf16.mxu0 0
        %1154 = vmatpush1.bf16.msra.mxu0 0
        %1155 = vmatprep.subr.bf16.mxu0 0
        %1156 = vmatpush1.bf16.msra.mxu0 0
        %1157 = vmatprep.subr.bf16.mxu0 0
        %1158 = vmatpush1.bf16.msra.mxu0 0
        %1159 = vmatprep.subr.bf16.mxu0 0
        %1160 = vmatpush1.bf16.msra.mxu0 0
        %1161 = vmatprep.subr.bf16.mxu0 0
        %1162 = vmatpush1.bf16.msra.mxu0 0
        %1163 = vmatprep.subr.bf16.mxu0 0
        %1164 = vmatpush1.bf16.msra.mxu0 0
        %1165 = vmatprep.subr.bf16.mxu0 0
        %1166 = vmatpush1.bf16.msra.mxu0 0
        %1167 = vmatprep.subr.bf16.mxu0 0
        %1168 = vmatpush1.bf16.msra.mxu0 0
        %1169 = vmatprep.subr.bf16.mxu0 0
        %1170 = vmatpush1.bf16.msra.mxu0 0
        %1171 = vmatprep.subr.bf16.mxu0 0
        %1172 = vmatpush1.bf16.msra.mxu0 0
        %1173 = vmatprep.subr.bf16.mxu0 0
        %1174 = vmatpush1.bf16.msra.mxu0 0
        %1175 = vmatprep.subr.bf16.mxu0 0
        %1176 = vmatpush1.bf16.msra.mxu0 0
        %1177 = vmatprep.mubr.bf16.mxu0 0
        %1178 = vmatmul.mubr.bf16.gmra.mrb[0].mxu0 %v1137
        %v1179 = vpop.f32.mrb[0].mxu0
        %v1180 = vadd.f32 0.0, %v1179
        %v1181 = vpop.f32.mrb[0].mxu0
        %v1182 = vadd.f32 0.0, %v1181
        %v1183 = vpop.f32.mrb[0].mxu0
        %v1184 = vadd.f32 0.0, %v1183
        %v1185 = vpop.f32.mrb[0].mxu0
        %v1186 = vadd.f32 0.0, %v1185
        %1187 = vdwg.mxu0
        %v1188 = vadd.f32 %v1125, %v1180
        %v1189 = vadd.f32 %v1126, %v1182
        %v1190 = vadd.f32 %v1127, %v1184
        %v1191 = vadd.f32 %v1128, %v1186
        %1192 = vst [vmem:[#allocation4] sm:$0xff] %v1188
        %1193 = vst [vmem:[#allocation4 + $0x8] sm:$0xff] %v1189
        %1194 = vst [vmem:[#allocation4 + $0x10] sm:$0xff] %v1190
        %1195 = vst [vmem:[#allocation4 + $0x18] sm:$0xff] %v1191
        %1196 = vst [vmem:[#allocation2 + $0x8] sm:$0xf] %v1123
        %1197 = vst [vmem:[#allocation2 + $0x10] sm:$0xf] %v1124
        %v1198 = vld [vmem:[#allocation2] sm:$0xf]
        %v1199 = vld [vmem:[#allocation2 + $0x8] sm:$0xf]
        %v1200 = vld [vmem:[#allocation2 + $0x10] sm:$0xf]
        %v1201 = vmul.bf16 %v1198, %v490
        %v1202 = vmul.bf16 %v1199, %v494
        %v1203 = vmul.bf16 %v1200, %v492
        %1207 = vrot.lane.b32.xlu0 %v1201, 17
        %v1208 = vpop.permute.xlu0 %1207
        %1209 = vrot.lane.b32.xlu0 %v1202, 17
        %v1210 = vpop.permute.xlu0 %1209
        %1211 = vrot.lane.b32.xlu0 %v1203, 17
        %v1212 = vpop.permute.xlu0 %1211
        %v1213 = vsel %vm510, %v1208, %v1210
        %v1214 = vsel %vm510, %v1210, %v1212
        %1217 = vst [vmem:[#allocation3] sm:$0xf] %v1213
        %1218 = vst [vmem:[#allocation3 + $0x8] sm:$0xf] %v1214
        %v1219 = vld [vmem:[#allocation2] sm:$0xf]
        %v1220 = vld [vmem:[#allocation2 + $0x8] sm:$0xf]
        %v1221 = vld [vmem:[#allocation2 + $0x10] sm:$0xf]
        %1225 = vrot.lane.b32.xlu0 %v1219, 16
        %v1226 = vpop.permute.xlu0 %1225
        %1227 = vrot.lane.b32.xlu0 %v1220, 16
        %v1228 = vpop.permute.xlu0 %1227
        %1229 = vrot.lane.b32.xlu0 %v1221, 16
        %v1230 = vpop.permute.xlu0 %1229
        %v1231 = vsel %vm529, %v1226, %v1228
        %v1232 = vsel %vm529, %v1228, %v1230
        %1235 = vst [vmem:[#allocation3 + $0x10] sm:$0xf] %v1231
        %1236 = vst [vmem:[#allocation3 + $0x18] sm:$0xf] %v1232
        %v1237 = vld [vmem:[#allocation2] sm:$0xf]
        %v1238 = vld [vmem:[#allocation2 + $0x8] sm:$0xf]
        %v1239 = vld [vmem:[#allocation2 + $0x10] sm:$0xf]
        %v1240 = vmul.bf16 %v1237, %v556
        %v1241 = vmul.bf16 %v1238, %v560
        %v1242 = vmul.bf16 %v1239, %v558
        %1246 = vrot.lane.b32.xlu0 %v1240, 15
        %v1247 = vpop.permute.xlu0 %1246
        %1248 = vrot.lane.b32.xlu0 %v1241, 15
        %v1249 = vpop.permute.xlu0 %1248
        %1250 = vrot.lane.b32.xlu0 %v1242, 15
        %v1251 = vpop.permute.xlu0 %1250
        %v1252 = vsel %vm576, %v1247, %v1249
        %v1253 = vsel %vm576, %v1249, %v1251
        %1256 = vst [vmem:[#allocation3 + $0x20] sm:$0xf] %v1252
        %1257 = vst [vmem:[#allocation3 + $0x28] sm:$0xf] %v1253
        %v1258 = vld [vmem:[#allocation2] sm:$0xf]
        %v1259 = vld [vmem:[#allocation2 + $0x8] sm:$0xf]
        %v1260 = vld [vmem:[#allocation2 + $0x10] sm:$0xf]
        %v1261 = vmul.bf16 %v1258, %v587
        %v1262 = vmul.bf16 %v1259, %v591
        %v1263 = vmul.bf16 %v1260, %v589
        %1267 = vrot.lane.b32.xlu0 %v1261, 1
        %v1268 = vpop.permute.xlu0 %1267
        %1269 = vrot.lane.b32.xlu0 %v1262, 1
        %v1270 = vpop.permute.xlu0 %1269
        %1271 = vrot.lane.b32.xlu0 %v1263, 1
        %v1272 = vpop.permute.xlu0 %1271
        %v1273 = vsel %vm607, %v1268, %v1270
        %v1274 = vsel %vm607, %v1270, %v1272
        %1277 = vst [vmem:[#allocation3 + $0x30] sm:$0xf] %v1273
        %1278 = vst [vmem:[#allocation3 + $0x38] sm:$0xf] %v1274
        %v1279 = vld [vmem:[#allocation2 + $0x8] sm:$0xf]
        %v1280 = vld [vmem:[#allocation2 + $0x10] sm:$0xf]
        %1281 = vst [vmem:[#allocation3 + $0x40] sm:$0xf] %v1279
        %1282 = vst [vmem:[#allocation3 + $0x48] sm:$0xf] %v1280
        %v1283 = vld [vmem:[#allocation2 + $0x8] sm:$0xf]
        %v1284 = vld [vmem:[#allocation2 + $0x10] sm:$0xf]
        %v1285 = vld [vmem:[#allocation2 + $0x18] sm:$0xf]
        %v1286 = vmul.bf16 %v1283, %v622
        %v1287 = vmul.bf16 %v1284, %v625
        %v1288 = vmul.bf16 %v1285, %v624
        %1292 = vrot.lane.b32.xlu0 %v1286, 127
        %v1293 = vpop.permute.xlu0 %1292
        %1294 = vrot.lane.b32.xlu0 %v1287, 127
        %v1295 = vpop.permute.xlu0 %1294
        %1296 = vrot.lane.b32.xlu0 %v1288, 127
        %v1297 = vpop.permute.xlu0 %1296
        %v1298 = vsel %vm590, %v1293, %v1295
        %v1299 = vsel %vm590, %v1295, %v1297
        %1302 = vst [vmem:[#allocation3 + $0x50] sm:$0xf] %v1298
        %1303 = vst [vmem:[#allocation3 + $0x58] sm:$0xf] %v1299
        %v1304 = vld [vmem:[#allocation2 + $0x8] sm:$0xf]
        %v1305 = vld [vmem:[#allocation2 + $0x10] sm:$0xf]
        %v1306 = vld [vmem:[#allocation2 + $0x18] sm:$0xf]
        %v1307 = vmul.bf16 %v1304, %v651
        %v1308 = vmul.bf16 %v1305, %v654
        %v1309 = vmul.bf16 %v1306, %v653
        %1313 = vrot.lane.b32.xlu0 %v1307, 113
        %v1314 = vpop.permute.xlu0 %1313
        %1315 = vrot.lane.b32.xlu0 %v1308, 113
        %v1316 = vpop.permute.xlu0 %1315
        %1317 = vrot.lane.b32.xlu0 %v1309, 113
        %v1318 = vpop.permute.xlu0 %1317
        %v1319 = vsel %vm559, %v1314, %v1316
        %v1320 = vsel %vm559, %v1316, %v1318
        %1323 = vst [vmem:[#allocation3 + $0x60] sm:$0xf] %v1319
        %1324 = vst [vmem:[#allocation3 + $0x68] sm:$0xf] %v1320
        %v1325 = vld [vmem:[#allocation2 + $0x8] sm:$0xf]
        %v1326 = vld [vmem:[#allocation2 + $0x10] sm:$0xf]
        %v1327 = vld [vmem:[#allocation2 + $0x18] sm:$0xf]
        %1331 = vrot.lane.b32.xlu0 %v1325, 112
        %v1332 = vpop.permute.xlu0 %1331
        %1333 = vrot.lane.b32.xlu0 %v1326, 112
        %v1334 = vpop.permute.xlu0 %1333
        %1335 = vrot.lane.b32.xlu0 %v1327, 112
        %v1336 = vpop.permute.xlu0 %1335
        %v1337 = vsel %vm688, %v1332, %v1334
        %v1338 = vsel %vm688, %v1334, %v1336
        %1341 = vst [vmem:[#allocation3 + $0x70] sm:$0xf] %v1337
        %1342 = vst [vmem:[#allocation3 + $0x78] sm:$0xf] %v1338
        %v1343 = vld [vmem:[#allocation2 + $0x8] sm:$0xf]
        %v1344 = vld [vmem:[#allocation2 + $0x10] sm:$0xf]
        %v1345 = vld [vmem:[#allocation2 + $0x18] sm:$0xf]
        %v1346 = vmul.bf16 %v1343, %v699
        %v1347 = vmul.bf16 %v1344, %v702
        %v1348 = vmul.bf16 %v1345, %v701
        %1352 = vrot.lane.b32.xlu0 %v1346, 111
        %v1353 = vpop.permute.xlu0 %1352
        %1354 = vrot.lane.b32.xlu0 %v1347, 111
        %v1355 = vpop.permute.xlu0 %1354
        %1356 = vrot.lane.b32.xlu0 %v1348, 111
        %v1357 = vpop.permute.xlu0 %1356
        %v1358 = vsel %vm493, %v1353, %v1355
        %v1359 = vsel %vm493, %v1355, %v1357
        %1362 = vst [vmem:[#allocation3 + $0x80] sm:$0xf] %v1358
        %1363 = vst [vmem:[#allocation3 + $0x88] sm:$0xf] %v1359
        %s1364 = scalar_lea.vmem %s2, 16
        %v1365 = vld [vmem:[%s1364] sm:$0xff]
        %v1366 = vld [vmem:[#allocation3] sm:$0xff]
        %v1367 = vld [vmem:[#allocation3 + $0x8] sm:$0xff]
        %v1368 = vld [vmem:[#allocation3 + $0x10] sm:$0xff]
        %v1369 = vld [vmem:[#allocation3 + $0x18] sm:$0xff]
        %v1370 = vld [vmem:[#allocation3 + $0x20] sm:$0xff]
        %v1371 = vld [vmem:[#allocation3 + $0x28] sm:$0xff]
        %v1372 = vld [vmem:[#allocation3 + $0x30] sm:$0xff]
        %v1373 = vld [vmem:[#allocation3 + $0x38] sm:$0xff]
        %v1374 = vld [vmem:[#allocation3 + $0x40] sm:$0xff]
        %v1375 = vld [vmem:[#allocation3 + $0x48] sm:$0xff]
        %v1376 = vld [vmem:[#allocation3 + $0x50] sm:$0xff]
        %v1377 = vld [vmem:[#allocation3 + $0x58] sm:$0xff]
        %v1378 = vld [vmem:[#allocation3 + $0x60] sm:$0xff]
        %v1379 = vld [vmem:[#allocation3 + $0x68] sm:$0xff]
        %v1380 = vld [vmem:[#allocation3 + $0x70] sm:$0xff]
        %v1381 = vld [vmem:[#allocation3 + $0x78] sm:$0xff]
        %v1382 = vld [vmem:[#allocation3 + $0x80] sm:$0xff]
        %v1383 = vld [vmem:[#allocation3 + $0x88] sm:$0xff]
        %s1384 = scalar_lea.vmem %s3, 16
        %v1385 = vld [vmem:[%s1384] sm:$0xff]
        %1387 = vset.pattern.permute.xlu0 0
        %1388 = vperm.xlu0 %1387, %v1385
        %v1389 = vpop.permute.xlu0 %1388
        %v1392 = vunpack.c.l.b16 %v1365
        %v1393 = vunpack.c.h.b16 %v1365
        %v1394 = vpack.c.b16 %v1392, %v1392
        %v1395 = vpack.c.b16 %v1393, %v1393
        %v1398 = vsel %vm408, %v1395, 0
        %1400 = vmatprep.subr.bf16.mxu0 %v1367
        %1401 = vmatpush1.bf16.msra.mxu0 %v1366
        %1402 = vmatprep.subr.bf16.mxu0 %v1369
        %1403 = vmatpush1.bf16.msra.mxu0 %v1368
        %1404 = vmatprep.subr.bf16.mxu0 %v1371
        %1405 = vmatpush1.bf16.msra.mxu0 %v1370
        %1406 = vmatprep.subr.bf16.mxu0 %v1373
        %1407 = vmatpush1.bf16.msra.mxu0 %v1372
        %1408 = vmatprep.subr.bf16.mxu0 %v1375
        %1409 = vmatpush1.bf16.msra.mxu0 %v1374
        %1410 = vmatprep.subr.bf16.mxu0 %v1377
        %1411 = vmatpush1.bf16.msra.mxu0 %v1376
        %1412 = vmatprep.subr.bf16.mxu0 %v1379
        %1413 = vmatpush1.bf16.msra.mxu0 %v1378
        %1414 = vmatprep.subr.bf16.mxu0 %v1381
        %1415 = vmatpush1.bf16.msra.mxu0 %v1380
        %1416 = vmatprep.subr.bf16.mxu0 %v1383
        %1417 = vmatpush1.bf16.msra.mxu0 %v1382
        %1418 = vmatprep.subr.bf16.mxu0 0
        %1419 = vmatpush1.bf16.msra.mxu0 0
        %1420 = vmatprep.subr.bf16.mxu0 0
        %1421 = vmatpush1.bf16.msra.mxu0 0
        %1422 = vmatprep.subr.bf16.mxu0 0
        %1423 = vmatpush1.bf16.msra.mxu0 0
        %1424 = vmatprep.subr.bf16.mxu0 0
        %1425 = vmatpush1.bf16.msra.mxu0 0
        %1426 = vmatprep.subr.bf16.mxu0 0
        %1427 = vmatpush1.bf16.msra.mxu0 0
        %1428 = vmatprep.subr.bf16.mxu0 0
        %1429 = vmatpush1.bf16.msra.mxu0 0
        %1430 = vmatprep.subr.bf16.mxu0 0
        %1431 = vmatpush1.bf16.msra.mxu0 0
        %1432 = vmatprep.mubr.bf16.mxu0 %v1398
        %1433 = vmatmul.mubr.bf16.gmra.mrb[0].mxu0 %v1394
        %v1434 = vpop.f32.mrb[0].mxu0
        %v1435 = vadd.f32 %v1389, %v1434
        %v1436 = vpop.f32.mrb[0].mxu0
        %v1437 = vadd.f32 %v1389, %v1436
        %v1438 = vpop.f32.mrb[0].mxu0
        %v1439 = vpop.f32.mrb[0].mxu0
        %1440 = vdwg.mxu0
        %v1441 = vmax.f32 %v1435, 0.0
        %v1442 = vmax.f32 %v1437, 0.0
        %v1443 = vpack.c.bf16 %v1441, %v1441
        %v1444 = vpack.c.bf16 %v1442, %v1442
        %v1445 = vld [vmem:[#allocation4] sm:$0xff]
        %v1446 = vld [vmem:[#allocation4 + $0x8] sm:$0xff]
        %v1447 = vld [vmem:[#allocation4 + $0x10] sm:$0xff]
        %v1448 = vld [vmem:[#allocation4 + $0x18] sm:$0xff]
        %v1449 = vld [vmem:[%s7] sm:$0xf]
        %v1450 = vld [vmem:[%s7 + $0x4] sm:$0xf]
        %v1453 = vunpack.c.l.b16 %v1449
        %v1454 = vunpack.c.l.b16 %v1450
        %v1455 = vpack.c.b16 %v1454, %v1453
        %v1457 = vsel %vm814, %v1455, 0
        %v1460 = vsel %vm818, %v1443, 0
        %v1463 = vsel %vm818, %v1444, 0
        %1465 = vmatprep.subr.bf16.mxu0 %v1463
        %1466 = vmatpush1.bf16.msra.mxu0 %v1460
        %1467 = vmatprep.subr.bf16.mxu0 0
        %1468 = vmatpush1.bf16.msra.mxu0 0
        %1469 = vmatprep.subr.bf16.mxu0 0
        %1470 = vmatpush1.bf16.msra.mxu0 0
        %1471 = vmatprep.subr.bf16.mxu0 0
        %1472 = vmatpush1.bf16.msra.mxu0 0
        %1473 = vmatprep.subr.bf16.mxu0 0
        %1474 = vmatpush1.bf16.msra.mxu0 0
        %1475 = vmatprep.subr.bf16.mxu0 0
        %1476 = vmatpush1.bf16.msra.mxu0 0
        %1477 = vmatprep.subr.bf16.mxu0 0
        %1478 = vmatpush1.bf16.msra.mxu0 0
        %1479 = vmatprep.subr.bf16.mxu0 0
        %1480 = vmatpush1.bf16.msra.mxu0 0
        %1481 = vmatprep.subr.bf16.mxu0 0
        %1482 = vmatpush1.bf16.msra.mxu0 0
        %1483 = vmatprep.subr.bf16.mxu0 0
        %1484 = vmatpush1.bf16.msra.mxu0 0
        %1485 = vmatprep.subr.bf16.mxu0 0
        %1486 = vmatpush1.bf16.msra.mxu0 0
        %1487 = vmatprep.subr.bf16.mxu0 0
        %1488 = vmatpush1.bf16.msra.mxu0 0
        %1489 = vmatprep.subr.bf16.mxu0 0
        %1490 = vmatpush1.bf16.msra.mxu0 0
        %1491 = vmatprep.subr.bf16.mxu0 0
        %1492 = vmatpush1.bf16.msra.mxu0 0
        %1493 = vmatprep.subr.bf16.mxu0 0
        %1494 = vmatpush1.bf16.msra.mxu0 0
        %1495 = vmatprep.subr.bf16.mxu0 0
        %1496 = vmatpush1.bf16.msra.mxu0 0
        %1497 = vmatprep.mubr.bf16.mxu0 0
        %1498 = vmatmul.mubr.bf16.gmra.mrb[0].mxu0 %v1457
        %v1499 = vpop.f32.mrb[0].mxu0
        %v1500 = vadd.f32 0.0, %v1499
        %v1501 = vpop.f32.mrb[0].mxu0
        %v1502 = vadd.f32 0.0, %v1501
        %v1503 = vpop.f32.mrb[0].mxu0
        %v1504 = vadd.f32 0.0, %v1503
        %v1505 = vpop.f32.mrb[0].mxu0
        %v1506 = vadd.f32 0.0, %v1505
        %1507 = vdwg.mxu0
        %v1508 = vadd.f32 %v1445, %v1500
        %v1509 = vadd.f32 %v1446, %v1502
        %v1510 = vadd.f32 %v1447, %v1504
        %v1511 = vadd.f32 %v1448, %v1506
        %1512 = vst [vmem:[#allocation4] sm:$0xff] %v1508
        %1513 = vst [vmem:[#allocation4 + $0x8] sm:$0xff] %v1509
        %1514 = vst [vmem:[#allocation4 + $0x10] sm:$0xff] %v1510
        %1515 = vst [vmem:[#allocation4 + $0x18] sm:$0xff] %v1511
        %v1516 = vld [vmem:[#allocation4] sm:$0xff]
        %v1517 = vld [vmem:[#allocation4 + $0x8] sm:$0xff]
        %v1518 = vld [vmem:[#allocation4 + $0x10] sm:$0xff]
        %v1519 = vld [vmem:[#allocation4 + $0x18] sm:$0xff]
        %v1520 = vld [vmem:[%s8] sm:$0xff]
        %v1521 = vld [vmem:[%s8 + $0x8] sm:$0xff]
        %1523 = vset.pattern.permute.xlu0 0
        %1524 = vperm.xlu0 %1523, %v1520
        %v1525 = vpop.permute.xlu0 %1524
        %1528 = vset.pattern.permute.xlu0 0
        %1529 = vperm.xlu0 %1528, %v1521
        %v1530 = vpop.permute.xlu0 %1529
        %v1532 = vadd.f32 %v1516, %v1525
        %v1533 = vadd.f32 %v1517, %v1525
        %v1534 = vadd.f32 %v1518, %v1530
        %v1535 = vadd.f32 %v1519, %v1530
        %v1536 = vmax.f32 %v1532, 0.0
        %v1537 = vmax.f32 %v1533, 0.0
        %v1538 = vmax.f32 %v1534, 0.0
        %v1539 = vmax.f32 %v1535, 0.0
        %v1540 = vadd.f32 %v1536, %v1537
        %1541 = vadd.xlane.f32.xlu0 %v1540
        %v1542 = vpop.xlane.xlu0 %1541
        %v1543 = vadd.f32 %v1538, %v1539
        %1544 = vadd.xlane.f32.xlu0 %v1543
        %v1545 = vpop.xlane.xlu0 %1544
        %v1546 = vrcp.pop 256.0
        %v1547 = vmul.f32 %v1542, %v1546
        %v1548 = vmul.f32 %v1545, %v1546
        %v1549 = vld [vmem:[%s9] sm:$0xff]
        %v1550 = vld [vmem:[%s9 + $0x8] sm:$0xff]
        %v1551 = vld [vmem:[%s10] sm:$0xff]
        %v1552 = vld [vmem:[%s10 + $0x8] sm:$0xff]
        %v1554 = vsel %vm408, %v1549, 0
        %v1557 = vsel %vm408, %v1550, 0
        %1559 = vmatprep.subr.mxu0 0.0
        %1560 = vmatpush1.msra.mxu0 %v1547
        %1561 = vmatprep.subr.mxu0 0.0
        %1562 = vmatpush1.msra.mxu0 %v1548
        %1563 = vmatprep.subr.mxu0 0.0
        %1564 = vmatpush1.msra.mxu0 0.0
        %1565 = vmatprep.subr.mxu0 0.0
        %1566 = vmatpush1.msra.mxu0 0.0
        %1567 = vmatprep.subr.mxu0 0.0
        %1568 = vmatpush1.msra.mxu0 0.0
        %1569 = vmatprep.subr.mxu0 0.0
        %1570 = vmatpush1.msra.mxu0 0.0
        %1571 = vmatprep.subr.mxu0 0.0
        %1572 = vmatpush1.msra.mxu0 0.0
        %1573 = vmatprep.subr.mxu0 0.0
        %1574 = vmatpush1.msra.mxu0 0.0
        %1575 = vmatprep.subr.mxu0 0.0
        %1576 = vmatpush1.msra.mxu0 0.0
        %1577 = vmatprep.subr.mxu0 0.0
        %1578 = vmatpush1.msra.mxu0 0.0
        %1579 = vmatprep.subr.mxu0 0.0
        %1580 = vmatpush1.msra.mxu0 0.0
        %1581 = vmatprep.subr.mxu0 0.0
        %1582 = vmatpush1.msra.mxu0 0.0
        %1583 = vmatprep.subr.mxu0 0.0
        %1584 = vmatpush1.msra.mxu0 0.0
        %1585 = vmatprep.subr.mxu0 0.0
        %1586 = vmatpush1.msra.mxu0 0.0
        %1587 = vmatprep.subr.mxu0 0.0
        %1588 = vmatpush1.msra.mxu0 0.0
        %1589 = vmatprep.subr.mxu0 0.0
        %1590 = vmatpush1.msra.mxu0 0.0
        %1591 = vmatprep.subr.mxu0 0.0
        %1592 = vmatpush1.msra.mxu0 0.0
        %1593 = vmatprep.subr.mxu0 0.0
        %1594 = vmatpush1.msra.mxu0 0.0
        %1595 = vmatprep.subr.mxu0 0.0
        %1596 = vmatpush1.msra.mxu0 0.0
        %1597 = vmatprep.subr.mxu0 0.0
        %1598 = vmatpush1.msra.mxu0 0.0
        %1599 = vmatprep.subr.mxu0 0.0
        %1600 = vmatpush1.msra.mxu0 0.0
        %1601 = vmatprep.subr.mxu0 0.0
        %1602 = vmatpush1.msra.mxu0 0.0
        %1603 = vmatprep.subr.mxu0 0.0
        %1604 = vmatpush1.msra.mxu0 0.0
        %1605 = vmatprep.subr.mxu0 0.0
        %1606 = vmatpush1.msra.mxu0 0.0
        %1607 = vmatprep.subr.mxu0 0.0
        %1608 = vmatpush1.msra.mxu0 0.0
        %1609 = vmatprep.subr.mxu0 0.0
        %1610 = vmatpush1.msra.mxu0 0.0
        %1611 = vmatprep.subr.mxu0 0.0
        %1612 = vmatpush1.msra.mxu0 0.0
        %1613 = vmatprep.subr.mxu0 0.0
        %1614 = vmatpush1.msra.mxu0 0.0
        %1615 = vmatprep.subr.mxu0 0.0
        %1616 = vmatpush1.msra.mxu0 0.0
        %1617 = vmatprep.subr.mxu0 0.0
        %1618 = vmatpush1.msra.mxu0 0.0
        %1619 = vmatprep.subr.mxu0 0.0
        %1620 = vmatpush1.msra.mxu0 0.0
        %1621 = vmatprep.subr.mxu0 0.0
        %1622 = vmatpush1.msra.mxu0 0.0
        %1623 = vmatprep.mubr.f32.mxu0 0.0
        %1624 = vmatmul.mubr.f32.gmra.mrb[0].mxu0 %v1554
        %v1625 = vpop.f32.mrb[0].mxu0
        %v1626 = vadd.f32 %v1551, %v1625
        %v1627 = vpop.f32.mrb[0].mxu0
        %1628 = vmatprep.mubr.f32.mxu0 0.0
        %1629 = vmatmul.mubr.f32.gmra.mrb[0].mxu0 %v1557
        %v1630 = vpop.f32.mrb[0].mxu0
        %v1631 = vadd.f32 %v1552, %v1630
        %v1632 = vpop.f32.mrb[0].mxu0
        %1633 = vdwg.mxu0
        %v1634 = vxor.u32 %v1626, 2147483648
        %v1635 = vxor.u32 %v1631, 2147483648
        %v1636 = vmul.f32 %v1634, 1.442695
        %v1637 = vpow.pop %v1636
        %v1638 = vmul.f32 %v1635, 1.442695
        %v1639 = vpow.pop %v1638
        %v1640 = vadd.f32 %v1637, 1.0
        %v1641 = vadd.f32 %v1639, 1.0
        %v1642 = vrcp.pop %v1640
        %v1643 = vmul.f32 1.0, %v1642
        %v1644 = vrcp.pop %v1641
        %v1645 = vmul.f32 1.0, %v1644
        %1647 = vset.pattern.permute.xlu0 0
        %1648 = vperm.xlu0 %1647, %v1643
        %v1649 = vpop.permute.xlu0 %1648
        %1652 = vset.pattern.permute.xlu0 0
        %1653 = vperm.xlu0 %1652, %v1645
        %v1654 = vpop.permute.xlu0 %1653
        %v1656 = vmul.f32 %v1536, %v1649
        %v1657 = vmul.f32 %v1537, %v1649
        %v1658 = vmul.f32 %v1538, %v1654
        %v1659 = vmul.f32 %v1539, %v1654
        %1660 = vst [vmem:[%s379] sm:$0xff] %v1656
        %1661 = vst [vmem:[%s379 + $0x8] sm:$0xff] %v1657
        %1662 = vst [vmem:[%s379 + $0x10] sm:$0xff] %v1658
        %1663 = vst [vmem:[%s379 + $0x18] sm:$0xff] %v1659
        %s1664 = sand.u32 %s269, 1
        %s1665 = scalar_lea.sflag [#allocation6], %s1664
        %s1666 = sand.u32 %s269, 1
        %s1667 = smul.addr %s1666, 32
        %s1668 = scalar_lea.vmem [#allocation5], %s1667
        // Predicated region
        $region65: #{tpu_custom_call.1} parent=63 // pred_check
          %p1669 = pneg %p279
        $region66: #{tpu_custom_call.1} parent=63 // pred_check_branch
          %1671 = sbr.rel (%p1669) target = $region68
        $region67: #{tpu_custom_call.1} parent=63 // pred_region
          %s1673 = ssub.s32 512, 512
          %1674 = vsyncadd %s1665, %s1673
          %s1675 = smul.addr %s25, 4
          %s1676 = smul.addr %s1675, 128
          %s1677 = scalar_lea.hbm %s11, %s1676
          %s1678 = sshll.u32 %s1668, 4
          %s1679 = int_to_ptr.vmem [resolvable:$true] %s1678
          %1684 = dma.vmem_to_hbm [thread:$0]  %s1679, 512, %s1677, %s1665, 256, 256, 16
        $region68: #{tpu_custom_call.1} parent=63 // pred_fallthru
          _
      $region64: #{tpu_custom_call.1} parent=5 // pred_fallthru
        _
      %p1685 = scmp.le.s32.totalorder 2, %s20
      // Predicated region
      $region69: #{tpu_custom_call.1} parent=5 // pred_check
        %p1686 = pneg %p1685
      $region70: #{tpu_custom_call.1} parent=5 // pred_check_branch
        %1688 = sbr.rel (%p1686) target = $region72
      $region71: #{tpu_custom_call.1} parent=5 // pred_region
        %s1689 = ssub.s32 %s20, 2
        // Predicated region
        $region73: #{tpu_custom_call.1} parent=71 // pred_check
          %p1690 = pneg %p285
        $region74: #{tpu_custom_call.1} parent=71 // pred_check_branch
          %1692 = sbr.rel (%p1690) target = $region76
        $region75: #{tpu_custom_call.1} parent=71 // pred_region
          %s1693 = sand.u32 %s270, 1
          %s1694 = scalar_lea.sflag [#allocation6], %s1693
          %s1695 = sand.u32 %s270, 1
          %s1696 = smul.addr %s1695, 32
          %s1697 = scalar_lea.vmem [#allocation5], %s1696
          %1698 = dma.done %s1694, 512
        $region76: #{tpu_custom_call.1} parent=71 // pred_fallthru
          _
      $region72: #{tpu_custom_call.1} parent=5 // pred_fallthru
        _
    $region6: #{tpu_custom_call.1} parent=1 // loop_footer
      %s24 = sadd.s32 1, %s20
    $region7: #{tpu_custom_call.1} parent=1 // loop_footer_branch
      %19 = sbr.rel target = $region3
    $region8: #{tpu_custom_call.1} parent=1 // loop_exit
      _
    %1699 = vsyncpa [#allocation6], 1
    %s1700 = scalar_lea.sflag [#allocation6], 1
    %1701 = vsyncpa %s1700, 1

// kernel: tpu_custom_call.1
$region0: #{tpu_custom_call.1}
  #allocation0 [shape = 'u32[]', space=smem, size = 0x4, offset = 0x4, fixed_abs, tag = 'smem constant byte address 0x4 - core index']
  #allocation1 [shape = 'u32[144,128]{1,0:T(1,128)}', space=vmem, size = 0x12000, scoped, tag = 'internal scratch']
  #allocation2 [shape = 'bf16[16,512]{1,0:T(16,128)(2,1)}', space=vmem, size = 0x4000, scoped, tag = 'scratch operand']
  #allocation3 [shape = 'bf16[144,256]{1,0:T(16,128)(2,1)}', space=vmem, size = 0x12000, scoped, tag = 'scratch operand']
  #allocation4 [shape = 'f32[16,256]{1,0:T(8,128)}', space=vmem, size = 0x4000, scoped, tag = 'scratch operand']
  %s0 = inlined_call_operand.vmem [shape: bf16[2,16,256], index: 0, kind: input, shape index: {}]
  %s1 = inlined_call_operand.vmem [shape: bf16[3,256], index: 1, kind: input, shape index: {}]
  %s2 = inlined_call_operand.vmem [shape: bf16[3,8,144], index: 2, kind: input, shape index: {}]
  %s3 = inlined_call_operand.vmem [shape: f32[3,8,1], index: 3, kind: input, shape index: {}]
  %s4 = inlined_call_operand.vmem [shape: bf16[16,16], index: 4, kind: input, shape index: {}]
  %s5 = inlined_call_operand.vmem [shape: bf16[16,8], index: 5, kind: input, shape index: {}]
  %s6 = inlined_call_operand.vmem [shape: bf16[16,8], index: 6, kind: input, shape index: {}]
  %s7 = inlined_call_operand.vmem [shape: bf16[16,8], index: 7, kind: input, shape index: {}]
  %s8 = inlined_call_operand.vmem [shape: f32[16,1], index: 8, kind: input, shape index: {}]
  %s9 = inlined_call_operand.vmem [shape: f32[16,16], index: 9, kind: input, shape index: {}]
  %s10 = inlined_call_operand.vmem [shape: f32[16,1], index: 10, kind: input, shape index: {}]
  %s11 = inlined_call_operand.hbm [shape: f32[2,16,256], index: 11, kind: output, shape index: {}]
  %s12 = sld [smem:[#allocation0]]
  $region77: #{tpu_custom_call.1} parent=0
    _
  %s14 = ssub.s32 1, %s12
  %s15 = scalar_select 0, %s14, %s12
  $region1: #{tpu_custom_call.1} parent=0
    #allocation5 [shape = 'u8[32768]{0}', space=vmem, size = 0x8000, scoped, tag = 'output window, operand 0']
    #allocation6 [shape = 's32[2]{0}', space=sflag, size = 0x8, scoped, tag = 'scoped memory for tpu_custom_call.1']
    %16 = vsyncpa [#allocation6], 0
    %s17 = scalar_lea.sflag [#allocation6], 1
    %18 = vsyncpa %s17, 0
    loop: start=0, step=1, limit=4
    $region2: #{tpu_custom_call.1} parent=1 // loop_pre_header
      _
    $region3: #{tpu_custom_call.1} parent=1 // loop_header
      %s20 = sphi 0, %s24
      %p21 = scmp.ge.s32.totalorder %s20, 4
      %s30 = sphi 0, %s32
      %s33 = sphi 0, %s30
      %s34 = sphi 0, %s33
      %s50 = sphi 0, %s34
      %s54 = sphi 0, %s54
      %s56 = sphi 0, %s54
      %s57 = sphi 0, %s56
      %s71 = sphi 0, %s57
      %s75 = sphi 0, %s75
      %s77 = sphi 0, %s75
      %s78 = sphi 0, %s77
      %s92 = sphi 0, %s78
      %s96 = sphi 0, %s96
      %s98 = sphi 0, %s96
      %s99 = sphi 0, %s98
      %s113 = sphi 0, %s99
      %s117 = sphi 0, %s117
      %s119 = sphi 0, %s117
      %s120 = sphi 0, %s119
      %s134 = sphi 0, %s120
      %s138 = sphi 0, %s138
      %s140 = sphi 0, %s138
      %s141 = sphi 0, %s140
      %s155 = sphi 0, %s141
      %s159 = sphi 0, %s159
      %s161 = sphi 0, %s159
      %s162 = sphi 0, %s161
      %s176 = sphi 0, %s162
      %s180 = sphi 0, %s180
      %s182 = sphi 0, %s180
      %s183 = sphi 0, %s182
      %s197 = sphi 0, %s183
      %s201 = sphi 0, %s201
      %s203 = sphi 0, %s201
      %s204 = sphi 0, %s203
      %s218 = sphi 0, %s204
      %s222 = sphi 0, %s222
      %s224 = sphi 0, %s222
      %s225 = sphi 0, %s224
      %s239 = sphi 0, %s225
      %s243 = sphi 0, %s243
      %s245 = sphi 0, %s243
      %s246 = sphi 0, %s245
      %s260 = sphi 0, %s246
      %s266 = sphi 0, %s268
      %s269 = sphi 0, %s266
      %s270 = sphi 0, %s269
      %s286 = sphi 0, %s270
    $region4: #{tpu_custom_call.1} parent=1 // loop_header_branch
      %23 = sbr.rel (%p21) target = $region8
    $region5: #{tpu_custom_call.1} parent=1 // loop_body
      %s25 = ssub.s32 %s20, 1
      %s26 = ssub.s32 %s20, 2
      %s27 = sadd.s32 %s20, 1
      %s28 = ssub.s32 %s20, %s27
      %p29 = scmp.eq.s32.totalorder %s28, 0
      %s31 = sadd.s32 %s30, 1
      %s32 = scalar_select %p29, %s30, %s31
      %p35 = pneg %p29
      %p36 = scmp.eq.s32.totalorder %s20, 1
      %p37 = por %p35, %p36
      %p38 = scmp.ne.s32.totalorder %s30, %s33
      %p39 = scmp.eq.s32.totalorder %s20, 0
      %p40 = por %p38, %p39
      %p41 = scmp.ne.s32.totalorder %s30, %s33
      %p42 = scmp.eq.s32.totalorder %s25, 1
      %p43 = por %p41, %p42
      %p44 = scmp.ne.s32.totalorder %s33, %s34
      %p45 = scmp.eq.s32.totalorder %s25, 0
      %p46 = por %p44, %p45
      %p47 = scmp.ne.s32.totalorder %s33, %s34
      %p48 = scmp.eq.s32.totalorder %s26, 1
      %p49 = por %p47, %p48
      %p51 = scmp.ne.s32.totalorder %s34, %s50
      %p52 = scmp.eq.s32.totalorder %s26, 0
      %p53 = por %p51, %p52
      %s55 = sadd.s32 %s54, 1
      %p58 = scmp.eq.s32.totalorder %s20, 1
      %p59 = scmp.ne.s32.totalorder %s54, %s56
      %p60 = scmp.eq.s32.totalorder %s20, 0
      %p61 = por %p59, %p60
      %p62 = scmp.ne.s32.totalorder %s54, %s56
      %p63 = scmp.eq.s32.totalorder %s25, 1
      %p64 = por %p62, %p63
      %p65 = scmp.ne.s32.totalorder %s56, %s57
      %p66 = scmp.eq.s32.totalorder %s25, 0
      %p67 = por %p65, %p66
      %p68 = scmp.ne.s32.totalorder %s56, %s57
      %p69 = scmp.eq.s32.totalorder %s26, 1
      %p70 = por %p68, %p69
      %p72 = scmp.ne.s32.totalorder %s57, %s71
      %p73 = scmp.eq.s32.totalorder %s26, 0
      %p74 = por %p72, %p73
      %s76 = sadd.s32 %s75, 1
      %p79 = scmp.eq.s32.totalorder %s20, 1
      %p80 = scmp.ne.s32.totalorder %s75, %s77
      %p81 = scmp.eq.s32.totalorder %s20, 0
      %p82 = por %p80, %p81
      %p83 = scmp.ne.s32.totalorder %s75, %s77
      %p84 = scmp.eq.s32.totalorder %s25, 1
      %p85 = por %p83, %p84
      %p86 = scmp.ne.s32.totalorder %s77, %s78
      %p87 = scmp.eq.s32.totalorder %s25, 0
      %p88 = por %p86, %p87
      %p89 = scmp.ne.s32.totalorder %s77, %s78
      %p90 = scmp.eq.s32.totalorder %s26, 1
      %p91 = por %p89, %p90
      %p93 = scmp.ne.s32.totalorder %s78, %s92
      %p94 = scmp.eq.s32.totalorder %s26, 0
      %p95 = por %p93, %p94
      %s97 = sadd.s32 %s96, 1
      %p100 = scmp.eq.s32.totalorder %s20, 1
      %p101 = scmp.ne.s32.totalorder %s96, %s98
      %p102 = scmp.eq.s32.totalorder %s20, 0
      %p103 = por %p101, %p102
      %p104 = scmp.ne.s32.totalorder %s96, %s98
      %p105 = scmp.eq.s32.totalorder %s25, 1
      %p106 = por %p104, %p105
      %p107 = scmp.ne.s32.totalorder %s98, %s99
      %p108 = scmp.eq.s32.totalorder %s25, 0
      %p109 = por %p107, %p108
      %p110 = scmp.ne.s32.totalorder %s98, %s99
      %p111 = scmp.eq.s32.totalorder %s26, 1
      %p112 = por %p110, %p111
      %p114 = scmp.ne.s32.totalorder %s99, %s113
      %p115 = scmp.eq.s32.totalorder %s26, 0
      %p116 = por %p114, %p115
      %s118 = sadd.s32 %s117, 1
      %p121 = scmp.eq.s32.totalorder %s20, 1
      %p122 = scmp.ne.s32.totalorder %s117, %s119
      %p123 = scmp.eq.s32.totalorder %s20, 0
      %p124 = por %p122, %p123
      %p125 = scmp.ne.s32.totalorder %s117, %s119
      %p126 = scmp.eq.s32.totalorder %s25, 1
      %p127 = por %p125, %p126
      %p128 = scmp.ne.s32.totalorder %s119, %s120
      %p129 = scmp.eq.s32.totalorder %s25, 0
      %p130 = por %p128, %p129
      %p131 = scmp.ne.s32.totalorder %s119, %s120
      %p132 = scmp.eq.s32.totalorder %s26, 1
      %p133 = por %p131, %p132
      %p135 = scmp.ne.s32.totalorder %s120, %s134
      %p136 = scmp.eq.s32.totalorder %s26, 0
      %p137 = por %p135, %p136
      %s139 = sadd.s32 %s138, 1
      %p142 = scmp.eq.s32.totalorder %s20, 1
      %p143 = scmp.ne.s32.totalorder %s138, %s140
      %p144 = scmp.eq.s32.totalorder %s20, 0
      %p145 = por %p143, %p144
      %p146 = scmp.ne.s32.totalorder %s138, %s140
      %p147 = scmp.eq.s32.totalorder %s25, 1
      %p148 = por %p146, %p147
      %p149 = scmp.ne.s32.totalorder %s140, %s141
      %p150 = scmp.eq.s32.totalorder %s25, 0
      %p151 = por %p149, %p150
      %p152 = scmp.ne.s32.totalorder %s140, %s141
      %p153 = scmp.eq.s32.totalorder %s26, 1
      %p154 = por %p152, %p153
      %p156 = scmp.ne.s32.totalorder %s141, %s155
      %p157 = scmp.eq.s32.totalorder %s26, 0
      %p158 = por %p156, %p157
      %s160 = sadd.s32 %s159, 1
      %p163 = scmp.eq.s32.totalorder %s20, 1
      %p164 = scmp.ne.s32.totalorder %s159, %s161
      %p165 = scmp.eq.s32.totalorder %s20, 0
      %p166 = por %p164, %p165
      %p167 = scmp.ne.s32.totalorder %s159, %s161
      %p168 = scmp.eq.s32.totalorder %s25, 1
      %p169 = por %p167, %p168
      %p170 = scmp.ne.s32.totalorder %s161, %s162
      %p171 = scmp.eq.s32.totalorder %s25, 0
      %p172 = por %p170, %p171
      %p173 = scmp.ne.s32.totalorder %s161, %s162
      %p174 = scmp.eq.s32.totalorder %s26, 1
      %p175 = por %p173, %p174
      %p177 = scmp.ne.s32.totalorder %s162, %s176
      %p178 = scmp.eq.s32.totalorder %s26, 0
      %p179 = por %p177, %p178
      %s181 = sadd.s32 %s180, 1
      %p184 = scmp.eq.s32.totalorder %s20, 1
      %p185 = scmp.ne.s32.totalorder %s180, %s182
      %p186 = scmp.eq.s32.totalorder %s20, 0
      %p187 = por %p185, %p186
      %p188 = scmp.ne.s32.totalorder %s180, %s182
      %p189 = scmp.eq.s32.totalorder %s25, 1
      %p190 = por %p188, %p189
      %p191 = scmp.ne.s32.totalorder %s182, %s183
      %p192 = scmp.eq.s32.totalorder %s25, 0
      %p193 = por %p191, %p192
      %p194 = scmp.ne.s32.totalorder %s182, %s183
      %p195 = scmp.eq.s32.totalorder %s26, 1
      %p196 = por %p194, %p195
      %p198 = scmp.ne.s32.totalorder %s183, %s197
      %p199 = scmp.eq.s32.totalorder %s26, 0
      %p200 = por %p198, %p199
      %s202 = sadd.s32 %s201, 1
      %p205 = scmp.eq.s32.totalorder %s20, 1
      %p206 = scmp.ne.s32.totalorder %s201, %s203
      %p207 = scmp.eq.s32.totalorder %s20, 0
      %p208 = por %p206, %p207
      %p209 = scmp.ne.s32.totalorder %s201, %s203
      %p210 = scmp.eq.s32.totalorder %s25, 1
      %p211 = por %p209, %p210
      %p212 = scmp.ne.s32.totalorder %s203, %s204
      %p213 = scmp.eq.s32.totalorder %s25, 0
      %p214 = por %p212, %p213
      %p215 = scmp.ne.s32.totalorder %s203, %s204
      %p216 = scmp.eq.s32.totalorder %s26, 1
      %p217 = por %p215, %p216
      %p219 = scmp.ne.s32.totalorder %s204, %s218
      %p220 = scmp.eq.s32.totalorder %s26, 0
      %p221 = por %p219, %p220
      %s223 = sadd.s32 %s222, 1
      %p226 = scmp.eq.s32.totalorder %s20, 1
      %p227 = scmp.ne.s32.totalorder %s222, %s224
      %p228 = scmp.eq.s32.totalorder %s20, 0
      %p229 = por %p227, %p228
      %p230 = scmp.ne.s32.totalorder %s222, %s224
      %p231 = scmp.eq.s32.totalorder %s25, 1
      %p232 = por %p230, %p231
      %p233 = scmp.ne.s32.totalorder %s224, %s225
      %p234 = scmp.eq.s32.totalorder %s25, 0
      %p235 = por %p233, %p234
      %p236 = scmp.ne.s32.totalorder %s224, %s225
      %p237 = scmp.eq.s32.totalorder %s26, 1
      %p238 = por %p236, %p237
      %p240 = scmp.ne.s32.totalorder %s225, %s239
      %p241 = scmp.eq.s32.totalorder %s26, 0
      %p242 = por %p240, %p241
      %s244 = sadd.s32 %s243, 1
      %p247 = scmp.eq.s32.totalorder %s20, 1
      %p248 = scmp.ne.s32.totalorder %s243, %s245
      %p249 = scmp.eq.s32.totalorder %s20, 0
      %p250 = por %p248, %p249
      %p251 = scmp.ne.s32.totalorder %s243, %s245
      %p252 = scmp.eq.s32.totalorder %s25, 1
      %p253 = por %p251, %p252
      %p254 = scmp.ne.s32.totalorder %s245, %s246
      %p255 = scmp.eq.s32.totalorder %s25, 0
      %p256 = por %p254, %p255
      %p257 = scmp.ne.s32.totalorder %s245, %s246
      %p258 = scmp.eq.s32.totalorder %s26, 1
      %p259 = por %p257, %p258
      %p261 = scmp.ne.s32.totalorder %s246, %s260
      %p262 = scmp.eq.s32.totalorder %s26, 0
      %p263 = por %p261, %p262
      %s264 = ssub.s32 %s20, %s27
      %p265 = scmp.eq.s32.totalorder %s264, 0
      %s267 = sadd.s32 %s266, 1
      %s268 = scalar_select %p265, %s266, %s267
      %p271 = pneg %p265
      %p272 = scmp.eq.s32.totalorder %s20, 1
      %p273 = por %p271, %p272
      %p274 = scmp.ne.s32.totalorder %s266, %s269
      %p275 = scmp.eq.s32.totalorder %s20, 0
      %p276 = por %p274, %p275
      %p277 = scmp.ne.s32.totalorder %s266, %s269
      %p278 = scmp.eq.s32.totalorder %s25, 1
      %p279 = por %p277, %p278
      %p280 = scmp.ne.s32.totalorder %s269, %s270
      %p281 = scmp.eq.s32.totalorder %s25, 0
      %p282 = por %p280, %p281
      %p283 = scmp.ne.s32.totalorder %s269, %s270
      %p284 = scmp.eq.s32.totalorder %s26, 1
      %p285 = por %p283, %p284
      %p287 = scmp.ne.s32.totalorder %s270, %s286
      %p288 = scmp.eq.s32.totalorder %s26, 0
      %p289 = por %p287, %p288
      %p290 = scmp.le.s32.totalorder 1, %s20
      %p291 = scmp.lt.s32.totalorder %s20, 3
      %p292 = pnand %p290, %p291
      %p293 = pneg %p292
      // Predicated region
      $region9: #{tpu_custom_call.1} parent=5 // pred_check
        _
      $region10: #{tpu_custom_call.1} parent=5 // pred_check_branch
        %295 = sbr.rel (%p292) target = $region12
      $region11: #{tpu_custom_call.1} parent=5 // pred_region
        %s296 = ssub.s32 %s20, 1
        // Predicated region
        $region13: #{tpu_custom_call.1} parent=11 // pred_check
          %p297 = pneg %p67
        $region14: #{tpu_custom_call.1} parent=11 // pred_check_branch
          %299 = sbr.rel (%p297) target = $region16
        $region15: #{tpu_custom_call.1} parent=11 // pred_region
          _
        $region16: #{tpu_custom_call.1} parent=11 // pred_fallthru
          _
        // Predicated region
        $region17: #{tpu_custom_call.1} parent=11 // pred_check
          %p300 = pneg %p88
        $region18: #{tpu_custom_call.1} parent=11 // pred_check_branch
          %302 = sbr.rel (%p300) target = $region20
        $region19: #{tpu_custom_call.1} parent=11 // pred_region
          _
        $region20: #{tpu_custom_call.1} parent=11 // pred_fallthru
          _
        // Predicated region
        $region21: #{tpu_custom_call.1} parent=11 // pred_check
          %p303 = pneg %p109
        $region22: #{tpu_custom_call.1} parent=11 // pred_check_branch
          %305 = sbr.rel (%p303) target = $region24
        $region23: #{tpu_custom_call.1} parent=11 // pred_region
          _
        $region24: #{tpu_custom_call.1} parent=11 // pred_fallthru
          _
        // Predicated region
        $region25: #{tpu_custom_call.1} parent=11 // pred_check
          %p306 = pneg %p130
        $region26: #{tpu_custom_call.1} parent=11 // pred_check_branch
          %308 = sbr.rel (%p306) target = $region28
        $region27: #{tpu_custom_call.1} parent=11 // pred_region
          _
        $region28: #{tpu_custom_call.1} parent=11 // pred_fallthru
          _
        // Predicated region
        $region29: #{tpu_custom_call.1} parent=11 // pred_check
          %p309 = pneg %p151
        $region30: #{tpu_custom_call.1} parent=11 // pred_check_branch
          %311 = sbr.rel (%p309) target = $region32
        $region31: #{tpu_custom_call.1} parent=11 // pred_region
          _
        $region32: #{tpu_custom_call.1} parent=11 // pred_fallthru
          _
        // Predicated region
        $region33: #{tpu_custom_call.1} parent=11 // pred_check
          %p312 = pneg %p172
        $region34: #{tpu_custom_call.1} parent=11 // pred_check_branch
          %314 = sbr.rel (%p312) target = $region36
        $region35: #{tpu_custom_call.1} parent=11 // pred_region
          _
        $region36: #{tpu_custom_call.1} parent=11 // pred_fallthru
          _
        // Predicated region
        $region37: #{tpu_custom_call.1} parent=11 // pred_check
          %p315 = pneg %p193
        $region38: #{tpu_custom_call.1} parent=11 // pred_check_branch
          %317 = sbr.rel (%p315) target = $region40
        $region39: #{tpu_custom_call.1} parent=11 // pred_region
          _
        $region40: #{tpu_custom_call.1} parent=11 // pred_fallthru
          _
        // Predicated region
        $region41: #{tpu_custom_call.1} parent=11 // pred_check
          %p318 = pneg %p214
        $region42: #{tpu_custom_call.1} parent=11 // pred_check_branch
          %320 = sbr.rel (%p318) target = $region44
        $region43: #{tpu_custom_call.1} parent=11 // pred_region
          _
        $region44: #{tpu_custom_call.1} parent=11 // pred_fallthru
          _
        // Predicated region
        $region45: #{tpu_custom_call.1} parent=11 // pred_check
          %p321 = pneg %p235
        $region46: #{tpu_custom_call.1} parent=11 // pred_check_branch
          %323 = sbr.rel (%p321) target = $region48
        $region47: #{tpu_custom_call.1} parent=11 // pred_region
          _
        $region48: #{tpu_custom_call.1} parent=11 // pred_fallthru
          _
        // Predicated region
        $region49: #{tpu_custom_call.1} parent=11 // pred_check
          %p324 = pneg %p256
        $region50: #{tpu_custom_call.1} parent=11 // pred_check_branch
          %326 = sbr.rel (%p324) target = $region52
        $region51: #{tpu_custom_call.1} parent=11 // pred_region
          _
        $region52: #{tpu_custom_call.1} parent=11 // pred_fallthru
          _
      $region12: #{tpu_custom_call.1} parent=5 // pred_fallthru
        _
      %p327 = scmp.lt.s32.totalorder %s20, 2
      // Predicated region
      $region53: #{tpu_custom_call.1} parent=5 // pred_check
        %p328 = pneg %p327
      $region54: #{tpu_custom_call.1} parent=5 // pred_check_branch
        %330 = sbr.rel (%p328) target = $region56
      $region55: #{tpu_custom_call.1} parent=5 // pred_region
        // Predicated region
        $region57: #{tpu_custom_call.1} parent=55 // pred_check
          %p331 = pneg %p40
        $region58: #{tpu_custom_call.1} parent=55 // pred_check_branch
          %333 = sbr.rel (%p331) target = $region60
        $region59: #{tpu_custom_call.1} parent=55 // pred_region
          %p334 = scmp.lt.s32.totalorder %s20, 1
          %s335 = scalar_select %p334, %s20, 1
          %s336 = smul.addr %s335, 4
          %s337 = smul.addr %s336, 4
          %s338 = scalar_lea.vmem %s0, %s337
        $region60: #{tpu_custom_call.1} parent=55 // pred_fallthru
          _
      $region56: #{tpu_custom_call.1} parent=5 // pred_fallthru
        _
      %p339 = scmp.le.s32.totalorder 1, %s20
      %p340 = scmp.lt.s32.totalorder %s20, 3
      %p341 = pnand %p339, %p340
      %p342 = pneg %p341
      // Predicated region
      $region61: #{tpu_custom_call.1} parent=5 // pred_check
        _
      $region62: #{tpu_custom_call.1} parent=5 // pred_check_branch
        %344 = sbr.rel (%p341) target = $region64
      $region63: #{tpu_custom_call.1} parent=5 // pred_region
        %s345 = ssub.s32 %s20, 1
        %p346 = scmp.lt.s32.totalorder %s25, 1
        %s347 = scalar_select %p346, %s25, 1
        %s348 = smul.addr %s347, 4
        %s349 = smul.addr %s348, 4
        %s350 = scalar_lea.vmem %s0, %s349
        %p351 = pneg %p46
        %p352 = pneg %p43
        %p353 = pneg %p67
        %p354 = pneg %p64
        %p355 = pneg %p88
        %p356 = pneg %p85
        %p357 = pneg %p109
        %p358 = pneg %p106
        %p359 = pneg %p130
        %p360 = pneg %p127
        %p361 = pneg %p151
        %p362 = pneg %p148
        %p363 = pneg %p172
        %p364 = pneg %p169
        %p365 = pneg %p193
        %p366 = pneg %p190
        %p367 = pneg %p214
        %p368 = pneg %p211
        %p369 = pneg %p235
        %p370 = pneg %p232
        %p371 = pneg %p256
        %p372 = pneg %p253
        %p373 = pneg %p282
        %p374 = pneg %p279
        %s375 = sand.u32 %s269, 1
        %s376 = scalar_lea.sflag [#allocation6], %s375
        %s377 = sand.u32 %s269, 1
        %s378 = smul.addr %s377, 32
        %s379 = scalar_lea.vmem [#allocation5], %s378
        %p380 = scmp.lt.s32.totalorder %s25, 1
        %s381 = scalar_select %p380, %s25, 1
        %s382 = smul.addr %s381, 4
        %s383 = smul.addr %s382, 4
        %s384 = scalar_lea.vmem %s0, %s383
        %386 = vst [vmem:[#allocation2] sm:$0xff] 0
        %387 = vst [vmem:[#allocation2 + $0x18] sm:$0xff] 0
        %v388 = vld [vmem:[%s1] sm:$0x5]
        %v389 = vld [vmem:[%s384] sm:$0xff]
        %v390 = vld [vmem:[%s384 + $0x8] sm:$0xff]
        %v391 = vld [vmem:[%s4] sm:$0xf]
        %v392 = vld [vmem:[%s4 + $0x4] sm:$0xf]
        %v395 = vunpack.c.l.b16 %v391
        %v396 = vunpack.c.l.b16 %v392
        %v397 = vpack.c.b16 %v396, %v395
        %v400 = vunpack.c.l.b16 %v389
        %v401 = vunpack.c.h.b16 %v389
        %v402 = vunpack.c.l.b16 %v390
        %v403 = vunpack.c.h.b16 %v390
        %v404 = vpack.c.b16 %v402, %v400
        %v405 = vpack.c.b16 %v403, %v401
        %vm408 = vcmask 130048
        %v410 = vsel %vm408, %v397, 0
        %412 = vmatprep.subr.bf16.mxu0 %v405
        %413 = vmatpush1.bf16.msra.mxu0 %v404
        %414 = vmatprep.subr.bf16.mxu0 0
        %415 = vmatpush1.bf16.msra.mxu0 0
        %416 = vmatprep.subr.bf16.mxu0 0
        %417 = vmatpush1.bf16.msra.mxu0 0
        %418 = vmatprep.subr.bf16.mxu0 0
        %419 = vmatpush1.bf16.msra.mxu0 0
        %420 = vmatprep.subr.bf16.mxu0 0
        %421 = vmatpush1.bf16.msra.mxu0 0
        %422 = vmatprep.subr.bf16.mxu0 0
        %423 = vmatpush1.bf16.msra.mxu0 0
        %424 = vmatprep.subr.bf16.mxu0 0
        %425 = vmatpush1.bf16.msra.mxu0 0
        %426 = vmatprep.subr.bf16.mxu0 0
        %427 = vmatpush1.bf16.msra.mxu0 0
        %428 = vmatprep.subr.bf16.mxu0 0
        %429 = vmatpush1.bf16.msra.mxu0 0
        %430 = vmatprep.subr.bf16.mxu0 0
        %431 = vmatpush1.bf16.msra.mxu0 0
        %432 = vmatprep.subr.bf16.mxu0 0
        %433 = vmatpush1.bf16.msra.mxu0 0
        %434 = vmatprep.subr.bf16.mxu0 0
        %435 = vmatpush1.bf16.msra.mxu0 0
        %436 = vmatprep.subr.bf16.mxu0 0
        %437 = vmatpush1.bf16.msra.mxu0 0
        %438 = vmatprep.subr.bf16.mxu0 0
        %439 = vmatpush1.bf16.msra.mxu0 0
        %440 = vmatprep.subr.bf16.mxu0 0
        %441 = vmatpush1.bf16.msra.mxu0 0
        %442 = vmatprep.subr.bf16.mxu0 0
        %443 = vmatpush1.bf16.msra.mxu0 0
        %444 = vmatprep.mubr.bf16.mxu0 0
        %445 = vmatmul.mubr.bf16.gmra.mrb[0].mxu0 %v410
        %v446 = vpop.f32.mrb[0].mxu0
        %v447 = vadd.f32 0.0, %v446
        %v448 = vpop.f32.mrb[0].mxu0
        %v449 = vadd.f32 0.0, %v448
        %v450 = vpop.f32.mrb[0].mxu0
        %v451 = vadd.f32 0.0, %v450
        %v452 = vpop.f32.mrb[0].mxu0
        %v453 = vadd.f32 0.0, %v452
        %454 = vdwg.mxu0
        %455 = vst [vmem:[#allocation4] sm:$0xff] %v447
        %456 = vst [vmem:[#allocation4 + $0x8] sm:$0xff] %v449
        %457 = vst [vmem:[#allocation4 + $0x10] sm:$0xff] %v451
        %458 = vst [vmem:[#allocation4 + $0x18] sm:$0xff] %v453
        %459 = vst [vmem:[#allocation2 + $0x8] sm:$0xff] %v404
        %460 = vst [vmem:[#allocation2 + $0x10] sm:$0xff] %v405
        %v461 = vld [vmem:[#allocation2] sm:$0xff]
        %v462 = vld [vmem:[#allocation2 + $0x8] sm:$0xff]
        %v463 = vld [vmem:[#allocation2 + $0x10] sm:$0xff]
        %v466 = vunpack.c.l.s4 1983009808
        %v467 = vunpack.c.0.s8 %v466
        %v468 = vlaneseq
        %v469 = vshrl.u32 %v468, 7
        %v470 = vsub.s32 %v467, %v469
        %v471 = vrot.slane %v388, %v470
        %v472 = vcombine.high %v471, %v471
        %v474 = vpack.i.b16 %v471, %v471
        %v476 = vlaneseq
        %v477 = vshrl.u32 %v476, 7
        %v478 = vsub.s32 0, %v477
        %v479 = vrot.slane %v474, %v478
        %v481 = vpack.i.b16 %v472, %v472
        %v483 = vlaneseq
        %v484 = vshrl.u32 %v483, 7
        %v485 = vsub.s32 0, %v484
        %v486 = vrot.slane %v481, %v485
        %489 = vrot.lane.b32.xlu0 %v479, 111
        %v490 = vpop.permute.xlu0 %489
        %491 = vrot.lane.b32.xlu0 %v486, 111
        %v492 = vpop.permute.xlu0 %491
        %vm493 = vcmask 908288
        %v494 = vsel %vm493, %v490, %v492
        %v498 = vmul.bf16 %v461, %v490
        %v499 = vmul.bf16 %v462, %v494
        %v500 = vmul.bf16 %v463, %v492
        %504 = vrot.lane.b32.xlu0 %v498, 17
        %v505 = vpop.permute.xlu0 %504
        %506 = vrot.lane.b32.xlu0 %v499, 17
        %v507 = vpop.permute.xlu0 %506
        %508 = vrot.lane.b32.xlu0 %v500, 17
        %v509 = vpop.permute.xlu0 %508
        %vm510 = vcmask 138240
        %v511 = vsel %vm510, %v505, %v507
        %v512 = vsel %vm510, %v507, %v509
        %515 = vst [vmem:[#allocation3] sm:$0xff] %v511
        %516 = vst [vmem:[#allocation3 + $0x8] sm:$0xff] %v512
        %v517 = vld [vmem:[#allocation2] sm:$0xff]
        %v518 = vld [vmem:[#allocation2 + $0x8] sm:$0xff]
        %v519 = vld [vmem:[#allocation2 + $0x10] sm:$0xff]
        %523 = vrot.lane.b32.xlu0 %v517, 16
        %v524 = vpop.permute.xlu0 %523
        %525 = vrot.lane.b32.xlu0 %v518, 16
        %v526 = vpop.permute.xlu0 %525
        %527 = vrot.lane.b32.xlu0 %v519, 16
        %v528 = vpop.permute.xlu0 %527
        %vm529 = vcmask 130048
        %v530 = vsel %vm529, %v524, %v526
        %v531 = vsel %vm529, %v526, %v528
        %534 = vst [vmem:[#allocation3 + $0x10] sm:$0xff] %v530
        %535 = vst [vmem:[#allocation3 + $0x18] sm:$0xff] %v531
        %v536 = vld [vmem:[#allocation2] sm:$0xff]
        %v537 = vld [vmem:[#allocation2 + $0x8] sm:$0xff]
        %v538 = vld [vmem:[#allocation2 + $0x10] sm:$0xff]
        %v539 = vshrl.u32 %v471, 16
        %v540 = vpack.i.b16 %v539, %v539
        %v542 = vlaneseq
        %v543 = vshrl.u32 %v542, 7
        %v544 = vsub.s32 0, %v543
        %v545 = vrot.slane %v540, %v544
        %v546 = vshrl.u32 %v472, 16
        %v547 = vpack.i.b16 %v546, %v546
        %v549 = vlaneseq
        %v550 = vshrl.u32 %v549, 7
        %v551 = vsub.s32 0, %v550
        %v552 = vrot.slane %v547, %v551
        %555 = vrot.lane.b32.xlu0 %v545, 113
        %v556 = vpop.permute.xlu0 %555
        %557 = vrot.lane.b32.xlu0 %v552, 113
        %v558 = vpop.permute.xlu0 %557
        %vm559 = vcmask 924672
        %v560 = vsel %vm559, %v556, %v558
        %v564 = vmul.bf16 %v536, %v556
        %v565 = vmul.bf16 %v537, %v560
        %v566 = vmul.bf16 %v538, %v558
        %570 = vrot.lane.b32.xlu0 %v564, 15
        %v571 = vpop.permute.xlu0 %570
        %572 = vrot.lane.b32.xlu0 %v565, 15
        %v573 = vpop.permute.xlu0 %572
        %574 = vrot.lane.b32.xlu0 %v566, 15
        %v575 = vpop.permute.xlu0 %574
        %vm576 = vcmask 121856
        %v577 = vsel %vm576, %v571, %v573
        %v578 = vsel %vm576, %v573, %v575
        %581 = vst [vmem:[#allocation3 + $0x20] sm:$0xff] %v577
        %582 = vst [vmem:[#allocation3 + $0x28] sm:$0xff] %v578
        %v583 = vld [vmem:[#allocation2] sm:$0xff]
        %v584 = vld [vmem:[#allocation2 + $0x8] sm:$0xff]
        %v585 = vld [vmem:[#allocation2 + $0x10] sm:$0xff]
        %586 = vrot.lane.b32.xlu0 %v479, 127
        %v587 = vpop.permute.xlu0 %586
        %588 = vrot.lane.b32.xlu0 %v486, 127
        %v589 = vpop.permute.xlu0 %588
        %vm590 = vcmask 1039360
        %v591 = vsel %vm590, %v587, %v589
        %v595 = vmul.bf16 %v583, %v587
        %v596 = vmul.bf16 %v584, %v591
        %v597 = vmul.bf16 %v585, %v589
        %601 = vrot.lane.b32.xlu0 %v595, 1
        %v602 = vpop.permute.xlu0 %601
        %603 = vrot.lane.b32.xlu0 %v596, 1
        %v604 = vpop.permute.xlu0 %603
        %605 = vrot.lane.b32.xlu0 %v597, 1
        %v606 = vpop.permute.xlu0 %605
        %vm607 = vcmask 7168
        %v608 = vsel %vm607, %v602, %v604
        %v609 = vsel %vm607, %v604, %v606
        %612 = vst [vmem:[#allocation3 + $0x30] sm:$0xff] %v608
        %613 = vst [vmem:[#allocation3 + $0x38] sm:$0xff] %v609
        %v614 = vld [vmem:[#allocation2 + $0x8] sm:$0xff]
        %v615 = vld [vmem:[#allocation2 + $0x10] sm:$0xff]
        %616 = vst [vmem:[#allocation3 + $0x40] sm:$0xff] %v614
        %617 = vst [vmem:[#allocation3 + $0x48] sm:$0xff] %v615
        %v618 = vld [vmem:[#allocation2 + $0x8] sm:$0xff]
        %v619 = vld [vmem:[#allocation2 + $0x10] sm:$0xff]
        %v620 = vld [vmem:[#allocation2 + $0x18] sm:$0xff]
        %621 = vrot.lane.b32.xlu0 %v545, 1
        %v622 = vpop.permute.xlu0 %621
        %623 = vrot.lane.b32.xlu0 %v552, 1
        %v624 = vpop.permute.xlu0 %623
        %v625 = vsel %vm607, %v622, %v624
        %v629 = vmul.bf16 %v618, %v622
        %v630 = vmul.bf16 %v619, %v625
        %v631 = vmul.bf16 %v620, %v624
        %635 = vrot.lane.b32.xlu0 %v629, 127
        %v636 = vpop.permute.xlu0 %635
        %637 = vrot.lane.b32.xlu0 %v630, 127
        %v638 = vpop.permute.xlu0 %637
        %639 = vrot.lane.b32.xlu0 %v631, 127
        %v640 = vpop.permute.xlu0 %639
        %v641 = vsel %vm590, %v636, %v638
        %v642 = vsel %vm590, %v638, %v640
        %645 = vst [vmem:[#allocation3 + $0x50] sm:$0xff] %v641
        %646 = vst [vmem:[#allocation3 + $0x58] sm:$0xff] %v642
        %v647 = vld [vmem:[#allocation2 + $0x8] sm:$0xff]
        %v648 = vld [vmem:[#allocation2 + $0x10] sm:$0xff]
        %v649 = vld [vmem:[#allocation2 + $0x18] sm:$0xff]
        %650 = vrot.lane.b32.xlu0 %v479, 15
        %v651 = vpop.permute.xlu0 %650
        %652 = vrot.lane.b32.xlu0 %v486, 15
        %v653 = vpop.permute.xlu0 %652
        %v654 = vsel %vm576, %v651, %v653
        %v658 = vmul.bf16 %v647, %v651
        %v659 = vmul.bf16 %v648, %v654
        %v660 = vmul.bf16 %v649, %v653
        %664 = vrot.lane.b32.xlu0 %v658, 113
        %v665 = vpop.permute.xlu0 %664
        %666 = vrot.lane.b32.xlu0 %v659, 113
        %v667 = vpop.permute.xlu0 %666
        %668 = vrot.lane.b32.xlu0 %v660, 113
        %v669 = vpop.permute.xlu0 %668
        %v670 = vsel %vm559, %v665, %v667
        %v671 = vsel %vm559, %v667, %v669
        %674 = vst [vmem:[#allocation3 + $0x60] sm:$0xff] %v670
        %675 = vst [vmem:[#allocation3 + $0x68] sm:$0xff] %v671
        %v676 = vld [vmem:[#allocation2 + $0x8] sm:$0xff]
        %v677 = vld [vmem:[#allocation2 + $0x10] sm:$0xff]
        %v678 = vld [vmem:[#allocation2 + $0x18] sm:$0xff]
        %682 = vrot.lane.b32.xlu0 %v676, 112
        %v683 = vpop.permute.xlu0 %682
        %684 = vrot.lane.b32.xlu0 %v677, 112
        %v685 = vpop.permute.xlu0 %684
        %686 = vrot.lane.b32.xlu0 %v678, 112
        %v687 = vpop.permute.xlu0 %686
        %vm688 = vcmask 916480
        %v689 = vsel %vm688, %v683, %v685
        %v690 = vsel %vm688, %v685, %v687
        %693 = vst [vmem:[#allocation3 + $0x70] sm:$0xff] %v689
        %694 = vst [vmem:[#allocation3 + $0x78] sm:$0xff] %v690
        %v695 = vld [vmem:[#allocation2 + $0x8] sm:$0xff]
        %v696 = vld [vmem:[#allocation2 + $0x10] sm:$0xff]
        %v697 = vld [vmem:[#allocation2 + $0x18] sm:$0xff]
        %698 = vrot.lane.b32.xlu0 %v545, 17
        %v699 = vpop.permute.xlu0 %698
        %700 = vrot.lane.b32.xlu0 %v552, 17
        %v701 = vpop.permute.xlu0 %700
        %v702 = vsel %vm510, %v699, %v701
        %v706 = vmul.bf16 %v695, %v699
        %v707 = vmul.bf16 %v696, %v702
        %v708 = vmul.bf16 %v697, %v701
        %712 = vrot.lane.b32.xlu0 %v706, 111
        %v713 = vpop.permute.xlu0 %712
        %714 = vrot.lane.b32.xlu0 %v707, 111
        %v715 = vpop.permute.xlu0 %714
        %716 = vrot.lane.b32.xlu0 %v708, 111
        %v717 = vpop.permute.xlu0 %716
        %v718 = vsel %vm493, %v713, %v715
        %v719 = vsel %vm493, %v715, %v717
        %722 = vst [vmem:[#allocation3 + $0x80] sm:$0xff] %v718
        %723 = vst [vmem:[#allocation3 + $0x88] sm:$0xff] %v719
        %v724 = vld [vmem:[%s2] sm:$0xff]
        %v725 = vld [vmem:[#allocation3] sm:$0xff]
        %v726 = vld [vmem:[#allocation3 + $0x8] sm:$0xff]
        %v727 = vld [vmem:[#allocation3 + $0x10] sm:$0xff]
        %v728 = vld [vmem:[#allocation3 + $0x18] sm:$0xff]
        %v729 = vld [vmem:[#allocation3 + $0x20] sm:$0xff]
        %v730 = vld [vmem:[#allocation3 + $0x28] sm:$0xff]
        %v731 = vld [vmem:[#allocation3 + $0x30] sm:$0xff]
        %v732 = vld [vmem:[#allocation3 + $0x38] sm:$0xff]
        %v733 = vld [vmem:[#allocation3 + $0x40] sm:$0xff]
        %v734 = vld [vmem:[#allocation3 + $0x48] sm:$0xff]
        %v735 = vld [vmem:[#allocation3 + $0x50] sm:$0xff]
        %v736 = vld [vmem:[#allocation3 + $0x58] sm:$0xff]
        %v737 = vld [vmem:[#allocation3 + $0x60] sm:$0xff]
        %v738 = vld [vmem:[#allocation3 + $0x68] sm:$0xff]
        %v739 = vld [vmem:[#allocation3 + $0x70] sm:$0xff]
        %v740 = vld [vmem:[#allocation3 + $0x78] sm:$0xff]
        %v741 = vld [vmem:[#allocation3 + $0x80] sm:$0xff]
        %v742 = vld [vmem:[#allocation3 + $0x88] sm:$0xff]
        %v743 = vld [vmem:[%s3] sm:$0xff]
        %745 = vset.pattern.permute.xlu0 0
        %746 = vperm.xlu0 %745, %v743
        %v747 = vpop.permute.xlu0 %746
        %v750 = vunpack.c.l.b16 %v724
        %v751 = vunpack.c.h.b16 %v724
        %v752 = vpack.c.b16 %v750, %v750
        %v753 = vpack.c.b16 %v751, %v751
        %v756 = vsel %vm408, %v753, 0
        %758 = vmatprep.subr.bf16.mxu0 %v726
        %759 = vmatpush1.bf16.msra.mxu0 %v725
        %760 = vmatprep.subr.bf16.mxu0 %v728
        %761 = vmatpush1.bf16.msra.mxu0 %v727
        %762 = vmatprep.subr.bf16.mxu0 %v730
        %763 = vmatpush1.bf16.msra.mxu0 %v729
        %764 = vmatprep.subr.bf16.mxu0 %v732
        %765 = vmatpush1.bf16.msra.mxu0 %v731
        %766 = vmatprep.subr.bf16.mxu0 %v734
        %767 = vmatpush1.bf16.msra.mxu0 %v733
        %768 = vmatprep.subr.bf16.mxu0 %v736
        %769 = vmatpush1.bf16.msra.mxu0 %v735
        %770 = vmatprep.subr.bf16.mxu0 %v738
        %771 = vmatpush1.bf16.msra.mxu0 %v737
        %772 = vmatprep.subr.bf16.mxu0 %v740
        %773 = vmatpush1.bf16.msra.mxu0 %v739
        %774 = vmatprep.subr.bf16.mxu0 %v742
        %775 = vmatpush1.bf16.msra.mxu0 %v741
        %776 = vmatprep.subr.bf16.mxu0 0
        %777 = vmatpush1.bf16.msra.mxu0 0
        %778 = vmatprep.subr.bf16.mxu0 0
        %779 = vmatpush1.bf16.msra.mxu0 0
        %780 = vmatprep.subr.bf16.mxu0 0
        %781 = vmatpush1.bf16.msra.mxu0 0
        %782 = vmatprep.subr.bf16.mxu0 0
        %783 = vmatpush1.bf16.msra.mxu0 0
        %784 = vmatprep.subr.bf16.mxu0 0
        %785 = vmatpush1.bf16.msra.mxu0 0
        %786 = vmatprep.subr.bf16.mxu0 0
        %787 = vmatpush1.bf16.msra.mxu0 0
        %788 = vmatprep.subr.bf16.mxu0 0
        %789 = vmatpush1.bf16.msra.mxu0 0
        %790 = vmatprep.mubr.bf16.mxu0 %v756
        %791 = vmatmul.mubr.bf16.gmra.mrb[0].mxu0 %v752
        %v792 = vpop.f32.mrb[0].mxu0
        %v793 = vadd.f32 %v747, %v792
        %v794 = vpop.f32.mrb[0].mxu0
        %v795 = vadd.f32 %v747, %v794
        %v796 = vpop.f32.mrb[0].mxu0
        %v797 = vpop.f32.mrb[0].mxu0
        %798 = vdwg.mxu0
        %v799 = vmax.f32 %v793, 0.0
        %v800 = vmax.f32 %v795, 0.0
        %v801 = vpack.c.bf16 %v799, %v799
        %v802 = vpack.c.bf16 %v800, %v800
        %v803 = vld [vmem:[#allocation4] sm:$0xff]
        %v804 = vld [vmem:[#allocation4 + $0x8] sm:$0xff]
        %v805 = vld [vmem:[#allocation4 + $0x10] sm:$0xff]
        %v806 = vld [vmem:[#allocation4 + $0x18] sm:$0xff]
        %v807 = vld [vmem:[%s5] sm:$0xf]
        %v808 = vld [vmem:[%s5 + $0x4] sm:$0xf]
        %v811 = vunpack.c.l.b16 %v807
        %v812 = vunpack.c.l.b16 %v808
        %v813 = vpack.c.b16 %v812, %v811
        %vm814 = vcmask 64512
        %v816 = vsel %vm814, %v813, 0
        %vm818 = vcmask 1043456
        %v820 = vsel %vm818, %v801, 0
        %v823 = vsel %vm818, %v802, 0
        %825 = vmatprep.subr.bf16.mxu0 %v823
        %826 = vmatpush1.bf16.msra.mxu0 %v820
        %827 = vmatprep.subr.bf16.mxu0 0
        %828 = vmatpush1.bf16.msra.mxu0 0
        %829 = vmatprep.subr.bf16.mxu0 0
        %830 = vmatpush1.bf16.msra.mxu0 0
        %831 = vmatprep.subr.bf16.mxu0 0
        %832 = vmatpush1.bf16.msra.mxu0 0
        %833 = vmatprep.subr.bf16.mxu0 0
        %834 = vmatpush1.bf16.msra.mxu0 0
        %835 = vmatprep.subr.bf16.mxu0 0
        %836 = vmatpush1.bf16.msra.mxu0 0
        %837 = vmatprep.subr.bf16.mxu0 0
        %838 = vmatpush1.bf16.msra.mxu0 0
        %839 = vmatprep.subr.bf16.mxu0 0
        %840 = vmatpush1.bf16.msra.mxu0 0
        %841 = vmatprep.subr.bf16.mxu0 0
        %842 = vmatpush1.bf16.msra.mxu0 0
        %843 = vmatprep.subr.bf16.mxu0 0
        %844 = vmatpush1.bf16.msra.mxu0 0
        %845 = vmatprep.subr.bf16.mxu0 0
        %846 = vmatpush1.bf16.msra.mxu0 0
        %847 = vmatprep.subr.bf16.mxu0 0
        %848 = vmatpush1.bf16.msra.mxu0 0
        %849 = vmatprep.subr.bf16.mxu0 0
        %850 = vmatpush1.bf16.msra.mxu0 0
        %851 = vmatprep.subr.bf16.mxu0 0
        %852 = vmatpush1.bf16.msra.mxu0 0
        %853 = vmatprep.subr.bf16.mxu0 0
        %854 = vmatpush1.bf16.msra.mxu0 0
        %855 = vmatprep.subr.bf16.mxu0 0
        %856 = vmatpush1.bf16.msra.mxu0 0
        %857 = vmatprep.mubr.bf16.mxu0 0
        %858 = vmatmul.mubr.bf16.gmra.mrb[0].mxu0 %v816
        %v859 = vpop.f32.mrb[0].mxu0
        %v860 = vadd.f32 0.0, %v859
        %v861 = vpop.f32.mrb[0].mxu0
        %v862 = vadd.f32 0.0, %v861
        %v863 = vpop.f32.mrb[0].mxu0
        %v864 = vadd.f32 0.0, %v863
        %v865 = vpop.f32.mrb[0].mxu0
        %v866 = vadd.f32 0.0, %v865
        %867 = vdwg.mxu0
        %v868 = vadd.f32 %v803, %v860
        %v869 = vadd.f32 %v804, %v862
        %v870 = vadd.f32 %v805, %v864
        %v871 = vadd.f32 %v806, %v866
        %872 = vst [vmem:[#allocation4] sm:$0xff] %v868
        %873 = vst [vmem:[#allocation4 + $0x8] sm:$0xff] %v869
        %874 = vst [vmem:[#allocation4 + $0x10] sm:$0xff] %v870
        %875 = vst [vmem:[#allocation4 + $0x18] sm:$0xff] %v871
        %876 = vst [vmem:[#allocation2 + $0x8] sm:$0xf] %v801
        %877 = vst [vmem:[#allocation2 + $0x10] sm:$0xf] %v802
        %v878 = vld [vmem:[#allocation2] sm:$0xf]
        %v879 = vld [vmem:[#allocation2 + $0x8] sm:$0xf]
        %v880 = vld [vmem:[#allocation2 + $0x10] sm:$0xf]
        %v881 = vmul.bf16 %v878, %v490
        %v882 = vmul.bf16 %v879, %v494
        %v883 = vmul.bf16 %v880, %v492
        %887 = vrot.lane.b32.xlu0 %v881, 17
        %v888 = vpop.permute.xlu0 %887
        %889 = vrot.lane.b32.xlu0 %v882, 17
        %v890 = vpop.permute.xlu0 %889
        %891 = vrot.lane.b32.xlu0 %v883, 17
        %v892 = vpop.permute.xlu0 %891
        %v893 = vsel %vm510, %v888, %v890
        %v894 = vsel %vm510, %v890, %v892
        %897 = vst [vmem:[#allocation3] sm:$0xf] %v893
        %898 = vst [vmem:[#allocation3 + $0x8] sm:$0xf] %v894
        %v899 = vld [vmem:[#allocation2] sm:$0xf]
        %v900 = vld [vmem:[#allocation2 + $0x8] sm:$0xf]
        %v901 = vld [vmem:[#allocation2 + $0x10] sm:$0xf]
        %905 = vrot.lane.b32.xlu0 %v899, 16
        %v906 = vpop.permute.xlu0 %905
        %907 = vrot.lane.b32.xlu0 %v900, 16
        %v908 = vpop.permute.xlu0 %907
        %909 = vrot.lane.b32.xlu0 %v901, 16
        %v910 = vpop.permute.xlu0 %909
        %v911 = vsel %vm529, %v906, %v908
        %v912 = vsel %vm529, %v908, %v910
        %915 = vst [vmem:[#allocation3 + $0x10] sm:$0xf] %v911
        %916 = vst [vmem:[#allocation3 + $0x18] sm:$0xf] %v912
        %v917 = vld [vmem:[#allocation2] sm:$0xf]
        %v918 = vld [vmem:[#allocation2 + $0x8] sm:$0xf]
        %v919 = vld [vmem:[#allocation2 + $0x10] sm:$0xf]
        %v920 = vmul.bf16 %v917, %v556
        %v921 = vmul.bf16 %v918, %v560
        %v922 = vmul.bf16 %v919, %v558
        %926 = vrot.lane.b32.xlu0 %v920, 15
        %v927 = vpop.permute.xlu0 %926
        %928 = vrot.lane.b32.xlu0 %v921, 15
        %v929 = vpop.permute.xlu0 %928
        %930 = vrot.lane.b32.xlu0 %v922, 15
        %v931 = vpop.permute.xlu0 %930
        %v932 = vsel %vm576, %v927, %v929
        %v933 = vsel %vm576, %v929, %v931
        %936 = vst [vmem:[#allocation3 + $0x20] sm:$0xf] %v932
        %937 = vst [vmem:[#allocation3 + $0x28] sm:$0xf] %v933
        %v938 = vld [vmem:[#allocation2] sm:$0xf]
        %v939 = vld [vmem:[#allocation2 + $0x8] sm:$0xf]
        %v940 = vld [vmem:[#allocation2 + $0x10] sm:$0xf]
        %v941 = vmul.bf16 %v938, %v587
        %v942 = vmul.bf16 %v939, %v591
        %v943 = vmul.bf16 %v940, %v589
        %947 = vrot.lane.b32.xlu0 %v941, 1
        %v948 = vpop.permute.xlu0 %947
        %949 = vrot.lane.b32.xlu0 %v942, 1
        %v950 = vpop.permute.xlu0 %949
        %951 = vrot.lane.b32.xlu0 %v943, 1
        %v952 = vpop.permute.xlu0 %951
        %v953 = vsel %vm607, %v948, %v950
        %v954 = vsel %vm607, %v950, %v952
        %957 = vst [vmem:[#allocation3 + $0x30] sm:$0xf] %v953
        %958 = vst [vmem:[#allocation3 + $0x38] sm:$0xf] %v954
        %v959 = vld [vmem:[#allocation2 + $0x8] sm:$0xf]
        %v960 = vld [vmem:[#allocation2 + $0x10] sm:$0xf]
        %961 = vst [vmem:[#allocation3 + $0x40] sm:$0xf] %v959
        %962 = vst [vmem:[#allocation3 + $0x48] sm:$0xf] %v960
        %v963 = vld [vmem:[#allocation2 + $0x8] sm:$0xf]
        %v964 = vld [vmem:[#allocation2 + $0x10] sm:$0xf]
        %v965 = vld [vmem:[#allocation2 + $0x18] sm:$0xf]
        %v966 = vmul.bf16 %v963, %v622
        %v967 = vmul.bf16 %v964, %v625
        %v968 = vmul.bf16 %v965, %v624
        %972 = vrot.lane.b32.xlu0 %v966, 127
        %v973 = vpop.permute.xlu0 %972
        %974 = vrot.lane.b32.xlu0 %v967, 127
        %v975 = vpop.permute.xlu0 %974
        %976 = vrot.lane.b32.xlu0 %v968, 127
        %v977 = vpop.permute.xlu0 %976
        %v978 = vsel %vm590, %v973, %v975
        %v979 = vsel %vm590, %v975, %v977
        %982 = vst [vmem:[#allocation3 + $0x50] sm:$0xf] %v978
        %983 = vst [vmem:[#allocation3 + $0x58] sm:$0xf] %v979
        %v984 = vld [vmem:[#allocation2 + $0x8] sm:$0xf]
        %v985 = vld [vmem:[#allocation2 + $0x10] sm:$0xf]
        %v986 = vld [vmem:[#allocation2 + $0x18] sm:$0xf]
        %v987 = vmul.bf16 %v984, %v651
        %v988 = vmul.bf16 %v985, %v654
        %v989 = vmul.bf16 %v986, %v653
        %993 = vrot.lane.b32.xlu0 %v987, 113
        %v994 = vpop.permute.xlu0 %993
        %995 = vrot.lane.b32.xlu0 %v988, 113
        %v996 = vpop.permute.xlu0 %995
        %997 = vrot.lane.b32.xlu0 %v989, 113
        %v998 = vpop.permute.xlu0 %997
        %v999 = vsel %vm559, %v994, %v996
        %v1000 = vsel %vm559, %v996, %v998
        %1003 = vst [vmem:[#allocation3 + $0x60] sm:$0xf] %v999
        %1004 = vst [vmem:[#allocation3 + $0x68] sm:$0xf] %v1000
        %v1005 = vld [vmem:[#allocation2 + $0x8] sm:$0xf]
        %v1006 = vld [vmem:[#allocation2 + $0x10] sm:$0xf]
        %v1007 = vld [vmem:[#allocation2 + $0x18] sm:$0xf]
        %1011 = vrot.lane.b32.xlu0 %v1005, 112
        %v1012 = vpop.permute.xlu0 %1011
        %1013 = vrot.lane.b32.xlu0 %v1006, 112
        %v1014 = vpop.permute.xlu0 %1013
        %1015 = vrot.lane.b32.xlu0 %v1007, 112
        %v1016 = vpop.permute.xlu0 %1015
        %v1017 = vsel %vm688, %v1012, %v1014
        %v1018 = vsel %vm688, %v1014, %v1016
        %1021 = vst [vmem:[#allocation3 + $0x70] sm:$0xf] %v1017
        %1022 = vst [vmem:[#allocation3 + $0x78] sm:$0xf] %v1018
        %v1023 = vld [vmem:[#allocation2 + $0x8] sm:$0xf]
        %v1024 = vld [vmem:[#allocation2 + $0x10] sm:$0xf]
        %v1025 = vld [vmem:[#allocation2 + $0x18] sm:$0xf]
        %v1026 = vmul.bf16 %v1023, %v699
        %v1027 = vmul.bf16 %v1024, %v702
        %v1028 = vmul.bf16 %v1025, %v701
        %1032 = vrot.lane.b32.xlu0 %v1026, 111
        %v1033 = vpop.permute.xlu0 %1032
        %1034 = vrot.lane.b32.xlu0 %v1027, 111
        %v1035 = vpop.permute.xlu0 %1034
        %1036 = vrot.lane.b32.xlu0 %v1028, 111
        %v1037 = vpop.permute.xlu0 %1036
        %v1038 = vsel %vm493, %v1033, %v1035
        %v1039 = vsel %vm493, %v1035, %v1037
        %1042 = vst [vmem:[#allocation3 + $0x80] sm:$0xf] %v1038
        %1043 = vst [vmem:[#allocation3 + $0x88] sm:$0xf] %v1039
        %s1044 = scalar_lea.vmem %s2, 8
        %v1045 = vld [vmem:[%s1044] sm:$0xff]
        %v1046 = vld [vmem:[#allocation3] sm:$0xff]
        %v1047 = vld [vmem:[#allocation3 + $0x8] sm:$0xff]
        %v1048 = vld [vmem:[#allocation3 + $0x10] sm:$0xff]
        %v1049 = vld [vmem:[#allocation3 + $0x18] sm:$0xff]
        %v1050 = vld [vmem:[#allocation3 + $0x20] sm:$0xff]
        %v1051 = vld [vmem:[#allocation3 + $0x28] sm:$0xff]
        %v1052 = vld [vmem:[#allocation3 + $0x30] sm:$0xff]
        %v1053 = vld [vmem:[#allocation3 + $0x38] sm:$0xff]
        %v1054 = vld [vmem:[#allocation3 + $0x40] sm:$0xff]
        %v1055 = vld [vmem:[#allocation3 + $0x48] sm:$0xff]
        %v1056 = vld [vmem:[#allocation3 + $0x50] sm:$0xff]
        %v1057 = vld [vmem:[#allocation3 + $0x58] sm:$0xff]
        %v1058 = vld [vmem:[#allocation3 + $0x60] sm:$0xff]
        %v1059 = vld [vmem:[#allocation3 + $0x68] sm:$0xff]
        %v1060 = vld [vmem:[#allocation3 + $0x70] sm:$0xff]
        %v1061 = vld [vmem:[#allocation3 + $0x78] sm:$0xff]
        %v1062 = vld [vmem:[#allocation3 + $0x80] sm:$0xff]
        %v1063 = vld [vmem:[#allocation3 + $0x88] sm:$0xff]
        %s1064 = scalar_lea.vmem %s3, 8
        %v1065 = vld [vmem:[%s1064] sm:$0xff]
        %1067 = vset.pattern.permute.xlu0 0
        %1068 = vperm.xlu0 %1067, %v1065
        %v1069 = vpop.permute.xlu0 %1068
        %v1072 = vunpack.c.l.b16 %v1045
        %v1073 = vunpack.c.h.b16 %v1045
        %v1074 = vpack.c.b16 %v1072, %v1072
        %v1075 = vpack.c.b16 %v1073, %v1073
        %v1078 = vsel %vm408, %v1075, 0
        %1080 = vmatprep.subr.bf16.mxu0 %v1047
        %1081 = vmatpush1.bf16.msra.mxu0 %v1046
        %1082 = vmatprep.subr.bf16.mxu0 %v1049
        %1083 = vmatpush1.bf16.msra.mxu0 %v1048
        %1084 = vmatprep.subr.bf16.mxu0 %v1051
        %1085 = vmatpush1.bf16.msra.mxu0 %v1050
        %1086 = vmatprep.subr.bf16.mxu0 %v1053
        %1087 = vmatpush1.bf16.msra.mxu0 %v1052
        %1088 = vmatprep.subr.bf16.mxu0 %v1055
        %1089 = vmatpush1.bf16.msra.mxu0 %v1054
        %1090 = vmatprep.subr.bf16.mxu0 %v1057
        %1091 = vmatpush1.bf16.msra.mxu0 %v1056
        %1092 = vmatprep.subr.bf16.mxu0 %v1059
        %1093 = vmatpush1.bf16.msra.mxu0 %v1058
        %1094 = vmatprep.subr.bf16.mxu0 %v1061
        %1095 = vmatpush1.bf16.msra.mxu0 %v1060
        %1096 = vmatprep.subr.bf16.mxu0 %v1063
        %1097 = vmatpush1.bf16.msra.mxu0 %v1062
        %1098 = vmatprep.subr.bf16.mxu0 0
        %1099 = vmatpush1.bf16.msra.mxu0 0
        %1100 = vmatprep.subr.bf16.mxu0 0
        %1101 = vmatpush1.bf16.msra.mxu0 0
        %1102 = vmatprep.subr.bf16.mxu0 0
        %1103 = vmatpush1.bf16.msra.mxu0 0
        %1104 = vmatprep.subr.bf16.mxu0 0
        %1105 = vmatpush1.bf16.msra.mxu0 0
        %1106 = vmatprep.subr.bf16.mxu0 0
        %1107 = vmatpush1.bf16.msra.mxu0 0
        %1108 = vmatprep.subr.bf16.mxu0 0
        %1109 = vmatpush1.bf16.msra.mxu0 0
        %1110 = vmatprep.subr.bf16.mxu0 0
        %1111 = vmatpush1.bf16.msra.mxu0 0
        %1112 = vmatprep.mubr.bf16.mxu0 %v1078
        %1113 = vmatmul.mubr.bf16.gmra.mrb[0].mxu0 %v1074
        %v1114 = vpop.f32.mrb[0].mxu0
        %v1115 = vadd.f32 %v1069, %v1114
        %v1116 = vpop.f32.mrb[0].mxu0
        %v1117 = vadd.f32 %v1069, %v1116
        %v1118 = vpop.f32.mrb[0].mxu0
        %v1119 = vpop.f32.mrb[0].mxu0
        %1120 = vdwg.mxu0
        %v1121 = vmax.f32 %v1115, 0.0
        %v1122 = vmax.f32 %v1117, 0.0
        %v1123 = vpack.c.bf16 %v1121, %v1121
        %v1124 = vpack.c.bf16 %v1122, %v1122
        %v1125 = vld [vmem:[#allocation4] sm:$0xff]
        %v1126 = vld [vmem:[#allocation4 + $0x8] sm:$0xff]
        %v1127 = vld [vmem:[#allocation4 + $0x10] sm:$0xff]
        %v1128 = vld [vmem:[#allocation4 + $0x18] sm:$0xff]
        %v1129 = vld [vmem:[%s6] sm:$0xf]
        %v1130 = vld [vmem:[%s6 + $0x4] sm:$0xf]
        %v1133 = vunpack.c.l.b16 %v1129
        %v1134 = vunpack.c.l.b16 %v1130
        %v1135 = vpack.c.b16 %v1134, %v1133
        %v1137 = vsel %vm814, %v1135, 0
        %v1140 = vsel %vm818, %v1123, 0
        %v1143 = vsel %vm818, %v1124, 0
        %1145 = vmatprep.subr.bf16.mxu0 %v1143
        %1146 = vmatpush1.bf16.msra.mxu0 %v1140
        %1147 = vmatprep.subr.bf16.mxu0 0
        %1148 = vmatpush1.bf16.msra.mxu0 0
        %1149 = vmatprep.subr.bf16.mxu0 0
        %1150 = vmatpush1.bf16.msra.mxu0 0
        %1151 = vmatprep.subr.bf16.mxu0 0
        %1152 = vmatpush1.bf16.msra.mxu0 0
        %1153 = vmatprep.subr.bf16.mxu0 0
        %1154 = vmatpush1.bf16.msra.mxu0 0
        %1155 = vmatprep.subr.bf16.mxu0 0
        %1156 = vmatpush1.bf16.msra.mxu0 0
        %1157 = vmatprep.subr.bf16.mxu0 0
        %1158 = vmatpush1.bf16.msra.mxu0 0
        %1159 = vmatprep.subr.bf16.mxu0 0
        %1160 = vmatpush1.bf16.msra.mxu0 0
        %1161 = vmatprep.subr.bf16.mxu0 0
        %1162 = vmatpush1.bf16.msra.mxu0 0
        %1163 = vmatprep.subr.bf16.mxu0 0
        %1164 = vmatpush1.bf16.msra.mxu0 0
        %1165 = vmatprep.subr.bf16.mxu0 0
        %1166 = vmatpush1.bf16.msra.mxu0 0
        %1167 = vmatprep.subr.bf16.mxu0 0
        %1168 = vmatpush1.bf16.msra.mxu0 0
        %1169 = vmatprep.subr.bf16.mxu0 0
        %1170 = vmatpush1.bf16.msra.mxu0 0
        %1171 = vmatprep.subr.bf16.mxu0 0
        %1172 = vmatpush1.bf16.msra.mxu0 0
        %1173 = vmatprep.subr.bf16.mxu0 0
        %1174 = vmatpush1.bf16.msra.mxu0 0
        %1175 = vmatprep.subr.bf16.mxu0 0
        %1176 = vmatpush1.bf16.msra.mxu0 0
        %1177 = vmatprep.mubr.bf16.mxu0 0
        %1178 = vmatmul.mubr.bf16.gmra.mrb[0].mxu0 %v1137
        %v1179 = vpop.f32.mrb[0].mxu0
        %v1180 = vadd.f32 0.0, %v1179
        %v1181 = vpop.f32.mrb[0].mxu0
        %v1182 = vadd.f32 0.0, %v1181
        %v1183 = vpop.f32.mrb[0].mxu0
        %v1184 = vadd.f32 0.0, %v1183
        %v1185 = vpop.f32.mrb[0].mxu0
        %v1186 = vadd.f32 0.0, %v1185
        %1187 = vdwg.mxu0
        %v1188 = vadd.f32 %v1125, %v1180
        %v1189 = vadd.f32 %v1126, %v1182
        %v1190 = vadd.f32 %v1127, %v1184
        %v1191 = vadd.f32 %v1128, %v1186
        %1192 = vst [vmem:[#allocation4] sm:$0xff] %v1188
        %1193 = vst [vmem:[#allocation4 + $0x8] sm:$0xff] %v1189
        %1194 = vst [vmem:[#allocation4 + $0x10] sm:$0xff] %v1190
        %1195 = vst [vmem:[#allocation4 + $0x18] sm:$0xff] %v1191
        %1196 = vst [vmem:[#allocation2 + $0x8] sm:$0xf] %v1123
        %1197 = vst [vmem:[#allocation2 + $0x10] sm:$0xf] %v1124
        %v1198 = vld [vmem:[#allocation2] sm:$0xf]
        %v1199 = vld [vmem:[#allocation2 + $0x8] sm:$0xf]
        %v1200 = vld [vmem:[#allocation2 + $0x10] sm:$0xf]
        %v1201 = vmul.bf16 %v1198, %v490
        %v1202 = vmul.bf16 %v1199, %v494
        %v1203 = vmul.bf16 %v1200, %v492
        %1207 = vrot.lane.b32.xlu0 %v1201, 17
        %v1208 = vpop.permute.xlu0 %1207
        %1209 = vrot.lane.b32.xlu0 %v1202, 17
        %v1210 = vpop.permute.xlu0 %1209
        %1211 = vrot.lane.b32.xlu0 %v1203, 17
        %v1212 = vpop.permute.xlu0 %1211
        %v1213 = vsel %vm510, %v1208, %v1210
        %v1214 = vsel %vm510, %v1210, %v1212
        %1217 = vst [vmem:[#allocation3] sm:$0xf] %v1213
        %1218 = vst [vmem:[#allocation3 + $0x8] sm:$0xf] %v1214
        %v1219 = vld [vmem:[#allocation2] sm:$0xf]
        %v1220 = vld [vmem:[#allocation2 + $0x8] sm:$0xf]
        %v1221 = vld [vmem:[#allocation2 + $0x10] sm:$0xf]
        %1225 = vrot.lane.b32.xlu0 %v1219, 16
        %v1226 = vpop.permute.xlu0 %1225
        %1227 = vrot.lane.b32.xlu0 %v1220, 16
        %v1228 = vpop.permute.xlu0 %1227
        %1229 = vrot.lane.b32.xlu0 %v1221, 16
        %v1230 = vpop.permute.xlu0 %1229
        %v1231 = vsel %vm529, %v1226, %v1228
        %v1232 = vsel %vm529, %v1228, %v1230
        %1235 = vst [vmem:[#allocation3 + $0x10] sm:$0xf] %v1231
        %1236 = vst [vmem:[#allocation3 + $0x18] sm:$0xf] %v1232
        %v1237 = vld [vmem:[#allocation2] sm:$0xf]
        %v1238 = vld [vmem:[#allocation2 + $0x8] sm:$0xf]
        %v1239 = vld [vmem:[#allocation2 + $0x10] sm:$0xf]
        %v1240 = vmul.bf16 %v1237, %v556
        %v1241 = vmul.bf16 %v1238, %v560
        %v1242 = vmul.bf16 %v1239, %v558
        %1246 = vrot.lane.b32.xlu0 %v1240, 15
        %v1247 = vpop.permute.xlu0 %1246
        %1248 = vrot.lane.b32.xlu0 %v1241, 15
        %v1249 = vpop.permute.xlu0 %1248
        %1250 = vrot.lane.b32.xlu0 %v1242, 15
        %v1251 = vpop.permute.xlu0 %1250
        %v1252 = vsel %vm576, %v1247, %v1249
        %v1253 = vsel %vm576, %v1249, %v1251
        %1256 = vst [vmem:[#allocation3 + $0x20] sm:$0xf] %v1252
        %1257 = vst [vmem:[#allocation3 + $0x28] sm:$0xf] %v1253
        %v1258 = vld [vmem:[#allocation2] sm:$0xf]
        %v1259 = vld [vmem:[#allocation2 + $0x8] sm:$0xf]
        %v1260 = vld [vmem:[#allocation2 + $0x10] sm:$0xf]
        %v1261 = vmul.bf16 %v1258, %v587
        %v1262 = vmul.bf16 %v1259, %v591
        %v1263 = vmul.bf16 %v1260, %v589
        %1267 = vrot.lane.b32.xlu0 %v1261, 1
        %v1268 = vpop.permute.xlu0 %1267
        %1269 = vrot.lane.b32.xlu0 %v1262, 1
        %v1270 = vpop.permute.xlu0 %1269
        %1271 = vrot.lane.b32.xlu0 %v1263, 1
        %v1272 = vpop.permute.xlu0 %1271
        %v1273 = vsel %vm607, %v1268, %v1270
        %v1274 = vsel %vm607, %v1270, %v1272
        %1277 = vst [vmem:[#allocation3 + $0x30] sm:$0xf] %v1273
        %1278 = vst [vmem:[#allocation3 + $0x38] sm:$0xf] %v1274
        %v1279 = vld [vmem:[#allocation2 + $0x8] sm:$0xf]
        %v1280 = vld [vmem:[#allocation2 + $0x10] sm:$0xf]
        %1281 = vst [vmem:[#allocation3 + $0x40] sm:$0xf] %v1279
        %1282 = vst [vmem:[#allocation3 + $0x48] sm:$0xf] %v1280
        %v1283 = vld [vmem:[#allocation2 + $0x8] sm:$0xf]
        %v1284 = vld [vmem:[#allocation2 + $0x10] sm:$0xf]
        %v1285 = vld [vmem:[#allocation2 + $0x18] sm:$0xf]
        %v1286 = vmul.bf16 %v1283, %v622
        %v1287 = vmul.bf16 %v1284, %v625
        %v1288 = vmul.bf16 %v1285, %v624
        %1292 = vrot.lane.b32.xlu0 %v1286, 127
        %v1293 = vpop.permute.xlu0 %1292
        %1294 = vrot.lane.b32.xlu0 %v1287, 127
        %v1295 = vpop.permute.xlu0 %1294
        %1296 = vrot.lane.b32.xlu0 %v1288, 127
        %v1297 = vpop.permute.xlu0 %1296
        %v1298 = vsel %vm590, %v1293, %v1295
        %v1299 = vsel %vm590, %v1295, %v1297
        %1302 = vst [vmem:[#allocation3 + $0x50] sm:$0xf] %v1298
        %1303 = vst [vmem:[#allocation3 + $0x58] sm:$0xf] %v1299
        %v1304 = vld [vmem:[#allocation2 + $0x8] sm:$0xf]
        %v1305 = vld [vmem:[#allocation2 + $0x10] sm:$0xf]
        %v1306 = vld [vmem:[#allocation2 + $0x18] sm:$0xf]
        %v1307 = vmul.bf16 %v1304, %v651
        %v1308 = vmul.bf16 %v1305, %v654
        %v1309 = vmul.bf16 %v1306, %v653
        %1313 = vrot.lane.b32.xlu0 %v1307, 113
        %v1314 = vpop.permute.xlu0 %1313
        %1315 = vrot.lane.b32.xlu0 %v1308, 113
        %v1316 = vpop.permute.xlu0 %1315
        %1317 = vrot.lane.b32.xlu0 %v1309, 113
        %v1318 = vpop.permute.xlu0 %1317
        %v1319 = vsel %vm559, %v1314, %v1316
        %v1320 = vsel %vm559, %v1316, %v1318
        %1323 = vst [vmem:[#allocation3 + $0x60] sm:$0xf] %v1319
        %1324 = vst [vmem:[#allocation3 + $0x68] sm:$0xf] %v1320
        %v1325 = vld [vmem:[#allocation2 + $0x8] sm:$0xf]
        %v1326 = vld [vmem:[#allocation2 + $0x10] sm:$0xf]
        %v1327 = vld [vmem:[#allocation2 + $0x18] sm:$0xf]
        %1331 = vrot.lane.b32.xlu0 %v1325, 112
        %v1332 = vpop.permute.xlu0 %1331
        %1333 = vrot.lane.b32.xlu0 %v1326, 112
        %v1334 = vpop.permute.xlu0 %1333
        %1335 = vrot.lane.b32.xlu0 %v1327, 112
        %v1336 = vpop.permute.xlu0 %1335
        %v1337 = vsel %vm688, %v1332, %v1334
        %v1338 = vsel %vm688, %v1334, %v1336
        %1341 = vst [vmem:[#allocation3 + $0x70] sm:$0xf] %v1337
        %1342 = vst [vmem:[#allocation3 + $0x78] sm:$0xf] %v1338
        %v1343 = vld [vmem:[#allocation2 + $0x8] sm:$0xf]
        %v1344 = vld [vmem:[#allocation2 + $0x10] sm:$0xf]
        %v1345 = vld [vmem:[#allocation2 + $0x18] sm:$0xf]
        %v1346 = vmul.bf16 %v1343, %v699
        %v1347 = vmul.bf16 %v1344, %v702
        %v1348 = vmul.bf16 %v1345, %v701
        %1352 = vrot.lane.b32.xlu0 %v1346, 111
        %v1353 = vpop.permute.xlu0 %1352
        %1354 = vrot.lane.b32.xlu0 %v1347, 111
        %v1355 = vpop.permute.xlu0 %1354
        %1356 = vrot.lane.b32.xlu0 %v1348, 111
        %v1357 = vpop.permute.xlu0 %1356
        %v1358 = vsel %vm493, %v1353, %v1355
        %v1359 = vsel %vm493, %v1355, %v1357
        %1362 = vst [vmem:[#allocation3 + $0x80] sm:$0xf] %v1358
        %1363 = vst [vmem:[#allocation3 + $0x88] sm:$0xf] %v1359
        %s1364 = scalar_lea.vmem %s2, 16
        %v1365 = vld [vmem:[%s1364] sm:$0xff]
        %v1366 = vld [vmem:[#allocation3] sm:$0xff]
        %v1367 = vld [vmem:[#allocation3 + $0x8] sm:$0xff]
        %v1368 = vld [vmem:[#allocation3 + $0x10] sm:$0xff]
        %v1369 = vld [vmem:[#allocation3 + $0x18] sm:$0xff]
        %v1370 = vld [vmem:[#allocation3 + $0x20] sm:$0xff]
        %v1371 = vld [vmem:[#allocation3 + $0x28] sm:$0xff]
        %v1372 = vld [vmem:[#allocation3 + $0x30] sm:$0xff]
        %v1373 = vld [vmem:[#allocation3 + $0x38] sm:$0xff]
        %v1374 = vld [vmem:[#allocation3 + $0x40] sm:$0xff]
        %v1375 = vld [vmem:[#allocation3 + $0x48] sm:$0xff]
        %v1376 = vld [vmem:[#allocation3 + $0x50] sm:$0xff]
        %v1377 = vld [vmem:[#allocation3 + $0x58] sm:$0xff]
        %v1378 = vld [vmem:[#allocation3 + $0x60] sm:$0xff]
        %v1379 = vld [vmem:[#allocation3 + $0x68] sm:$0xff]
        %v1380 = vld [vmem:[#allocation3 + $0x70] sm:$0xff]
        %v1381 = vld [vmem:[#allocation3 + $0x78] sm:$0xff]
        %v1382 = vld [vmem:[#allocation3 + $0x80] sm:$0xff]
        %v1383 = vld [vmem:[#allocation3 + $0x88] sm:$0xff]
        %s1384 = scalar_lea.vmem %s3, 16
        %v1385 = vld [vmem:[%s1384] sm:$0xff]
        %1387 = vset.pattern.permute.xlu0 0
        %1388 = vperm.xlu0 %1387, %v1385
        %v1389 = vpop.permute.xlu0 %1388
        %v1392 = vunpack.c.l.b16 %v1365
        %v1393 = vunpack.c.h.b16 %v1365
        %v1394 = vpack.c.b16 %v1392, %v1392
        %v1395 = vpack.c.b16 %v1393, %v1393
        %v1398 = vsel %vm408, %v1395, 0
        %1400 = vmatprep.subr.bf16.mxu0 %v1367
        %1401 = vmatpush1.bf16.msra.mxu0 %v1366
        %1402 = vmatprep.subr.bf16.mxu0 %v1369
        %1403 = vmatpush1.bf16.msra.mxu0 %v1368
        %1404 = vmatprep.subr.bf16.mxu0 %v1371
        %1405 = vmatpush1.bf16.msra.mxu0 %v1370
        %1406 = vmatprep.subr.bf16.mxu0 %v1373
        %1407 = vmatpush1.bf16.msra.mxu0 %v1372
        %1408 = vmatprep.subr.bf16.mxu0 %v1375
        %1409 = vmatpush1.bf16.msra.mxu0 %v1374
        %1410 = vmatprep.subr.bf16.mxu0 %v1377
        %1411 = vmatpush1.bf16.msra.mxu0 %v1376
        %1412 = vmatprep.subr.bf16.mxu0 %v1379
        %1413 = vmatpush1.bf16.msra.mxu0 %v1378
        %1414 = vmatprep.subr.bf16.mxu0 %v1381
        %1415 = vmatpush1.bf16.msra.mxu0 %v1380
        %1416 = vmatprep.subr.bf16.mxu0 %v1383
        %1417 = vmatpush1.bf16.msra.mxu0 %v1382
        %1418 = vmatprep.subr.bf16.mxu0 0
        %1419 = vmatpush1.bf16.msra.mxu0 0
        %1420 = vmatprep.subr.bf16.mxu0 0
        %1421 = vmatpush1.bf16.msra.mxu0 0
        %1422 = vmatprep.subr.bf16.mxu0 0
        %1423 = vmatpush1.bf16.msra.mxu0 0
        %1424 = vmatprep.subr.bf16.mxu0 0
        %1425 = vmatpush1.bf16.msra.mxu0 0
        %1426 = vmatprep.subr.bf16.mxu0 0
        %1427 = vmatpush1.bf16.msra.mxu0 0
        %1428 = vmatprep.subr.bf16.mxu0 0
        %1429 = vmatpush1.bf16.msra.mxu0 0
        %1430 = vmatprep.subr.bf16.mxu0 0
        %1431 = vmatpush1.bf16.msra.mxu0 0
        %1432 = vmatprep.mubr.bf16.mxu0 %v1398
        %1433 = vmatmul.mubr.bf16.gmra.mrb[0].mxu0 %v1394
        %v1434 = vpop.f32.mrb[0].mxu0
        %v1435 = vadd.f32 %v1389, %v1434
        %v1436 = vpop.f32.mrb[0].mxu0
        %v1437 = vadd.f32 %v1389, %v1436
        %v1438 = vpop.f32.mrb[0].mxu0
        %v1439 = vpop.f32.mrb[0].mxu0
        %1440 = vdwg.mxu0
        %v1441 = vmax.f32 %v1435, 0.0
        %v1442 = vmax.f32 %v1437, 0.0
        %v1443 = vpack.c.bf16 %v1441, %v1441
        %v1444 = vpack.c.bf16 %v1442, %v1442
        %v1445 = vld [vmem:[#allocation4] sm:$0xff]
        %v1446 = vld [vmem:[#allocation4 + $0x8] sm:$0xff]
        %v1447 = vld [vmem:[#allocation4 + $0x10] sm:$0xff]
        %v1448 = vld [vmem:[#allocation4 + $0x18] sm:$0xff]
        %v1449 = vld [vmem:[%s7] sm:$0xf]
        %v1450 = vld [vmem:[%s7 + $0x4] sm:$0xf]
        %v1453 = vunpack.c.l.b16 %v1449
        %v1454 = vunpack.c.l.b16 %v1450
        %v1455 = vpack.c.b16 %v1454, %v1453
        %v1457 = vsel %vm814, %v1455, 0
        %v1460 = vsel %vm818, %v1443, 0
        %v1463 = vsel %vm818, %v1444, 0
        %1465 = vmatprep.subr.bf16.mxu0 %v1463
        %1466 = vmatpush1.bf16.msra.mxu0 %v1460
        %1467 = vmatprep.subr.bf16.mxu0 0
        %1468 = vmatpush1.bf16.msra.mxu0 0
        %1469 = vmatprep.subr.bf16.mxu0 0
        %1470 = vmatpush1.bf16.msra.mxu0 0
        %1471 = vmatprep.subr.bf16.mxu0 0
        %1472 = vmatpush1.bf16.msra.mxu0 0
        %1473 = vmatprep.subr.bf16.mxu0 0
        %1474 = vmatpush1.bf16.msra.mxu0 0
        %1475 = vmatprep.subr.bf16.mxu0 0
        %1476 = vmatpush1.bf16.msra.mxu0 0
        %1477 = vmatprep.subr.bf16.mxu0 0
        %1478 = vmatpush1.bf16.msra.mxu0 0
        %1479 = vmatprep.subr.bf16.mxu0 0
        %1480 = vmatpush1.bf16.msra.mxu0 0
        %1481 = vmatprep.subr.bf16.mxu0 0
        %1482 = vmatpush1.bf16.msra.mxu0 0
        %1483 = vmatprep.subr.bf16.mxu0 0
        %1484 = vmatpush1.bf16.msra.mxu0 0
        %1485 = vmatprep.subr.bf16.mxu0 0
        %1486 = vmatpush1.bf16.msra.mxu0 0
        %1487 = vmatprep.subr.bf16.mxu0 0
        %1488 = vmatpush1.bf16.msra.mxu0 0
        %1489 = vmatprep.subr.bf16.mxu0 0
        %1490 = vmatpush1.bf16.msra.mxu0 0
        %1491 = vmatprep.subr.bf16.mxu0 0
        %1492 = vmatpush1.bf16.msra.mxu0 0
        %1493 = vmatprep.subr.bf16.mxu0 0
        %1494 = vmatpush1.bf16.msra.mxu0 0
        %1495 = vmatprep.subr.bf16.mxu0 0
        %1496 = vmatpush1.bf16.msra.mxu0 0
        %1497 = vmatprep.mubr.bf16.mxu0 0
        %1498 = vmatmul.mubr.bf16.gmra.mrb[0].mxu0 %v1457
        %v1499 = vpop.f32.mrb[0].mxu0
        %v1500 = vadd.f32 0.0, %v1499
        %v1501 = vpop.f32.mrb[0].mxu0
        %v1502 = vadd.f32 0.0, %v1501
        %v1503 = vpop.f32.mrb[0].mxu0
        %v1504 = vadd.f32 0.0, %v1503
        %v1505 = vpop.f32.mrb[0].mxu0
        %v1506 = vadd.f32 0.0, %v1505
        %1507 = vdwg.mxu0
        %v1508 = vadd.f32 %v1445, %v1500
        %v1509 = vadd.f32 %v1446, %v1502
        %v1510 = vadd.f32 %v1447, %v1504
        %v1511 = vadd.f32 %v1448, %v1506
        %1512 = vst [vmem:[#allocation4] sm:$0xff] %v1508
        %1513 = vst [vmem:[#allocation4 + $0x8] sm:$0xff] %v1509
        %1514 = vst [vmem:[#allocation4 + $0x10] sm:$0xff] %v1510
        %1515 = vst [vmem:[#allocation4 + $0x18] sm:$0xff] %v1511
        %v1516 = vld [vmem:[#allocation4] sm:$0xff]
        %v1517 = vld [vmem:[#allocation4 + $0x8] sm:$0xff]
        %v1518 = vld [vmem:[#allocation4 + $0x10] sm:$0xff]
        %v1519 = vld [vmem:[#allocation4 + $0x18] sm:$0xff]
        %v1520 = vld [vmem:[%s8] sm:$0xff]
        %v1521 = vld [vmem:[%s8 + $0x8] sm:$0xff]
        %1523 = vset.pattern.permute.xlu0 0
        %1524 = vperm.xlu0 %1523, %v1520
        %v1525 = vpop.permute.xlu0 %1524
        %1528 = vset.pattern.permute.xlu0 0
        %1529 = vperm.xlu0 %1528, %v1521
        %v1530 = vpop.permute.xlu0 %1529
        %v1532 = vadd.f32 %v1516, %v1525
        %v1533 = vadd.f32 %v1517, %v1525
        %v1534 = vadd.f32 %v1518, %v1530
        %v1535 = vadd.f32 %v1519, %v1530
        %v1536 = vmax.f32 %v1532, 0.0
        %v1537 = vmax.f32 %v1533, 0.0
        %v1538 = vmax.f32 %v1534, 0.0
        %v1539 = vmax.f32 %v1535, 0.0
        %v1540 = vadd.f32 %v1536, %v1537
        %1541 = vadd.xlane.f32.xlu0 %v1540
        %v1542 = vpop.xlane.xlu0 %1541
        %v1543 = vadd.f32 %v1538, %v1539
        %1544 = vadd.xlane.f32.xlu0 %v1543
        %v1545 = vpop.xlane.xlu0 %1544
        %v1546 = vrcp.pop 256.0
        %v1547 = vmul.f32 %v1542, %v1546
        %v1548 = vmul.f32 %v1545, %v1546
        %v1549 = vld [vmem:[%s9] sm:$0xff]
        %v1550 = vld [vmem:[%s9 + $0x8] sm:$0xff]
        %v1551 = vld [vmem:[%s10] sm:$0xff]
        %v1552 = vld [vmem:[%s10 + $0x8] sm:$0xff]
        %v1554 = vsel %vm408, %v1549, 0
        %v1557 = vsel %vm408, %v1550, 0
        %1559 = vmatprep.subr.mxu0 0.0
        %1560 = vmatpush1.msra.mxu0 %v1547
        %1561 = vmatprep.subr.mxu0 0.0
        %1562 = vmatpush1.msra.mxu0 %v1548
        %1563 = vmatprep.subr.mxu0 0.0
        %1564 = vmatpush1.msra.mxu0 0.0
        %1565 = vmatprep.subr.mxu0 0.0
        %1566 = vmatpush1.msra.mxu0 0.0
        %1567 = vmatprep.subr.mxu0 0.0
        %1568 = vmatpush1.msra.mxu0 0.0
        %1569 = vmatprep.subr.mxu0 0.0
        %1570 = vmatpush1.msra.mxu0 0.0
        %1571 = vmatprep.subr.mxu0 0.0
        %1572 = vmatpush1.msra.mxu0 0.0
        %1573 = vmatprep.subr.mxu0 0.0
        %1574 = vmatpush1.msra.mxu0 0.0
        %1575 = vmatprep.subr.mxu0 0.0
        %1576 = vmatpush1.msra.mxu0 0.0
        %1577 = vmatprep.subr.mxu0 0.0
        %1578 = vmatpush1.msra.mxu0 0.0
        %1579 = vmatprep.subr.mxu0 0.0
        %1580 = vmatpush1.msra.mxu0 0.0
        %1581 = vmatprep.subr.mxu0 0.0
        %1582 = vmatpush1.msra.mxu0 0.0
        %1583 = vmatprep.subr.mxu0 0.0
        %1584 = vmatpush1.msra.mxu0 0.0
        %1585 = vmatprep.subr.mxu0 0.0
        %1586 = vmatpush1.msra.mxu0 0.0
        %1587 = vmatprep.subr.mxu0 0.0
        %1588 = vmatpush1.msra.mxu0 0.0
        %1589 = vmatprep.subr.mxu0 0.0
        %1590 = vmatpush1.msra.mxu0 0.0
        %1591 = vmatprep.subr.mxu0 0.0
        %1592 = vmatpush1.msra.mxu0 0.0
        %1593 = vmatprep.subr.mxu0 0.0
        %1594 = vmatpush1.msra.mxu0 0.0
        %1595 = vmatprep.subr.mxu0 0.0
        %1596 = vmatpush1.msra.mxu0 0.0
        %1597 = vmatprep.subr.mxu0 0.0
        %1598 = vmatpush1.msra.mxu0 0.0
        %1599 = vmatprep.subr.mxu0 0.0
        %1600 = vmatpush1.msra.mxu0 0.0
        %1601 = vmatprep.subr.mxu0 0.0
        %1602 = vmatpush1.msra.mxu0 0.0
        %1603 = vmatprep.subr.mxu0 0.0
        %1604 = vmatpush1.msra.mxu0 0.0
        %1605 = vmatprep.subr.mxu0 0.0
        %1606 = vmatpush1.msra.mxu0 0.0
        %1607 = vmatprep.subr.mxu0 0.0
        %1608 = vmatpush1.msra.mxu0 0.0
        %1609 = vmatprep.subr.mxu0 0.0
        %1610 = vmatpush1.msra.mxu0 0.0
        %1611 = vmatprep.subr.mxu0 0.0
        %1612 = vmatpush1.msra.mxu0 0.0
        %1613 = vmatprep.subr.mxu0 0.0
        %1614 = vmatpush1.msra.mxu0 0.0
        %1615 = vmatprep.subr.mxu0 0.0
        %1616 = vmatpush1.msra.mxu0 0.0
        %1617 = vmatprep.subr.mxu0 0.0
        %1618 = vmatpush1.msra.mxu0 0.0
        %1619 = vmatprep.subr.mxu0 0.0
        %1620 = vmatpush1.msra.mxu0 0.0
        %1621 = vmatprep.subr.mxu0 0.0
        %1622 = vmatpush1.msra.mxu0 0.0
        %1623 = vmatprep.mubr.f32.mxu0 0.0
        %1624 = vmatmul.mubr.f32.gmra.mrb[0].mxu0 %v1554
        %v1625 = vpop.f32.mrb[0].mxu0
        %v1626 = vadd.f32 %v1551, %v1625
        %v1627 = vpop.f32.mrb[0].mxu0
        %1628 = vmatprep.mubr.f32.mxu0 0.0
        %1629 = vmatmul.mubr.f32.gmra.mrb[0].mxu0 %v1557
        %v1630 = vpop.f32.mrb[0].mxu0
        %v1631 = vadd.f32 %v1552, %v1630
        %v1632 = vpop.f32.mrb[0].mxu0
        %1633 = vdwg.mxu0
        %v1634 = vxor.u32 %v1626, 2147483648
        %v1635 = vxor.u32 %v1631, 2147483648
        %v1636 = vmul.f32 %v1634, 1.442695
        %v1637 = vpow.pop %v1636
        %v1638 = vmul.f32 %v1635, 1.442695
        %v1639 = vpow.pop %v1638
        %v1640 = vadd.f32 %v1637, 1.0
        %v1641 = vadd.f32 %v1639, 1.0
        %v1642 = vrcp.pop %v1640
        %v1643 = vmul.f32 1.0, %v1642
        %v1644 = vrcp.pop %v1641
        %v1645 = vmul.f32 1.0, %v1644
        %1647 = vset.pattern.permute.xlu0 0
        %1648 = vperm.xlu0 %1647, %v1643
        %v1649 = vpop.permute.xlu0 %1648
        %1652 = vset.pattern.permute.xlu0 0
        %1653 = vperm.xlu0 %1652, %v1645
        %v1654 = vpop.permute.xlu0 %1653
        %v1656 = vmul.f32 %v1536, %v1649
        %v1657 = vmul.f32 %v1537, %v1649
        %v1658 = vmul.f32 %v1538, %v1654
        %v1659 = vmul.f32 %v1539, %v1654
        %1660 = vst [vmem:[%s379] sm:$0xff] %v1656
        %1661 = vst [vmem:[%s379 + $0x8] sm:$0xff] %v1657
        %1662 = vst [vmem:[%s379 + $0x10] sm:$0xff] %v1658
        %1663 = vst [vmem:[%s379 + $0x18] sm:$0xff] %v1659
        %s1664 = sand.u32 %s269, 1
        %s1665 = scalar_lea.sflag [#allocation6], %s1664
        %s1666 = sand.u32 %s269, 1
        %s1667 = smul.addr %s1666, 32
        %s1668 = scalar_lea.vmem [#allocation5], %s1667
        // Predicated region
        $region65: #{tpu_custom_call.1} parent=63 // pred_check
          %p1669 = pneg %p279
        $region66: #{tpu_custom_call.1} parent=63 // pred_check_branch
          %1671 = sbr.rel (%p1669) target = $region68
        $region67: #{tpu_custom_call.1} parent=63 // pred_region
          %s1673 = ssub.s32 512, 512
          %1674 = vsyncadd %s1665, %s1673
          %s1675 = smul.addr %s25, 4
          %s1676 = smul.addr %s1675, 128
          %s1677 = scalar_lea.hbm %s11, %s1676
          %s1678 = sshll.u32 %s1668, 4
          %s1679 = int_to_ptr.vmem [resolvable:$true] %s1678
          %1684 = dma.vmem_to_hbm [thread:$0]  %s1679, 512, %s1677, %s1665, 256, 256, 16
        $region68: #{tpu_custom_call.1} parent=63 // pred_fallthru
          _
      $region64: #{tpu_custom_call.1} parent=5 // pred_fallthru
        _
      %p1685 = scmp.le.s32.totalorder 2, %s20
      // Predicated region
      $region69: #{tpu_custom_call.1} parent=5 // pred_check
        %p1686 = pneg %p1685
      $region70: #{tpu_custom_call.1} parent=5 // pred_check_branch
        %1688 = sbr.rel (%p1686) target = $region72
      $region71: #{tpu_custom_call.1} parent=5 // pred_region
        %s1689 = ssub.s32 %s20, 2
        // Predicated region
        $region73: #{tpu_custom_call.1} parent=71 // pred_check
          %p1690 = pneg %p285
        $region74: #{tpu_custom_call.1} parent=71 // pred_check_branch
          %1692 = sbr.rel (%p1690) target = $region76
        $region75: #{tpu_custom_call.1} parent=71 // pred_region
          %s1693 = sand.u32 %s270, 1
          %s1694 = scalar_lea.sflag [#allocation6], %s1693
          %s1695 = sand.u32 %s270, 1
          %s1696 = smul.addr %s1695, 32
          %s1697 = scalar_lea.vmem [#allocation5], %s1696
          %1698 = dma.done %s1694, 512
        $region76: #{tpu_custom_call.1} parent=71 // pred_fallthru
          _
      $region72: #{tpu_custom_call.1} parent=5 // pred_fallthru
        _
    $region6: #{tpu_custom_call.1} parent=1 // loop_footer
      %s24 = sadd.s32 1, %s20
    $region7: #{tpu_custom_call.1} parent=1 // loop_footer_branch
      %19 = sbr.rel target = $region3
    $region8: #{tpu_custom_call.1} parent=1 // loop_exit
      _
    %1699 = vsyncpa [#allocation6], 1
    %s1700 = scalar_lea.sflag [#allocation6], 1
    %1701 = vsyncpa %s1700, 1

</llo_original>
